<compile_context>
chip_gen: v5e
topology: v5e:2x2
jax: 0.10.0
libtpu: 0.0.40
codegen_flags: <defaults>
</compile_context>

<pallas_src>
import jax
import jax.numpy as jnp
from jax.experimental import pallas as pl
from jax.experimental.pallas import tpu as pltpu


# ----------------------------- fused kernel ----------------------------------

def cnn_lstm_kernel(x_ref,
                    wc1_ref, bc1_ref, wc2_ref, bc2_ref, wc3_ref, bc3_ref,
                    wih0_ref, wcomb_ref, whh1_ref, b0_ref, b1_ref,
                    wfc1_ref, bfc1_ref, wfc2_ref, bfc2_ref,
                    o_ref):
    f32 = jnp.float32

    def conv_relu(x, w, b):
        """Conv1d(kernel=3, padding=1) + ReLU as one im2col matmul.

        x: (B, L, Cin), w: (3*Cin, Cout) with taps stacked [x[l-1]; x[l]; x[l+1]],
        b: (1, Cout).
        """
        B, L, Cin = x.shape
        z = jnp.zeros((B, 1, Cin), f32)
        xm1 = jnp.concatenate([z, x[:, :L - 1, :]], axis=1)   # x[l-1] (zero pad)
        xp1 = jnp.concatenate([x[:, 1:, :], z], axis=1)       # x[l+1] (zero pad)
        cols = jnp.concatenate([xm1, x, xp1], axis=2)         # (B, L, 3*Cin)
        y = jnp.einsum("blc,cd->bld", cols, w,
                       preferred_element_type=f32) + b
        return jnp.maximum(y, 0.0)

    def pool2(x):
        """MaxPool1d(2) on VMEM data: static unroll over output positions.

        Matches PyTorch truncation for odd L (last element dropped).
        """
        B, L, C = x.shape
        pieces = [jnp.maximum(x[:, 2 * i:2 * i + 1, :],
                              x[:, 2 * i + 1:2 * i + 2, :])
                  for i in range(L // 2)]
        return jnp.concatenate(pieces, axis=1)

    # ---- CNN stack (all VMEM-resident) ----
    h = conv_relu(x_ref[...], wc1_ref[...], bc1_ref[...])   # (B, T,   64)
    h = pool2(h)                                            # (B, T/2, 64)
    h = conv_relu(h, wc2_ref[...], bc2_ref[...])            # (B, T/2, 128)
    h = pool2(h)                                            # (B, T/4, 128)
    h = conv_relu(h, wc3_ref[...], bc3_ref[...])            # (B, T/4, 256)

    B, T2, _ = h.shape
    H = whh1_ref.shape[0]

    # ---- 2-layer LSTM (batch_first), keep h2 at the last step ----
    # Hoisted layer-0 input projection for ALL time steps (+ combined bias b0).
    gin = jnp.einsum("btd,dg->btg", h, wih0_ref[...],
                     preferred_element_type=f32) + b0_ref[...]    # (B, T2, 4H)

    wcomb = wcomb_ref[...]          # (H, 8H) = [W_hh0 | W_ih1]
    whh1 = whh1_ref[...]            # (H, 4H)
    b1 = b1_ref[...]                # (1, 4H) = b_ih1 + b_hh1

    def gates(g):                   # PyTorch gate order: i, f, g, o
        i = jax.nn.sigmoid(g[:, 0 * H:1 * H])
        f = jax.nn.sigmoid(g[:, 1 * H:2 * H])
        gg = jnp.tanh(g[:, 2 * H:3 * H])
        o = jax.nn.sigmoid(g[:, 3 * H:4 * H])
        return i, f, gg, o

    zeros = jnp.zeros((B, H), f32)
    c1, h2, c2 = zeros, zeros, zeros
    # h1_{t-1} @ [W_hh0 | W_ih1]; zero at t=0 because h1_{-1} = 0.
    h1comb = jnp.zeros((B, 8 * H), f32)

    for t in range(T2):             # T2 = 4: static unroll is fine here
        # layer 0
        g0 = gin[:, t, :] + h1comb[:, :4 * H]
        i0, f0, gg0, o0 = gates(g0)
        c1 = f0 * c1 + i0 * gg0
        h1 = o0 * jnp.tanh(c1)
        # single shared-LHS matmul: gives layer-1 input for step t (cols 4H:)
        # and layer-0 recurrent term for step t+1 (cols :4H).
        h1comb = jnp.dot(h1, wcomb, preferred_element_type=f32)
        # layer 1
        g1 = h1comb[:, 4 * H:] + jnp.dot(h2, whh1,
                                         preferred_element_type=f32) + b1
        i1, f1, gg1, o1 = gates(g1)
        c2 = f1 * c2 + i1 * gg1
        h2 = o1 * jnp.tanh(c2)

    # ---- head: fc1 + ReLU + fc2 ----
    z = jnp.maximum(jnp.dot(h2, wfc1_ref[...],
                            preferred_element_type=f32) + bfc1_ref[...], 0.0)
    o_ref[...] = jnp.dot(z, wfc2_ref[...],
                         preferred_element_type=f32) + bfc2_ref[...]


# ----------------------------- wrapper ----------------------------------------

def cnn_lstm_forward(x, params):
    """x: (B, T, F) float32 -> logits (B, num_classes). One fused pallas_call."""
    B, T, _ = x.shape
    assert T % 4 == 0, "two MaxPool1d(2) stages expect T divisible by 4"
    num_classes = params["w_fc2"].shape[1]

    args = (
        x,
        params["w_conv1"], params["b_conv1"],
        params["w_conv2"], params["b_conv2"],
        params["w_conv3"], params["b_conv3"],
        params["w_ih0"], params["w_hh0_ih1"], params["w_hh1"],
        params["b_l0"], params["b_l1"],
        params["w_fc1"], params["b_fc1"],
        params["w_fc2"], params["b_fc2"],
    )
    vmem_specs = [pl.BlockSpec(memory_space=pltpu.MemorySpace.VMEM)
                  for _ in range(len(args))]
    return pl.pallas_call(
        cnn_lstm_kernel,
        out_shape=jax.ShapeDtypeStruct((B, num_classes), jnp.float32),
        in_specs=vmem_specs,
        out_specs=pl.BlockSpec(memory_space=pltpu.MemorySpace.VMEM),
    )(*args)


# ----------------------------- parameters ------------------------------------

def init_params(key, num_features, num_classes=3):
    """Deterministic synthetic parameters (PyTorch-like uniform fan-in init).

    Conv weights are stored in im2col form (3*Cin, Cout): row (k*Cin + c)
    corresponds to torch conv.weight[:, c, k]. LSTM weights are pre-transposed
    to (in, 4H); W_hh0 and W_ih1 are pre-concatenated along the output dim.
    Biases combine b_ih + b_hh as in PyTorch.
    """
    H = 128
    keys = jax.random.split(key, 18)

    def u(k, shape, fan_in):
        bound = 1.0 / jnp.sqrt(jnp.float32(fan_in))
        return jax.random.uniform(k, shape, jnp.float32, -bound, bound)

    whh0 = u(keys[7], (H, 4 * H), H)          # layer-0 recurrent (in, 4H)
    wih1 = u(keys[10], (H, 4 * H), H)         # layer-1 input     (in, 4H)

    return {
        # conv weights (3*Cin, Cout); biases (1, Cout)
        "w_conv1": u(keys[0], (3 * num_features, 64), 3 * num_features),
        "b_conv1": u(keys[1], (1, 64), 3 * num_features),
        "w_conv2": u(keys[2], (3 * 64, 128), 3 * 64),
        "b_conv2": u(keys[3], (1, 128), 3 * 64),
        "w_conv3": u(keys[4], (3 * 128, 256), 3 * 128),
        "b_conv3": u(keys[5], (1, 256), 3 * 128),
        # LSTM layer 0: input 256 -> hidden 128; layer 1: 128 -> 128
        "w_ih0": u(keys[6], (256, 4 * H), H),
        "w_hh0_ih1": jnp.concatenate([whh0, wih1], axis=1),   # (H, 8H)
        "w_hh1": u(keys[11], (H, 4 * H), H),
        "b_l0": u(keys[8], (1, 4 * H), H) + u(keys[9], (1, 4 * H), H),
        "b_l1": u(keys[12], (1, 4 * H), H) + u(keys[13], (1, 4 * H), H),
        # heads
        "w_fc1": u(keys[14], (H, 64), H),
        "b_fc1": u(keys[15], (1, 64), H),
        "w_fc2": u(keys[16], (64, num_classes), 64),
        "b_fc2": u(keys[17], (1, num_classes), 64),
    }


# ----------------------------- main -------------------------------------------

if __name__ == "__main__":
    key = jax.random.PRNGKey(0)
    k_x, k_p = jax.random.split(key)

    B, T, F = 2, 16, 8          # batch, sequence length, num_features
    x = jax.random.normal(k_x, (B, T, F), jnp.float32)
    params = init_params(k_p, num_features=F, num_classes=3)

    out = jax.jit(cnn_lstm_forward)(x, params)
    out = jax.block_until_ready(out)
    assert out.shape == (B, 3) and out.dtype == jnp.float32
    print("KERNEL_OK")
</pallas_src>

<mosaic_0001>
module attributes {stable_mosaic.version = 11 : i64} {
  func.func @cnn_lstm_kernel(%arg0: memref<2x16x8xf32, #tpu.memory_space<vmem>>, %arg1: memref<24x64xf32, #tpu.memory_space<vmem>>, %arg2: memref<1x64xf32, #tpu.memory_space<vmem>>, %arg3: memref<192x128xf32, #tpu.memory_space<vmem>>, %arg4: memref<1x128xf32, #tpu.memory_space<vmem>>, %arg5: memref<384x256xf32, #tpu.memory_space<vmem>>, %arg6: memref<1x256xf32, #tpu.memory_space<vmem>>, %arg7: memref<256x512xf32, #tpu.memory_space<vmem>>, %arg8: memref<128x1024xf32, #tpu.memory_space<vmem>>, %arg9: memref<128x512xf32, #tpu.memory_space<vmem>>, %arg10: memref<1x512xf32, #tpu.memory_space<vmem>>, %arg11: memref<1x512xf32, #tpu.memory_space<vmem>>, %arg12: memref<128x64xf32, #tpu.memory_space<vmem>>, %arg13: memref<1x64xf32, #tpu.memory_space<vmem>>, %arg14: memref<64x3xf32, #tpu.memory_space<vmem>>, %arg15: memref<1x3xf32, #tpu.memory_space<vmem>>, %arg16: memref<2x3xf32, #tpu.memory_space<vmem>>) attributes {dimension_semantics = [], scalar_prefetch = 0 : i64, scratch_operands = 0 : i64, tpu.core_type = #tpu.core_type<tc>} {
    %c0 = arith.constant 0 : index
    %c0_0 = arith.constant 0 : index
    %c0_1 = arith.constant 0 : index
    %0 = vector.load %arg0[%c0, %c0_0, %c0_1] : memref<2x16x8xf32, #tpu.memory_space<vmem>>, vector<2x16x8xf32>
    %c0_2 = arith.constant 0 : index
    %c0_3 = arith.constant 0 : index
    %1 = vector.load %arg1[%c0_2, %c0_3] : memref<24x64xf32, #tpu.memory_space<vmem>>, vector<24x64xf32>
    %c0_4 = arith.constant 0 : index
    %c0_5 = arith.constant 0 : index
    %2 = vector.load %arg2[%c0_4, %c0_5] : memref<1x64xf32, #tpu.memory_space<vmem>>, vector<1x64xf32>
    %cst = arith.constant 0.000000e+00 : f32
    %3 = vector.broadcast %cst : f32 to vector<2x1x8xf32>
    %4 = vector.extract_strided_slice %0 {offsets = [0, 0, 0], sizes = [2, 15, 8], strides = [1, 1, 1]} : vector<2x16x8xf32> to vector<2x15x8xf32>
    %5 = tpu.concatenate %3, %4 in 1 : vector<2x1x8xf32>, vector<2x15x8xf32> -> vector<2x16x8xf32>
    %6 = vector.extract_strided_slice %0 {offsets = [0, 1, 0], sizes = [2, 15, 8], strides = [1, 1, 1]} : vector<2x16x8xf32> to vector<2x15x8xf32>
    %7 = tpu.concatenate %6, %3 in 1 : vector<2x15x8xf32>, vector<2x1x8xf32> -> vector<2x16x8xf32>
    %8 = tpu.concatenate %5, %0, %7 in 2 : vector<2x16x8xf32>, vector<2x16x8xf32>, vector<2x16x8xf32> -> vector<2x16x24xf32>
    "tpu.trace_start"() <{level = 10 : i32, message = "blc,cd->bld"}> : () -> ()
    %cst_6 = arith.constant dense<0.000000e+00> : vector<2x16x64xf32>
    %9 = tpu.matmul %8, %1, %cst_6 {dimension_numbers = #tpu.dot_dimension_numbers<[2], [0], [0, 1], [1], [0, 0, 0, 1, 1, 1], [], []>} : vector<2x16x24xf32>, vector<24x64xf32>, vector<2x16x64xf32> -> vector<2x16x64xf32>
    "tpu.trace_stop"() : () -> ()
    %10 = vector.shape_cast %2 : vector<1x64xf32> to vector<1x1x64xf32>
    %11 = vector.broadcast %10 : vector<1x1x64xf32> to vector<2x16x64xf32>
    %12 = arith.addf %9, %11 : vector<2x16x64xf32>
    %cst_7 = arith.constant 0.000000e+00 : f32
    %13 = vector.broadcast %cst_7 : f32 to vector<2x16x64xf32>
    %14 = arith.maximumf %12, %13 : vector<2x16x64xf32>
    %15 = vector.extract_strided_slice %14 {offsets = [0, 0, 0], sizes = [2, 1, 64], strides = [1, 1, 1]} : vector<2x16x64xf32> to vector<2x1x64xf32>
    %16 = vector.extract_strided_slice %14 {offsets = [0, 1, 0], sizes = [2, 1, 64], strides = [1, 1, 1]} : vector<2x16x64xf32> to vector<2x1x64xf32>
    %17 = arith.maximumf %15, %16 : vector<2x1x64xf32>
    %18 = vector.extract_strided_slice %14 {offsets = [0, 2, 0], sizes = [2, 1, 64], strides = [1, 1, 1]} : vector<2x16x64xf32> to vector<2x1x64xf32>
    %19 = vector.extract_strided_slice %14 {offsets = [0, 3, 0], sizes = [2, 1, 64], strides = [1, 1, 1]} : vector<2x16x64xf32> to vector<2x1x64xf32>
    %20 = arith.maximumf %18, %19 : vector<2x1x64xf32>
    %21 = vector.extract_strided_slice %14 {offsets = [0, 4, 0], sizes = [2, 1, 64], strides = [1, 1, 1]} : vector<2x16x64xf32> to vector<2x1x64xf32>
    %22 = vector.extract_strided_slice %14 {offsets = [0, 5, 0], sizes = [2, 1, 64], strides = [1, 1, 1]} : vector<2x16x64xf32> to vector<2x1x64xf32>
    %23 = arith.maximumf %21, %22 : vector<2x1x64xf32>
    %24 = vector.extract_strided_slice %14 {offsets = [0, 6, 0], sizes = [2, 1, 64], strides = [1, 1, 1]} : vector<2x16x64xf32> to vector<2x1x64xf32>
    %25 = vector.extract_strided_slice %14 {offsets = [0, 7, 0], sizes = [2, 1, 64], strides = [1, 1, 1]} : vector<2x16x64xf32> to vector<2x1x64xf32>
    %26 = arith.maximumf %24, %25 : vector<2x1x64xf32>
    %27 = vector.extract_strided_slice %14 {offsets = [0, 8, 0], sizes = [2, 1, 64], strides = [1, 1, 1]} : vector<2x16x64xf32> to vector<2x1x64xf32>
    %28 = vector.extract_strided_slice %14 {offsets = [0, 9, 0], sizes = [2, 1, 64], strides = [1, 1, 1]} : vector<2x16x64xf32> to vector<2x1x64xf32>
    %29 = arith.maximumf %27, %28 : vector<2x1x64xf32>
    %30 = vector.extract_strided_slice %14 {offsets = [0, 10, 0], sizes = [2, 1, 64], strides = [1, 1, 1]} : vector<2x16x64xf32> to vector<2x1x64xf32>
    %31 = vector.extract_strided_slice %14 {offsets = [0, 11, 0], sizes = [2, 1, 64], strides = [1, 1, 1]} : vector<2x16x64xf32> to vector<2x1x64xf32>
    %32 = arith.maximumf %30, %31 : vector<2x1x64xf32>
    %33 = vector.extract_strided_slice %14 {offsets = [0, 12, 0], sizes = [2, 1, 64], strides = [1, 1, 1]} : vector<2x16x64xf32> to vector<2x1x64xf32>
    %34 = vector.extract_strided_slice %14 {offsets = [0, 13, 0], sizes = [2, 1, 64], strides = [1, 1, 1]} : vector<2x16x64xf32> to vector<2x1x64xf32>
    %35 = arith.maximumf %33, %34 : vector<2x1x64xf32>
    %36 = vector.extract_strided_slice %14 {offsets = [0, 14, 0], sizes = [2, 1, 64], strides = [1, 1, 1]} : vector<2x16x64xf32> to vector<2x1x64xf32>
    %37 = vector.extract_strided_slice %14 {offsets = [0, 15, 0], sizes = [2, 1, 64], strides = [1, 1, 1]} : vector<2x16x64xf32> to vector<2x1x64xf32>
    %38 = arith.maximumf %36, %37 : vector<2x1x64xf32>
    %39 = tpu.concatenate %17, %20, %23, %26, %29, %32, %35, %38 in 1 : vector<2x1x64xf32>, vector<2x1x64xf32>, vector<2x1x64xf32>, vector<2x1x64xf32>, vector<2x1x64xf32>, vector<2x1x64xf32>, vector<2x1x64xf32>, vector<2x1x64xf32> -> vector<2x8x64xf32>
    %c0_8 = arith.constant 0 : index
    %c0_9 = arith.constant 0 : index
    %40 = vector.load %arg3[%c0_8, %c0_9] : memref<192x128xf32, #tpu.memory_space<vmem>>, vector<192x128xf32>
    %c0_10 = arith.constant 0 : index
    %c0_11 = arith.constant 0 : index
    %41 = vector.load %arg4[%c0_10, %c0_11] : memref<1x128xf32, #tpu.memory_space<vmem>>, vector<1x128xf32>
    %cst_12 = arith.constant 0.000000e+00 : f32
    %42 = vector.broadcast %cst_12 : f32 to vector<2x1x64xf32>
    %43 = vector.extract_strided_slice %39 {offsets = [0, 0, 0], sizes = [2, 7, 64], strides = [1, 1, 1]} : vector<2x8x64xf32> to vector<2x7x64xf32>
    %44 = tpu.concatenate %42, %43 in 1 : vector<2x1x64xf32>, vector<2x7x64xf32> -> vector<2x8x64xf32>
    %45 = vector.extract_strided_slice %39 {offsets = [0, 1, 0], sizes = [2, 7, 64], strides = [1, 1, 1]} : vector<2x8x64xf32> to vector<2x7x64xf32>
    %46 = tpu.concatenate %45, %42 in 1 : vector<2x7x64xf32>, vector<2x1x64xf32> -> vector<2x8x64xf32>
    %47 = tpu.concatenate %44, %39, %46 in 2 : vector<2x8x64xf32>, vector<2x8x64xf32>, vector<2x8x64xf32> -> vector<2x8x192xf32>
    "tpu.trace_start"() <{level = 10 : i32, message = "blc,cd->bld"}> : () -> ()
    %cst_13 = arith.constant dense<0.000000e+00> : vector<2x8x128xf32>
    %48 = tpu.matmul %47, %40, %cst_13 {dimension_numbers = #tpu.dot_dimension_numbers<[2], [0], [0, 1], [1], [0, 0, 0, 1, 1, 1], [], []>} : vector<2x8x192xf32>, vector<192x128xf32>, vector<2x8x128xf32> -> vector<2x8x128xf32>
    "tpu.trace_stop"() : () -> ()
    %49 = vector.shape_cast %41 : vector<1x128xf32> to vector<1x1x128xf32>
    %50 = vector.broadcast %49 : vector<1x1x128xf32> to vector<2x8x128xf32>
    %51 = arith.addf %48, %50 : vector<2x8x128xf32>
    %cst_14 = arith.constant 0.000000e+00 : f32
    %52 = vector.broadcast %cst_14 : f32 to vector<2x8x128xf32>
    %53 = arith.maximumf %51, %52 : vector<2x8x128xf32>
    %54 = vector.extract_strided_slice %53 {offsets = [0, 0, 0], sizes = [2, 1, 128], strides = [1, 1, 1]} : vector<2x8x128xf32> to vector<2x1x128xf32>
    %55 = vector.extract_strided_slice %53 {offsets = [0, 1, 0], sizes = [2, 1, 128], strides = [1, 1, 1]} : vector<2x8x128xf32> to vector<2x1x128xf32>
    %56 = arith.maximumf %54, %55 : vector<2x1x128xf32>
    %57 = vector.extract_strided_slice %53 {offsets = [0, 2, 0], sizes = [2, 1, 128], strides = [1, 1, 1]} : vector<2x8x128xf32> to vector<2x1x128xf32>
    %58 = vector.extract_strided_slice %53 {offsets = [0, 3, 0], sizes = [2, 1, 128], strides = [1, 1, 1]} : vector<2x8x128xf32> to vector<2x1x128xf32>
    %59 = arith.maximumf %57, %58 : vector<2x1x128xf32>
    %60 = vector.extract_strided_slice %53 {offsets = [0, 4, 0], sizes = [2, 1, 128], strides = [1, 1, 1]} : vector<2x8x128xf32> to vector<2x1x128xf32>
    %61 = vector.extract_strided_slice %53 {offsets = [0, 5, 0], sizes = [2, 1, 128], strides = [1, 1, 1]} : vector<2x8x128xf32> to vector<2x1x128xf32>
    %62 = arith.maximumf %60, %61 : vector<2x1x128xf32>
    %63 = vector.extract_strided_slice %53 {offsets = [0, 6, 0], sizes = [2, 1, 128], strides = [1, 1, 1]} : vector<2x8x128xf32> to vector<2x1x128xf32>
    %64 = vector.extract_strided_slice %53 {offsets = [0, 7, 0], sizes = [2, 1, 128], strides = [1, 1, 1]} : vector<2x8x128xf32> to vector<2x1x128xf32>
    %65 = arith.maximumf %63, %64 : vector<2x1x128xf32>
    %66 = tpu.concatenate %56, %59, %62, %65 in 1 : vector<2x1x128xf32>, vector<2x1x128xf32>, vector<2x1x128xf32>, vector<2x1x128xf32> -> vector<2x4x128xf32>
    %c0_15 = arith.constant 0 : index
    %c0_16 = arith.constant 0 : index
    %67 = vector.load %arg5[%c0_15, %c0_16] : memref<384x256xf32, #tpu.memory_space<vmem>>, vector<384x256xf32>
    %c0_17 = arith.constant 0 : index
    %c0_18 = arith.constant 0 : index
    %68 = vector.load %arg6[%c0_17, %c0_18] : memref<1x256xf32, #tpu.memory_space<vmem>>, vector<1x256xf32>
    %cst_19 = arith.constant 0.000000e+00 : f32
    %69 = vector.broadcast %cst_19 : f32 to vector<2x1x128xf32>
    %70 = vector.extract_strided_slice %66 {offsets = [0, 0, 0], sizes = [2, 3, 128], strides = [1, 1, 1]} : vector<2x4x128xf32> to vector<2x3x128xf32>
    %71 = tpu.concatenate %69, %70 in 1 : vector<2x1x128xf32>, vector<2x3x128xf32> -> vector<2x4x128xf32>
    %72 = vector.extract_strided_slice %66 {offsets = [0, 1, 0], sizes = [2, 3, 128], strides = [1, 1, 1]} : vector<2x4x128xf32> to vector<2x3x128xf32>
    %73 = tpu.concatenate %72, %69 in 1 : vector<2x3x128xf32>, vector<2x1x128xf32> -> vector<2x4x128xf32>
    %74 = tpu.concatenate %71, %66, %73 in 2 : vector<2x4x128xf32>, vector<2x4x128xf32>, vector<2x4x128xf32> -> vector<2x4x384xf32>
    "tpu.trace_start"() <{level = 10 : i32, message = "blc,cd->bld"}> : () -> ()
    %cst_20 = arith.constant dense<0.000000e+00> : vector<2x4x256xf32>
    %75 = tpu.matmul %74, %67, %cst_20 {dimension_numbers = #tpu.dot_dimension_numbers<[2], [0], [0, 1], [1], [0, 0, 0, 1, 1, 1], [], []>} : vector<2x4x384xf32>, vector<384x256xf32>, vector<2x4x256xf32> -> vector<2x4x256xf32>
    "tpu.trace_stop"() : () -> ()
    %76 = vector.shape_cast %68 : vector<1x256xf32> to vector<1x1x256xf32>
    %77 = vector.broadcast %76 : vector<1x1x256xf32> to vector<2x4x256xf32>
    %78 = arith.addf %75, %77 : vector<2x4x256xf32>
    %cst_21 = arith.constant 0.000000e+00 : f32
    %79 = vector.broadcast %cst_21 : f32 to vector<2x4x256xf32>
    %80 = arith.maximumf %78, %79 : vector<2x4x256xf32>
    %c0_22 = arith.constant 0 : index
    %c0_23 = arith.constant 0 : index
    %81 = vector.load %arg7[%c0_22, %c0_23] : memref<256x512xf32, #tpu.memory_space<vmem>>, vector<256x512xf32>
    "tpu.trace_start"() <{level = 10 : i32, message = "btd,dg->btg"}> : () -> ()
    %cst_24 = arith.constant dense<0.000000e+00> : vector<2x4x512xf32>
    %82 = tpu.matmul %80, %81, %cst_24 {dimension_numbers = #tpu.dot_dimension_numbers<[2], [0], [0, 1], [1], [0, 0, 0, 1, 1, 1], [], []>} : vector<2x4x256xf32>, vector<256x512xf32>, vector<2x4x512xf32> -> vector<2x4x512xf32>
    "tpu.trace_stop"() : () -> ()
    %c0_25 = arith.constant 0 : index
    %c0_26 = arith.constant 0 : index
    %83 = vector.load %arg10[%c0_25, %c0_26] : memref<1x512xf32, #tpu.memory_space<vmem>>, vector<1x512xf32>
    %84 = vector.shape_cast %83 : vector<1x512xf32> to vector<1x1x512xf32>
    %85 = vector.broadcast %84 : vector<1x1x512xf32> to vector<2x4x512xf32>
    %86 = arith.addf %82, %85 : vector<2x4x512xf32>
    %c0_27 = arith.constant 0 : index
    %c0_28 = arith.constant 0 : index
    %87 = vector.load %arg8[%c0_27, %c0_28] : memref<128x1024xf32, #tpu.memory_space<vmem>>, vector<128x1024xf32>
    %c0_29 = arith.constant 0 : index
    %c0_30 = arith.constant 0 : index
    %88 = vector.load %arg9[%c0_29, %c0_30] : memref<128x512xf32, #tpu.memory_space<vmem>>, vector<128x512xf32>
    %c0_31 = arith.constant 0 : index
    %c0_32 = arith.constant 0 : index
    %89 = vector.load %arg11[%c0_31, %c0_32] : memref<1x512xf32, #tpu.memory_space<vmem>>, vector<1x512xf32>
    %cst_33 = arith.constant 0.000000e+00 : f32
    %90 = vector.broadcast %cst_33 : f32 to vector<2x128xf32>
    %cst_34 = arith.constant 0.000000e+00 : f32
    %91 = vector.broadcast %cst_34 : f32 to vector<2x1024xf32>
    %92 = vector.extract_strided_slice %86 {offsets = [0, 0, 0], sizes = [2, 1, 512], strides = [1, 1, 1]} : vector<2x4x512xf32> to vector<2x1x512xf32>
    %93 = vector.shape_cast %92 : vector<2x1x512xf32> to vector<2x512xf32>
    %94 = vector.extract_strided_slice %91 {offsets = [0, 0], sizes = [2, 512], strides = [1, 1]} : vector<2x1024xf32> to vector<2x512xf32>
    %95 = arith.addf %93, %94 : vector<2x512xf32>
    %96 = vector.extract_strided_slice %95 {offsets = [0, 0], sizes = [2, 128], strides = [1, 1]} : vector<2x512xf32> to vector<2x128xf32>
    %97 = arith.negf %96 : vector<2x128xf32>
    %98 = math.exp %97 : vector<2x128xf32>
    %cst_35 = arith.constant 1.000000e+00 : f32
    %99 = vector.broadcast %cst_35 : f32 to vector<2x128xf32>
    %100 = arith.addf %99, %98 : vector<2x128xf32>
    %101 = arith.divf %99, %100 : vector<2x128xf32>
    %102 = vector.extract_strided_slice %95 {offsets = [0, 128], sizes = [2, 128], strides = [1, 1]} : vector<2x512xf32> to vector<2x128xf32>
    %103 = arith.negf %102 : vector<2x128xf32>
    %104 = math.exp %103 : vector<2x128xf32>
    %cst_36 = arith.constant 1.000000e+00 : f32
    %105 = vector.broadcast %cst_36 : f32 to vector<2x128xf32>
    %106 = arith.addf %105, %104 : vector<2x128xf32>
    %107 = arith.divf %105, %106 : vector<2x128xf32>
    %108 = vector.extract_strided_slice %95 {offsets = [0, 256], sizes = [2, 128], strides = [1, 1]} : vector<2x512xf32> to vector<2x128xf32>
    %109 = math.tanh %108 : vector<2x128xf32>
    %110 = vector.extract_strided_slice %95 {offsets = [0, 384], sizes = [2, 128], strides = [1, 1]} : vector<2x512xf32> to vector<2x128xf32>
    %111 = arith.negf %110 : vector<2x128xf32>
    %112 = math.exp %111 : vector<2x128xf32>
    %cst_37 = arith.constant 1.000000e+00 : f32
    %113 = vector.broadcast %cst_37 : f32 to vector<2x128xf32>
    %114 = arith.addf %113, %112 : vector<2x128xf32>
    %115 = arith.divf %113, %114 : vector<2x128xf32>
    %116 = arith.mulf %107, %90 : vector<2x128xf32>
    %117 = arith.mulf %101, %109 : vector<2x128xf32>
    %118 = arith.addf %116, %117 : vector<2x128xf32>
    %119 = math.tanh %118 : vector<2x128xf32>
    %120 = arith.mulf %115, %119 : vector<2x128xf32>
    %cst_38 = arith.constant dense<0.000000e+00> : vector<2x1024xf32>
    %121 = tpu.matmul %120, %87, %cst_38 {dimension_numbers = #tpu.dot_dimension_numbers<[1], [0], [0], [1], [0, 0, 1, 1], [], []>} : vector<2x128xf32>, vector<128x1024xf32>, vector<2x1024xf32> -> vector<2x1024xf32>
    %122 = vector.extract_strided_slice %121 {offsets = [0, 512], sizes = [2, 512], strides = [1, 1]} : vector<2x1024xf32> to vector<2x512xf32>
    %cst_39 = arith.constant dense<0.000000e+00> : vector<2x512xf32>
    %123 = tpu.matmul %90, %88, %cst_39 {dimension_numbers = #tpu.dot_dimension_numbers<[1], [0], [0], [1], [0, 0, 1, 1], [], []>} : vector<2x128xf32>, vector<128x512xf32>, vector<2x512xf32> -> vector<2x512xf32>
    %124 = arith.addf %122, %123 : vector<2x512xf32>
    %125 = vector.broadcast %89 : vector<1x512xf32> to vector<2x512xf32>
    %126 = arith.addf %124, %125 : vector<2x512xf32>
    %127 = vector.extract_strided_slice %126 {offsets = [0, 0], sizes = [2, 128], strides = [1, 1]} : vector<2x512xf32> to vector<2x128xf32>
    %128 = arith.negf %127 : vector<2x128xf32>
    %129 = math.exp %128 : vector<2x128xf32>
    %cst_40 = arith.constant 1.000000e+00 : f32
    %130 = vector.broadcast %cst_40 : f32 to vector<2x128xf32>
    %131 = arith.addf %130, %129 : vector<2x128xf32>
    %132 = arith.divf %130, %131 : vector<2x128xf32>
    %133 = vector.extract_strided_slice %126 {offsets = [0, 128], sizes = [2, 128], strides = [1, 1]} : vector<2x512xf32> to vector<2x128xf32>
    %134 = arith.negf %133 : vector<2x128xf32>
    %135 = math.exp %134 : vector<2x128xf32>
    %cst_41 = arith.constant 1.000000e+00 : f32
    %136 = vector.broadcast %cst_41 : f32 to vector<2x128xf32>
    %137 = arith.addf %136, %135 : vector<2x128xf32>
    %138 = arith.divf %136, %137 : vector<2x128xf32>
    %139 = vector.extract_strided_slice %126 {offsets = [0, 256], sizes = [2, 128], strides = [1, 1]} : vector<2x512xf32> to vector<2x128xf32>
    %140 = math.tanh %139 : vector<2x128xf32>
    %141 = vector.extract_strided_slice %126 {offsets = [0, 384], sizes = [2, 128], strides = [1, 1]} : vector<2x512xf32> to vector<2x128xf32>
    %142 = arith.negf %141 : vector<2x128xf32>
    %143 = math.exp %142 : vector<2x128xf32>
    %cst_42 = arith.constant 1.000000e+00 : f32
    %144 = vector.broadcast %cst_42 : f32 to vector<2x128xf32>
    %145 = arith.addf %144, %143 : vector<2x128xf32>
    %146 = arith.divf %144, %145 : vector<2x128xf32>
    %147 = arith.mulf %138, %90 : vector<2x128xf32>
    %148 = arith.mulf %132, %140 : vector<2x128xf32>
    %149 = arith.addf %147, %148 : vector<2x128xf32>
    %150 = math.tanh %149 : vector<2x128xf32>
    %151 = arith.mulf %146, %150 : vector<2x128xf32>
    %152 = vector.extract_strided_slice %86 {offsets = [0, 1, 0], sizes = [2, 1, 512], strides = [1, 1, 1]} : vector<2x4x512xf32> to vector<2x1x512xf32>
    %153 = vector.shape_cast %152 : vector<2x1x512xf32> to vector<2x512xf32>
    %154 = vector.extract_strided_slice %121 {offsets = [0, 0], sizes = [2, 512], strides = [1, 1]} : vector<2x1024xf32> to vector<2x512xf32>
    %155 = arith.addf %153, %154 : vector<2x512xf32>
    %156 = vector.extract_strided_slice %155 {offsets = [0, 0], sizes = [2, 128], strides = [1, 1]} : vector<2x512xf32> to vector<2x128xf32>
    %157 = arith.negf %156 : vector<2x128xf32>
    %158 = math.exp %157 : vector<2x128xf32>
    %cst_43 = arith.constant 1.000000e+00 : f32
    %159 = vector.broadcast %cst_43 : f32 to vector<2x128xf32>
    %160 = arith.addf %159, %158 : vector<2x128xf32>
    %161 = arith.divf %159, %160 : vector<2x128xf32>
    %162 = vector.extract_strided_slice %155 {offsets = [0, 128], sizes = [2, 128], strides = [1, 1]} : vector<2x512xf32> to vector<2x128xf32>
    %163 = arith.negf %162 : vector<2x128xf32>
    %164 = math.exp %163 : vector<2x128xf32>
    %cst_44 = arith.constant 1.000000e+00 : f32
    %165 = vector.broadcast %cst_44 : f32 to vector<2x128xf32>
    %166 = arith.addf %165, %164 : vector<2x128xf32>
    %167 = arith.divf %165, %166 : vector<2x128xf32>
    %168 = vector.extract_strided_slice %155 {offsets = [0, 256], sizes = [2, 128], strides = [1, 1]} : vector<2x512xf32> to vector<2x128xf32>
    %169 = math.tanh %168 : vector<2x128xf32>
    %170 = vector.extract_strided_slice %155 {offsets = [0, 384], sizes = [2, 128], strides = [1, 1]} : vector<2x512xf32> to vector<2x128xf32>
    %171 = arith.negf %170 : vector<2x128xf32>
    %172 = math.exp %171 : vector<2x128xf32>
    %cst_45 = arith.constant 1.000000e+00 : f32
    %173 = vector.broadcast %cst_45 : f32 to vector<2x128xf32>
    %174 = arith.addf %173, %172 : vector<2x128xf32>
    %175 = arith.divf %173, %174 : vector<2x128xf32>
    %176 = arith.mulf %167, %118 : vector<2x128xf32>
    %177 = arith.mulf %161, %169 : vector<2x128xf32>
    %178 = arith.addf %176, %177 : vector<2x128xf32>
    %179 = math.tanh %178 : vector<2x128xf32>
    %180 = arith.mulf %175, %179 : vector<2x128xf32>
    %cst_46 = arith.constant dense<0.000000e+00> : vector<2x1024xf32>
    %181 = tpu.matmul %180, %87, %cst_46 {dimension_numbers = #tpu.dot_dimension_numbers<[1], [0], [0], [1], [0, 0, 1, 1], [], []>} : vector<2x128xf32>, vector<128x1024xf32>, vector<2x1024xf32> -> vector<2x1024xf32>
    %182 = vector.extract_strided_slice %181 {offsets = [0, 512], sizes = [2, 512], strides = [1, 1]} : vector<2x1024xf32> to vector<2x512xf32>
    %cst_47 = arith.constant dense<0.000000e+00> : vector<2x512xf32>
    %183 = tpu.matmul %151, %88, %cst_47 {dimension_numbers = #tpu.dot_dimension_numbers<[1], [0], [0], [1], [0, 0, 1, 1], [], []>} : vector<2x128xf32>, vector<128x512xf32>, vector<2x512xf32> -> vector<2x512xf32>
    %184 = arith.addf %182, %183 : vector<2x512xf32>
    %185 = vector.broadcast %89 : vector<1x512xf32> to vector<2x512xf32>
    %186 = arith.addf %184, %185 : vector<2x512xf32>
    %187 = vector.extract_strided_slice %186 {offsets = [0, 0], sizes = [2, 128], strides = [1, 1]} : vector<2x512xf32> to vector<2x128xf32>
    %188 = arith.negf %187 : vector<2x128xf32>
    %189 = math.exp %188 : vector<2x128xf32>
    %cst_48 = arith.constant 1.000000e+00 : f32
    %190 = vector.broadcast %cst_48 : f32 to vector<2x128xf32>
    %191 = arith.addf %190, %189 : vector<2x128xf32>
    %192 = arith.divf %190, %191 : vector<2x128xf32>
    %193 = vector.extract_strided_slice %186 {offsets = [0, 128], sizes = [2, 128], strides = [1, 1]} : vector<2x512xf32> to vector<2x128xf32>
    %194 = arith.negf %193 : vector<2x128xf32>
    %195 = math.exp %194 : vector<2x128xf32>
    %cst_49 = arith.constant 1.000000e+00 : f32
    %196 = vector.broadcast %cst_49 : f32 to vector<2x128xf32>
    %197 = arith.addf %196, %195 : vector<2x128xf32>
    %198 = arith.divf %196, %197 : vector<2x128xf32>
    %199 = vector.extract_strided_slice %186 {offsets = [0, 256], sizes = [2, 128], strides = [1, 1]} : vector<2x512xf32> to vector<2x128xf32>
    %200 = math.tanh %199 : vector<2x128xf32>
    %201 = vector.extract_strided_slice %186 {offsets = [0, 384], sizes = [2, 128], strides = [1, 1]} : vector<2x512xf32> to vector<2x128xf32>
    %202 = arith.negf %201 : vector<2x128xf32>
    %203 = math.exp %202 : vector<2x128xf32>
    %cst_50 = arith.constant 1.000000e+00 : f32
    %204 = vector.broadcast %cst_50 : f32 to vector<2x128xf32>
    %205 = arith.addf %204, %203 : vector<2x128xf32>
    %206 = arith.divf %204, %205 : vector<2x128xf32>
    %207 = arith.mulf %198, %149 : vector<2x128xf32>
    %208 = arith.mulf %192, %200 : vector<2x128xf32>
    %209 = arith.addf %207, %208 : vector<2x128xf32>
    %210 = math.tanh %209 : vector<2x128xf32>
    %211 = arith.mulf %206, %210 : vector<2x128xf32>
    %212 = vector.extract_strided_slice %86 {offsets = [0, 2, 0], sizes = [2, 1, 512], strides = [1, 1, 1]} : vector<2x4x512xf32> to vector<2x1x512xf32>
    %213 = vector.shape_cast %212 : vector<2x1x512xf32> to vector<2x512xf32>
    %214 = vector.extract_strided_slice %181 {offsets = [0, 0], sizes = [2, 512], strides = [1, 1]} : vector<2x1024xf32> to vector<2x512xf32>
    %215 = arith.addf %213, %214 : vector<2x512xf32>
    %216 = vector.extract_strided_slice %215 {offsets = [0, 0], sizes = [2, 128], strides = [1, 1]} : vector<2x512xf32> to vector<2x128xf32>
    %217 = arith.negf %216 : vector<2x128xf32>
    %218 = math.exp %217 : vector<2x128xf32>
    %cst_51 = arith.constant 1.000000e+00 : f32
    %219 = vector.broadcast %cst_51 : f32 to vector<2x128xf32>
    %220 = arith.addf %219, %218 : vector<2x128xf32>
    %221 = arith.divf %219, %220 : vector<2x128xf32>
    %222 = vector.extract_strided_slice %215 {offsets = [0, 128], sizes = [2, 128], strides = [1, 1]} : vector<2x512xf32> to vector<2x128xf32>
    %223 = arith.negf %222 : vector<2x128xf32>
    %224 = math.exp %223 : vector<2x128xf32>
    %cst_52 = arith.constant 1.000000e+00 : f32
    %225 = vector.broadcast %cst_52 : f32 to vector<2x128xf32>
    %226 = arith.addf %225, %224 : vector<2x128xf32>
    %227 = arith.divf %225, %226 : vector<2x128xf32>
    %228 = vector.extract_strided_slice %215 {offsets = [0, 256], sizes = [2, 128], strides = [1, 1]} : vector<2x512xf32> to vector<2x128xf32>
    %229 = math.tanh %228 : vector<2x128xf32>
    %230 = vector.extract_strided_slice %215 {offsets = [0, 384], sizes = [2, 128], strides = [1, 1]} : vector<2x512xf32> to vector<2x128xf32>
    %231 = arith.negf %230 : vector<2x128xf32>
    %232 = math.exp %231 : vector<2x128xf32>
    %cst_53 = arith.constant 1.000000e+00 : f32
    %233 = vector.broadcast %cst_53 : f32 to vector<2x128xf32>
    %234 = arith.addf %233, %232 : vector<2x128xf32>
    %235 = arith.divf %233, %234 : vector<2x128xf32>
    %236 = arith.mulf %227, %178 : vector<2x128xf32>
    %237 = arith.mulf %221, %229 : vector<2x128xf32>
    %238 = arith.addf %236, %237 : vector<2x128xf32>
    %239 = math.tanh %238 : vector<2x128xf32>
    %240 = arith.mulf %235, %239 : vector<2x128xf32>
    %cst_54 = arith.constant dense<0.000000e+00> : vector<2x1024xf32>
    %241 = tpu.matmul %240, %87, %cst_54 {dimension_numbers = #tpu.dot_dimension_numbers<[1], [0], [0], [1], [0, 0, 1, 1], [], []>} : vector<2x128xf32>, vector<128x1024xf32>, vector<2x1024xf32> -> vector<2x1024xf32>
    %242 = vector.extract_strided_slice %241 {offsets = [0, 512], sizes = [2, 512], strides = [1, 1]} : vector<2x1024xf32> to vector<2x512xf32>
    %cst_55 = arith.constant dense<0.000000e+00> : vector<2x512xf32>
    %243 = tpu.matmul %211, %88, %cst_55 {dimension_numbers = #tpu.dot_dimension_numbers<[1], [0], [0], [1], [0, 0, 1, 1], [], []>} : vector<2x128xf32>, vector<128x512xf32>, vector<2x512xf32> -> vector<2x512xf32>
    %244 = arith.addf %242, %243 : vector<2x512xf32>
    %245 = vector.broadcast %89 : vector<1x512xf32> to vector<2x512xf32>
    %246 = arith.addf %244, %245 : vector<2x512xf32>
    %247 = vector.extract_strided_slice %246 {offsets = [0, 0], sizes = [2, 128], strides = [1, 1]} : vector<2x512xf32> to vector<2x128xf32>
    %248 = arith.negf %247 : vector<2x128xf32>
    %249 = math.exp %248 : vector<2x128xf32>
    %cst_56 = arith.constant 1.000000e+00 : f32
    %250 = vector.broadcast %cst_56 : f32 to vector<2x128xf32>
    %251 = arith.addf %250, %249 : vector<2x128xf32>
    %252 = arith.divf %250, %251 : vector<2x128xf32>
    %253 = vector.extract_strided_slice %246 {offsets = [0, 128], sizes = [2, 128], strides = [1, 1]} : vector<2x512xf32> to vector<2x128xf32>
    %254 = arith.negf %253 : vector<2x128xf32>
    %255 = math.exp %254 : vector<2x128xf32>
    %cst_57 = arith.constant 1.000000e+00 : f32
    %256 = vector.broadcast %cst_57 : f32 to vector<2x128xf32>
    %257 = arith.addf %256, %255 : vector<2x128xf32>
    %258 = arith.divf %256, %257 : vector<2x128xf32>
    %259 = vector.extract_strided_slice %246 {offsets = [0, 256], sizes = [2, 128], strides = [1, 1]} : vector<2x512xf32> to vector<2x128xf32>
    %260 = math.tanh %259 : vector<2x128xf32>
    %261 = vector.extract_strided_slice %246 {offsets = [0, 384], sizes = [2, 128], strides = [1, 1]} : vector<2x512xf32> to vector<2x128xf32>
    %262 = arith.negf %261 : vector<2x128xf32>
    %263 = math.exp %262 : vector<2x128xf32>
    %cst_58 = arith.constant 1.000000e+00 : f32
    %264 = vector.broadcast %cst_58 : f32 to vector<2x128xf32>
    %265 = arith.addf %264, %263 : vector<2x128xf32>
    %266 = arith.divf %264, %265 : vector<2x128xf32>
    %267 = arith.mulf %258, %209 : vector<2x128xf32>
    %268 = arith.mulf %252, %260 : vector<2x128xf32>
    %269 = arith.addf %267, %268 : vector<2x128xf32>
    %270 = math.tanh %269 : vector<2x128xf32>
    %271 = arith.mulf %266, %270 : vector<2x128xf32>
    %272 = vector.extract_strided_slice %86 {offsets = [0, 3, 0], sizes = [2, 1, 512], strides = [1, 1, 1]} : vector<2x4x512xf32> to vector<2x1x512xf32>
    %273 = vector.shape_cast %272 : vector<2x1x512xf32> to vector<2x512xf32>
    %274 = vector.extract_strided_slice %241 {offsets = [0, 0], sizes = [2, 512], strides = [1, 1]} : vector<2x1024xf32> to vector<2x512xf32>
    %275 = arith.addf %273, %274 : vector<2x512xf32>
    %276 = vector.extract_strided_slice %275 {offsets = [0, 0], sizes = [2, 128], strides = [1, 1]} : vector<2x512xf32> to vector<2x128xf32>
    %277 = arith.negf %276 : vector<2x128xf32>
    %278 = math.exp %277 : vector<2x128xf32>
    %cst_59 = arith.constant 1.000000e+00 : f32
    %279 = vector.broadcast %cst_59 : f32 to vector<2x128xf32>
    %280 = arith.addf %279, %278 : vector<2x128xf32>
    %281 = arith.divf %279, %280 : vector<2x128xf32>
    %282 = vector.extract_strided_slice %275 {offsets = [0, 128], sizes = [2, 128], strides = [1, 1]} : vector<2x512xf32> to vector<2x128xf32>
    %283 = arith.negf %282 : vector<2x128xf32>
    %284 = math.exp %283 : vector<2x128xf32>
    %cst_60 = arith.constant 1.000000e+00 : f32
    %285 = vector.broadcast %cst_60 : f32 to vector<2x128xf32>
    %286 = arith.addf %285, %284 : vector<2x128xf32>
    %287 = arith.divf %285, %286 : vector<2x128xf32>
    %288 = vector.extract_strided_slice %275 {offsets = [0, 256], sizes = [2, 128], strides = [1, 1]} : vector<2x512xf32> to vector<2x128xf32>
    %289 = math.tanh %288 : vector<2x128xf32>
    %290 = vector.extract_strided_slice %275 {offsets = [0, 384], sizes = [2, 128], strides = [1, 1]} : vector<2x512xf32> to vector<2x128xf32>
    %291 = arith.negf %290 : vector<2x128xf32>
    %292 = math.exp %291 : vector<2x128xf32>
    %cst_61 = arith.constant 1.000000e+00 : f32
    %293 = vector.broadcast %cst_61 : f32 to vector<2x128xf32>
    %294 = arith.addf %293, %292 : vector<2x128xf32>
    %295 = arith.divf %293, %294 : vector<2x128xf32>
    %296 = arith.mulf %287, %238 : vector<2x128xf32>
    %297 = arith.mulf %281, %289 : vector<2x128xf32>
    %298 = arith.addf %296, %297 : vector<2x128xf32>
    %299 = math.tanh %298 : vector<2x128xf32>
    %300 = arith.mulf %295, %299 : vector<2x128xf32>
    %cst_62 = arith.constant dense<0.000000e+00> : vector<2x1024xf32>
    %301 = tpu.matmul %300, %87, %cst_62 {dimension_numbers = #tpu.dot_dimension_numbers<[1], [0], [0], [1], [0, 0, 1, 1], [], []>} : vector<2x128xf32>, vector<128x1024xf32>, vector<2x1024xf32> -> vector<2x1024xf32>
    %302 = vector.extract_strided_slice %301 {offsets = [0, 512], sizes = [2, 512], strides = [1, 1]} : vector<2x1024xf32> to vector<2x512xf32>
    %cst_63 = arith.constant dense<0.000000e+00> : vector<2x512xf32>
    %303 = tpu.matmul %271, %88, %cst_63 {dimension_numbers = #tpu.dot_dimension_numbers<[1], [0], [0], [1], [0, 0, 1, 1], [], []>} : vector<2x128xf32>, vector<128x512xf32>, vector<2x512xf32> -> vector<2x512xf32>
    %304 = arith.addf %302, %303 : vector<2x512xf32>
    %305 = vector.broadcast %89 : vector<1x512xf32> to vector<2x512xf32>
    %306 = arith.addf %304, %305 : vector<2x512xf32>
    %307 = vector.extract_strided_slice %306 {offsets = [0, 0], sizes = [2, 128], strides = [1, 1]} : vector<2x512xf32> to vector<2x128xf32>
    %308 = arith.negf %307 : vector<2x128xf32>
    %309 = math.exp %308 : vector<2x128xf32>
    %cst_64 = arith.constant 1.000000e+00 : f32
    %310 = vector.broadcast %cst_64 : f32 to vector<2x128xf32>
    %311 = arith.addf %310, %309 : vector<2x128xf32>
    %312 = arith.divf %310, %311 : vector<2x128xf32>
    %313 = vector.extract_strided_slice %306 {offsets = [0, 128], sizes = [2, 128], strides = [1, 1]} : vector<2x512xf32> to vector<2x128xf32>
    %314 = arith.negf %313 : vector<2x128xf32>
    %315 = math.exp %314 : vector<2x128xf32>
    %cst_65 = arith.constant 1.000000e+00 : f32
    %316 = vector.broadcast %cst_65 : f32 to vector<2x128xf32>
    %317 = arith.addf %316, %315 : vector<2x128xf32>
    %318 = arith.divf %316, %317 : vector<2x128xf32>
    %319 = vector.extract_strided_slice %306 {offsets = [0, 256], sizes = [2, 128], strides = [1, 1]} : vector<2x512xf32> to vector<2x128xf32>
    %320 = math.tanh %319 : vector<2x128xf32>
    %321 = vector.extract_strided_slice %306 {offsets = [0, 384], sizes = [2, 128], strides = [1, 1]} : vector<2x512xf32> to vector<2x128xf32>
    %322 = arith.negf %321 : vector<2x128xf32>
    %323 = math.exp %322 : vector<2x128xf32>
    %cst_66 = arith.constant 1.000000e+00 : f32
    %324 = vector.broadcast %cst_66 : f32 to vector<2x128xf32>
    %325 = arith.addf %324, %323 : vector<2x128xf32>
    %326 = arith.divf %324, %325 : vector<2x128xf32>
    %327 = arith.mulf %318, %269 : vector<2x128xf32>
    %328 = arith.mulf %312, %320 : vector<2x128xf32>
    %329 = arith.addf %327, %328 : vector<2x128xf32>
    %330 = math.tanh %329 : vector<2x128xf32>
    %331 = arith.mulf %326, %330 : vector<2x128xf32>
    %c0_67 = arith.constant 0 : index
    %c0_68 = arith.constant 0 : index
    %332 = vector.load %arg12[%c0_67, %c0_68] : memref<128x64xf32, #tpu.memory_space<vmem>>, vector<128x64xf32>
    %cst_69 = arith.constant dense<0.000000e+00> : vector<2x64xf32>
    %333 = tpu.matmul %331, %332, %cst_69 {dimension_numbers = #tpu.dot_dimension_numbers<[1], [0], [0], [1], [0, 0, 1, 1], [], []>} : vector<2x128xf32>, vector<128x64xf32>, vector<2x64xf32> -> vector<2x64xf32>
    %c0_70 = arith.constant 0 : index
    %c0_71 = arith.constant 0 : index
    %334 = vector.load %arg13[%c0_70, %c0_71] : memref<1x64xf32, #tpu.memory_space<vmem>>, vector<1x64xf32>
    %335 = vector.broadcast %334 : vector<1x64xf32> to vector<2x64xf32>
    %336 = arith.addf %333, %335 : vector<2x64xf32>
    %cst_72 = arith.constant 0.000000e+00 : f32
    %337 = vector.broadcast %cst_72 : f32 to vector<2x64xf32>
    %338 = arith.maximumf %336, %337 : vector<2x64xf32>
    %c0_73 = arith.constant 0 : index
    %c0_74 = arith.constant 0 : index
    %339 = vector.load %arg14[%c0_73, %c0_74] : memref<64x3xf32, #tpu.memory_space<vmem>>, vector<64x3xf32>
    %cst_75 = arith.constant dense<0.000000e+00> : vector<2x3xf32>
    %340 = tpu.matmul %338, %339, %cst_75 {dimension_numbers = #tpu.dot_dimension_numbers<[1], [0], [0], [1], [0, 0, 1, 1], [], []>} : vector<2x64xf32>, vector<64x3xf32>, vector<2x3xf32> -> vector<2x3xf32>
    %c0_76 = arith.constant 0 : index
    %c0_77 = arith.constant 0 : index
    %341 = vector.load %arg15[%c0_76, %c0_77] : memref<1x3xf32, #tpu.memory_space<vmem>>, vector<1x3xf32>
    %342 = vector.broadcast %341 : vector<1x3xf32> to vector<2x3xf32>
    %343 = arith.addf %340, %342 : vector<2x3xf32>
    %c0_78 = arith.constant 0 : index
    %c0_79 = arith.constant 0 : index
    %344 = vector.load %arg16[%c0_78, %c0_79] : memref<2x3xf32, #tpu.memory_space<vmem>>, vector<2x3xf32>
    tpu.vector_store %arg16[%c0_78, %c0_79], %343 {strides = array<i32>} : memref<2x3xf32, #tpu.memory_space<vmem>>, vector<2x3xf32>,
    return
  }
}

</mosaic_0001>

<llo_original>
// kernel: cnn_lstm_forward.1
$region0: #{cnn_lstm_forward.1}
  #allocation0 [shape = 'u32[]', space=smem, size = 0x4, offset = 0x4, fixed_abs, tag = 'smem constant byte address 0x4 - core index']
  #allocation1 [shape = 'u32[72,128]{1,0:T(1,128)}', space=vmem, size = 0x9000, scoped, tag = 'internal scratch']
  %s0 = inlined_call_operand.vmem [shape: f32[2,16,8], index: 0, kind: input, shape index: {}]
  %s1 = inlined_call_operand.vmem [shape: f32[24,64], index: 1, kind: input, shape index: {}]
  %s2 = inlined_call_operand.vmem [shape: f32[1,64], index: 2, kind: input, shape index: {}]
  %s3 = inlined_call_operand.vmem [shape: f32[192,128], index: 3, kind: input, shape index: {}]
  %s4 = inlined_call_operand.vmem [shape: f32[1,128], index: 4, kind: input, shape index: {}]
  %s5 = inlined_call_operand.hbm [shape: f32[384,256], index: 5, kind: input, shape index: {}]
  %s6 = inlined_call_operand.vmem [shape: f32[1,256], index: 6, kind: input, shape index: {}]
  %s7 = inlined_call_operand.hbm [shape: f32[256,512], index: 7, kind: input, shape index: {}]
  %s8 = inlined_call_operand.hbm [shape: f32[128,1024], index: 8, kind: input, shape index: {}]
  %s9 = inlined_call_operand.hbm [shape: f32[128,512], index: 9, kind: input, shape index: {}]
  %s10 = inlined_call_operand.vmem [shape: f32[1,512], index: 10, kind: input, shape index: {}]
  %s11 = inlined_call_operand.vmem [shape: f32[1,512], index: 11, kind: input, shape index: {}]
  %s12 = inlined_call_operand.vmem [shape: f32[128,64], index: 12, kind: input, shape index: {}]
  %s13 = inlined_call_operand.vmem [shape: f32[1,64], index: 13, kind: input, shape index: {}]
  %s14 = inlined_call_operand.vmem [shape: f32[64,3], index: 14, kind: input, shape index: {}]
  %s15 = inlined_call_operand.vmem [shape: f32[1,3], index: 15, kind: input, shape index: {}]
  %s16 = inlined_call_operand.hbm [shape: f32[2,3], index: 16, kind: output, shape index: {}]
  %s17 = sld [smem:[#allocation0]]
  $region90: #{cnn_lstm_forward.1} parent=0
    _
  %s19 = ssub.s32 1, %s17
  %s20 = scalar_select 0, %s19, %s17
  $region1: #{cnn_lstm_forward.1} parent=0
    #allocation2 [shape = 'u8[393216]{0}', space=vmem, size = 0x60000, scoped, tag = 'input window, operand 5, single buffered']
    #allocation3 [shape = 's32[1]{0}', space=sflag, size = 0x4, scoped, tag = 'scoped memory for cnn_lstm_forward.1']
    #allocation4 [shape = 's32[1]{0}', space=sflag, size = 0x4, scoped, tag = 'scoped memory for cnn_lstm_forward.1']
    #allocation5 [shape = 'u8[524288]{0}', space=vmem, size = 0x80000, scoped, tag = 'input window, operand 7, single buffered']
    #allocation6 [shape = 's32[1]{0}', space=sflag, size = 0x4, scoped, tag = 'scoped memory for cnn_lstm_forward.1']
    #allocation7 [shape = 'u8[524288]{0}', space=vmem, size = 0x80000, scoped, tag = 'input window, operand 8, single buffered']
    #allocation8 [shape = 'u8[262144]{0}', space=vmem, size = 0x40000, scoped, tag = 'input window, operand 9, single buffered']
    #allocation9 [shape = 's32[1]{0}', space=sflag, size = 0x4, scoped, tag = 'scoped memory for cnn_lstm_forward.1']
    #allocation10 [shape = 'u8[1024]{0}', space=vmem, size = 0x400, scoped, tag = 'output window, operand 0, single buffered']
    %21 = vsyncpa [#allocation3], 0
    %22 = vsyncpa [#allocation6], 0
    %23 = vsyncpa [#allocation9], 0
    %24 = vsyncpa [#allocation4], 0
    // Predicated region
    $region2: #{cnn_lstm_forward.1} parent=1 // pred_check
      _
    $region3: #{cnn_lstm_forward.1} parent=1 // pred_check_branch
      %26 = sbr.rel (0) target = $region5
    $region4: #{cnn_lstm_forward.1} parent=1 // pred_region
      _
    $region5: #{cnn_lstm_forward.1} parent=1 // pred_fallthru
      _
    // Predicated region
    $region6: #{cnn_lstm_forward.1} parent=1 // pred_check
      _
    $region7: #{cnn_lstm_forward.1} parent=1 // pred_check_branch
      %28 = sbr.rel (0) target = $region9
    $region8: #{cnn_lstm_forward.1} parent=1 // pred_region
      _
    $region9: #{cnn_lstm_forward.1} parent=1 // pred_fallthru
      _
    // Predicated region
    $region10: #{cnn_lstm_forward.1} parent=1 // pred_check
      _
    $region11: #{cnn_lstm_forward.1} parent=1 // pred_check_branch
      %30 = sbr.rel (0) target = $region13
    $region12: #{cnn_lstm_forward.1} parent=1 // pred_region
      _
    $region13: #{cnn_lstm_forward.1} parent=1 // pred_fallthru
      _
    // Predicated region
    $region14: #{cnn_lstm_forward.1} parent=1 // pred_check
      _
    $region15: #{cnn_lstm_forward.1} parent=1 // pred_check_branch
      %32 = sbr.rel (0) target = $region17
    $region16: #{cnn_lstm_forward.1} parent=1 // pred_region
      _
    $region17: #{cnn_lstm_forward.1} parent=1 // pred_fallthru
      _
    // Predicated region
    $region18: #{cnn_lstm_forward.1} parent=1 // pred_check
      _
    $region19: #{cnn_lstm_forward.1} parent=1 // pred_check_branch
      %34 = sbr.rel (0) target = $region21
    $region20: #{cnn_lstm_forward.1} parent=1 // pred_region
      _
    $region21: #{cnn_lstm_forward.1} parent=1 // pred_fallthru
      _
    // Predicated region
    $region22: #{cnn_lstm_forward.1} parent=1 // pred_check
      _
    $region23: #{cnn_lstm_forward.1} parent=1 // pred_check_branch
      %36 = sbr.rel (0) target = $region25
    $region24: #{cnn_lstm_forward.1} parent=1 // pred_region
      %38 = vsyncadd [#allocation3], 0
      %s39 = sshll.u32 %s5, 4
      %s40 = int_to_ptr.hbm [resolvable:$true] %s39
      %s41 = sshll.u32 [#allocation2], 4
      %s42 = int_to_ptr.vmem [resolvable:$true] %s41
      %47 = dma.hbm_to_vmem [thread:$0]  %s40, 12288, %s42, [#allocation3], 256, 256, 16
    $region25: #{cnn_lstm_forward.1} parent=1 // pred_fallthru
      _
    // Predicated region
    $region26: #{cnn_lstm_forward.1} parent=1 // pred_check
      _
    $region27: #{cnn_lstm_forward.1} parent=1 // pred_check_branch
      %49 = sbr.rel (0) target = $region29
    $region28: #{cnn_lstm_forward.1} parent=1 // pred_region
      _
    $region29: #{cnn_lstm_forward.1} parent=1 // pred_fallthru
      _
    // Predicated region
    $region30: #{cnn_lstm_forward.1} parent=1 // pred_check
      _
    $region31: #{cnn_lstm_forward.1} parent=1 // pred_check_branch
      %51 = sbr.rel (0) target = $region33
    $region32: #{cnn_lstm_forward.1} parent=1 // pred_region
      %53 = vsyncadd [#allocation6], 0
      %s54 = sshll.u32 %s7, 4
      %s55 = int_to_ptr.hbm [resolvable:$true] %s54
      %s56 = sshll.u32 [#allocation5], 4
      %s57 = int_to_ptr.vmem [resolvable:$true] %s56
      %62 = dma.hbm_to_vmem [thread:$0]  %s55, 16384, %s57, [#allocation6], 512, 512, 32
    $region33: #{cnn_lstm_forward.1} parent=1 // pred_fallthru
      _
    // Predicated region
    $region34: #{cnn_lstm_forward.1} parent=1 // pred_check
      _
    $region35: #{cnn_lstm_forward.1} parent=1 // pred_check_branch
      %64 = sbr.rel (0) target = $region37
    $region36: #{cnn_lstm_forward.1} parent=1 // pred_region
      %66 = vsyncadd [#allocation6], 0
      %s67 = sshll.u32 %s8, 4
      %s68 = int_to_ptr.hbm [resolvable:$true] %s67
      %s69 = sshll.u32 [#allocation7], 4
      %s70 = int_to_ptr.vmem [resolvable:$true] %s69
      %75 = dma.hbm_to_vmem [thread:$0]  %s68, 16384, %s70, [#allocation6], 1024, 1024, 64
    $region37: #{cnn_lstm_forward.1} parent=1 // pred_fallthru
      _
    // Predicated region
    $region38: #{cnn_lstm_forward.1} parent=1 // pred_check
      _
    $region39: #{cnn_lstm_forward.1} parent=1 // pred_check_branch
      %77 = sbr.rel (0) target = $region41
    $region40: #{cnn_lstm_forward.1} parent=1 // pred_region
      %79 = vsyncadd [#allocation9], 0
      %s80 = sshll.u32 %s9, 4
      %s81 = int_to_ptr.hbm [resolvable:$true] %s80
      %s82 = sshll.u32 [#allocation8], 4
      %s83 = int_to_ptr.vmem [resolvable:$true] %s82
      %88 = dma.hbm_to_vmem [thread:$0]  %s81, 8192, %s83, [#allocation9], 512, 512, 32
    $region41: #{cnn_lstm_forward.1} parent=1 // pred_fallthru
      _
    // Predicated region
    $region42: #{cnn_lstm_forward.1} parent=1 // pred_check
      _
    $region43: #{cnn_lstm_forward.1} parent=1 // pred_check_branch
      %90 = sbr.rel (0) target = $region45
    $region44: #{cnn_lstm_forward.1} parent=1 // pred_region
      _
    $region45: #{cnn_lstm_forward.1} parent=1 // pred_fallthru
      _
    // Predicated region
    $region46: #{cnn_lstm_forward.1} parent=1 // pred_check
      _
    $region47: #{cnn_lstm_forward.1} parent=1 // pred_check_branch
      %92 = sbr.rel (0) target = $region49
    $region48: #{cnn_lstm_forward.1} parent=1 // pred_region
      _
    $region49: #{cnn_lstm_forward.1} parent=1 // pred_fallthru
      _
    // Predicated region
    $region50: #{cnn_lstm_forward.1} parent=1 // pred_check
      _
    $region51: #{cnn_lstm_forward.1} parent=1 // pred_check_branch
      %94 = sbr.rel (0) target = $region53
    $region52: #{cnn_lstm_forward.1} parent=1 // pred_region
      _
    $region53: #{cnn_lstm_forward.1} parent=1 // pred_fallthru
      _
    // Predicated region
    $region54: #{cnn_lstm_forward.1} parent=1 // pred_check
      _
    $region55: #{cnn_lstm_forward.1} parent=1 // pred_check_branch
      %96 = sbr.rel (0) target = $region57
    $region56: #{cnn_lstm_forward.1} parent=1 // pred_region
      _
    $region57: #{cnn_lstm_forward.1} parent=1 // pred_fallthru
      _
    // Predicated region
    $region58: #{cnn_lstm_forward.1} parent=1 // pred_check
      _
    $region59: #{cnn_lstm_forward.1} parent=1 // pred_check_branch
      %98 = sbr.rel (0) target = $region61
    $region60: #{cnn_lstm_forward.1} parent=1 // pred_region
      _
    $region61: #{cnn_lstm_forward.1} parent=1 // pred_fallthru
      _
    // Predicated region
    $region62: #{cnn_lstm_forward.1} parent=1 // pred_check
      _
    $region63: #{cnn_lstm_forward.1} parent=1 // pred_check_branch
      %100 = sbr.rel (0) target = $region65
    $region64: #{cnn_lstm_forward.1} parent=1 // pred_region
      _
    $region65: #{cnn_lstm_forward.1} parent=1 // pred_fallthru
      _
    // Predicated region
    $region66: #{cnn_lstm_forward.1} parent=1 // pred_check
      _
    $region67: #{cnn_lstm_forward.1} parent=1 // pred_check_branch
      %102 = sbr.rel (0) target = $region69
    $region68: #{cnn_lstm_forward.1} parent=1 // pred_region
      %104 = dma.done [#allocation3], 12288
    $region69: #{cnn_lstm_forward.1} parent=1 // pred_fallthru
      _
    // Predicated region
    $region70: #{cnn_lstm_forward.1} parent=1 // pred_check
      _
    $region71: #{cnn_lstm_forward.1} parent=1 // pred_check_branch
      %106 = sbr.rel (0) target = $region73
    $region72: #{cnn_lstm_forward.1} parent=1 // pred_region
      %108 = dma.done [#allocation6], 16384
    $region73: #{cnn_lstm_forward.1} parent=1 // pred_fallthru
      _
    // Predicated region
    $region74: #{cnn_lstm_forward.1} parent=1 // pred_check
      _
    $region75: #{cnn_lstm_forward.1} parent=1 // pred_check_branch
      %110 = sbr.rel (0) target = $region77
    $region76: #{cnn_lstm_forward.1} parent=1 // pred_region
      %112 = dma.done [#allocation6], 16384
    $region77: #{cnn_lstm_forward.1} parent=1 // pred_fallthru
      _
    // Predicated region
    $region78: #{cnn_lstm_forward.1} parent=1 // pred_check
      _
    $region79: #{cnn_lstm_forward.1} parent=1 // pred_check_branch
      %114 = sbr.rel (0) target = $region81
    $region80: #{cnn_lstm_forward.1} parent=1 // pred_region
      %116 = dma.done [#allocation9], 8192
    $region81: #{cnn_lstm_forward.1} parent=1 // pred_fallthru
      _
    %v117 = vld [vmem:[%s0] sm:$0xff]
    %v118 = vld [vmem:[%s0 + $0x8] sm:$0xff]
    %v119 = vld [vmem:[%s0 + $0x10] sm:$0xff]
    %v120 = vld [vmem:[%s0 + $0x18] sm:$0xff]
    %v121 = vld [vmem:[%s1] sm:$0xff]
    %v122 = vld [vmem:[%s1 + $0x8] sm:$0xff]
    %v123 = vld [vmem:[%s1 + $0x10] sm:$0xff]
    %v124 = vld [vmem:[%s2] sm:$0x1]
    %vm129 = vcmask 1040384
    %v130 = vrot.slane %v117, 7
    %v131 = vrot.slane %v118, 7
    %v132 = vsel %vm129, %v130, %v131
    %v133 = vrot.slane %v119, 7
    %v134 = vrot.slane %v120, 7
    %v135 = vsel %vm129, %v133, %v134
    %v140 = vsel %vm129, 0.0, %v130
    %v141 = vsel %vm129, 0.0, %v133
    %vm142 = vcmask 1046528
    %v143 = vrot.slane %v117, 1
    %v144 = vrot.slane %v118, 1
    %v145 = vsel %vm142, %v143, %v144
    %v146 = vrot.slane %v119, 1
    %v147 = vrot.slane %v120, 1
    %v148 = vsel %vm142, %v146, %v147
    %v151 = vsel %vm142, %v144, 0.0
    %v152 = vsel %vm142, %v147, 0.0
    %153 = vrot.lane.b32.xlu0 %v117, 8
    %v154 = vpop.permute.xlu0 %153
    %155 = vrot.lane.b32.xlu0 %v118, 8
    %v156 = vpop.permute.xlu0 %155
    %157 = vrot.lane.b32.xlu0 %v119, 8
    %v158 = vpop.permute.xlu0 %157
    %159 = vrot.lane.b32.xlu0 %v120, 8
    %v160 = vpop.permute.xlu0 %159
    %167 = vrot.lane.b32.xlu0 %v145, 16
    %v168 = vpop.permute.xlu0 %167
    %169 = vrot.lane.b32.xlu0 %v151, 16
    %v170 = vpop.permute.xlu0 %169
    %171 = vrot.lane.b32.xlu0 %v148, 16
    %v172 = vpop.permute.xlu0 %171
    %173 = vrot.lane.b32.xlu0 %v152, 16
    %v174 = vpop.permute.xlu0 %173
    %vm179 = vcmask 64512
    %v180 = vsel %vm179, %v140, %v154
    %v181 = vsel %vm179, %v132, %v156
    %v182 = vsel %vm179, %v141, %v158
    %v183 = vsel %vm179, %v135, %v160
    %vm184 = vcmask 130048
    %v185 = vsel %vm184, %v180, %v168
    %v186 = vsel %vm184, %v181, %v170
    %v187 = vsel %vm184, %v182, %v172
    %v188 = vsel %vm184, %v183, %v174
    %v190 = vperm.slane %v124, 0
    %vm192 = vcmask 195584
    %v194 = vsel %vm192, %v185, 0
    %v197 = vsel %vm192, %v186, 0
    %v200 = vsel %vm192, %v187, 0
    %v203 = vsel %vm192, %v188, 0
    %205 = vmatpush.msra.mxu0 0.0
    %206 = vmatpush.msra.mxu0 0.0
    %207 = vmatpush.msra.mxu0 0.0
    %208 = vmatpush.msra.mxu0 0.0
    %209 = vmatpush.msra.mxu0 0.0
    %210 = vmatpush.msra.mxu0 0.0
    %211 = vmatpush.msra.mxu0 0.0
    %212 = vmatpush.msra.mxu0 0.0
    %213 = vmatpush.msra.mxu0 0.0
    %214 = vmatpush.msra.mxu0 0.0
    %215 = vmatpush.msra.mxu0 0.0
    %216 = vmatpush.msra.mxu0 0.0
    %217 = vmatpush.msra.mxu0 0.0
    %218 = vmatpush.msra.mxu0 %v123
    %219 = vmatpush.msra.mxu0 %v122
    %220 = vmatpush.msra.mxu0 %v121
    %221 = vmatmul.f32.gmra.mxu0 %v194
    %v222 = vpop.f32.mrf.mxu0
    %v223 = vadd.f32 %v190, %v222
    %224 = vmatmul.f32.gmra.mxu0 %v197
    %v225 = vpop.f32.mrf.mxu0
    %v226 = vadd.f32 %v190, %v225
    %227 = vmatmul.f32.gmra.mxu0 %v200
    %v228 = vpop.f32.mrf.mxu0
    %v229 = vadd.f32 %v190, %v228
    %230 = vmatmul.f32.gmra.mxu0 %v203
    %v231 = vpop.f32.mrf.mxu0
    %v232 = vadd.f32 %v190, %v231
    %233 = vdwg.mxu0
    %v234 = vmax.f32 %v223, 0.0
    %v235 = vmax.f32 %v226, 0.0
    %v236 = vmax.f32 %v229, 0.0
    %v237 = vmax.f32 %v232, 0.0
    %v240 = vrot.slane %v234, 1
    %v241 = vrot.slane %v236, 1
    %v244 = vmax.f32 %v234, %v240
    %v245 = vmax.f32 %v236, %v241
    %v248 = vrot.slane %v235, 1
    %v249 = vrot.slane %v237, 1
    %v252 = vmax.f32 %v235, %v248
    %v253 = vmax.f32 %v237, %v249
    %v256 = vrot.slane %v244, 1
    %v257 = vrot.slane %v245, 1
    %v260 = vrot.slane %v244, 2
    %v261 = vrot.slane %v245, 2
    %v264 = vrot.slane %v244, 3
    %v265 = vrot.slane %v245, 3
    %v270 = vrot.slane %v252, 4
    %v271 = vrot.slane %v253, 4
    %v274 = vrot.slane %v252, 5
    %v275 = vrot.slane %v253, 5
    %v278 = vrot.slane %v252, 6
    %v279 = vrot.slane %v253, 6
    %v282 = vrot.slane %v252, 7
    %v283 = vrot.slane %v253, 7
    %v286 = vsel %vm129, %v244, %v256
    %v287 = vsel %vm129, %v245, %v257
    %vm288 = vcmask 1041408
    %v289 = vsel %vm288, %v286, %v260
    %v290 = vsel %vm288, %v287, %v261
    %vm291 = vcmask 1042432
    %v292 = vsel %vm291, %v289, %v264
    %v293 = vsel %vm291, %v290, %v265
    %vm294 = vcmask 1043456
    %v295 = vsel %vm294, %v292, %v270
    %v296 = vsel %vm294, %v293, %v271
    %vm297 = vcmask 1044480
    %v298 = vsel %vm297, %v295, %v274
    %v299 = vsel %vm297, %v296, %v275
    %vm300 = vcmask 1045504
    %v301 = vsel %vm300, %v298, %v278
    %v302 = vsel %vm300, %v299, %v279
    %v303 = vsel %vm142, %v301, %v282
    %v304 = vsel %vm142, %v302, %v283
    %v305 = vld [vmem:[%s3] sm:$0xff]
    %v306 = vld [vmem:[%s3 + $0x8] sm:$0xff]
    %v307 = vld [vmem:[%s3 + $0x10] sm:$0xff]
    %v308 = vld [vmem:[%s3 + $0x18] sm:$0xff]
    %v309 = vld [vmem:[%s3 + $0x20] sm:$0xff]
    %v310 = vld [vmem:[%s3 + $0x28] sm:$0xff]
    %v311 = vld [vmem:[%s3 + $0x30] sm:$0xff]
    %v312 = vld [vmem:[%s3 + $0x38] sm:$0xff]
    %v313 = vld [vmem:[%s3 + $0x40] sm:$0xff]
    %v314 = vld [vmem:[%s3 + $0x48] sm:$0xff]
    %v315 = vld [vmem:[%s3 + $0x50] sm:$0xff]
    %v316 = vld [vmem:[%s3 + $0x58] sm:$0xff]
    %v317 = vld [vmem:[%s3 + $0x60] sm:$0xff]
    %v318 = vld [vmem:[%s3 + $0x68] sm:$0xff]
    %v319 = vld [vmem:[%s3 + $0x70] sm:$0xff]
    %v320 = vld [vmem:[%s3 + $0x78] sm:$0xff]
    %v321 = vld [vmem:[%s3 + $0x80] sm:$0xff]
    %v322 = vld [vmem:[%s3 + $0x88] sm:$0xff]
    %v323 = vld [vmem:[%s3 + $0x90] sm:$0xff]
    %v324 = vld [vmem:[%s3 + $0x98] sm:$0xff]
    %v325 = vld [vmem:[%s3 + $0xa0] sm:$0xff]
    %v326 = vld [vmem:[%s3 + $0xa8] sm:$0xff]
    %v327 = vld [vmem:[%s3 + $0xb0] sm:$0xff]
    %v328 = vld [vmem:[%s3 + $0xb8] sm:$0xff]
    %v329 = vld [vmem:[%s4] sm:$0x1]
    %v332 = vrot.slane %v303, 7
    %v333 = vrot.slane %v304, 7
    %v336 = vsel %vm129, 0.0, %v332
    %v337 = vsel %vm129, 0.0, %v333
    %v338 = vrot.slane %v303, 1
    %v339 = vrot.slane %v304, 1
    %v342 = vsel %vm142, %v338, 0.0
    %v343 = vsel %vm142, %v339, 0.0
    %344 = vrot.lane.b32.xlu0 %v303, 64
    %v345 = vpop.permute.xlu0 %344
    %346 = vrot.lane.b32.xlu0 %v304, 64
    %v347 = vpop.permute.xlu0 %346
    %vm350 = vcmask 523264
    %v351 = vsel %vm350, %v336, %v345
    %v352 = vsel %vm350, %v337, %v347
    %v354 = vperm.slane %v329, 0
    %v357 = vsel %vm350, %v342, 0
    %v360 = vsel %vm350, %v343, 0
    %362 = vmatpush.msra.mxu0 %v320
    %363 = vmatpush.msra.mxu0 %v319
    %364 = vmatpush.msra.mxu0 %v318
    %365 = vmatpush.msra.mxu0 %v317
    %366 = vmatpush.msra.mxu0 %v316
    %367 = vmatpush.msra.mxu0 %v315
    %368 = vmatpush.msra.mxu0 %v314
    %369 = vmatpush.msra.mxu0 %v313
    %370 = vmatpush.msra.mxu0 %v312
    %371 = vmatpush.msra.mxu0 %v311
    %372 = vmatpush.msra.mxu0 %v310
    %373 = vmatpush.msra.mxu0 %v309
    %374 = vmatpush.msra.mxu0 %v308
    %375 = vmatpush.msra.mxu0 %v307
    %376 = vmatpush.msra.mxu0 %v306
    %377 = vmatpush.msra.mxu0 %v305
    %378 = vmatmul.f32.gmra.mxu0 %v351
    %v379 = vpop.f32.mrf.mxu0
    %v380 = vadd.f32 %v354, %v379
    %381 = vmatmul.f32.gmra.mxu0 %v352
    %v382 = vpop.f32.mrf.mxu0
    %v383 = vadd.f32 %v354, %v382
    %384 = vdwg.mxu0
    %385 = vmatpush.msra.mxu0 0.0
    %386 = vmatpush.msra.mxu0 0.0
    %387 = vmatpush.msra.mxu0 0.0
    %388 = vmatpush.msra.mxu0 0.0
    %389 = vmatpush.msra.mxu0 0.0
    %390 = vmatpush.msra.mxu0 0.0
    %391 = vmatpush.msra.mxu0 0.0
    %392 = vmatpush.msra.mxu0 0.0
    %393 = vmatpush.msra.mxu0 %v328
    %394 = vmatpush.msra.mxu0 %v327
    %395 = vmatpush.msra.mxu0 %v326
    %396 = vmatpush.msra.mxu0 %v325
    %397 = vmatpush.msra.mxu0 %v324
    %398 = vmatpush.msra.mxu0 %v323
    %399 = vmatpush.msra.mxu0 %v322
    %400 = vmatpush.msra.mxu0 %v321
    %401 = vmatmul.f32.gmra.mxu0 %v357
    %v402 = vpop.f32.mrf.mxu0
    %v403 = vadd.f32 %v380, %v402
    %404 = vmatmul.f32.gmra.mxu0 %v360
    %v405 = vpop.f32.mrf.mxu0
    %v406 = vadd.f32 %v383, %v405
    %407 = vdwg.mxu0
    %v408 = vmax.f32 %v403, 0.0
    %v409 = vmax.f32 %v406, 0.0
    %v412 = vrot.slane %v408, 1
    %v413 = vrot.slane %v409, 1
    %v416 = vmax.f32 %v408, %v412
    %v417 = vmax.f32 %v409, %v413
    %v420 = vrot.slane %v416, 1
    %v421 = vrot.slane %v417, 1
    %v424 = vrot.slane %v416, 2
    %v425 = vrot.slane %v417, 2
    %v428 = vrot.slane %v416, 3
    %v429 = vrot.slane %v417, 3
    %v432 = vsel %vm129, %v416, %v420
    %v433 = vsel %vm129, %v417, %v421
    %v434 = vsel %vm288, %v432, %v424
    %v435 = vsel %vm288, %v433, %v425
    %v436 = vsel %vm291, %v434, %v428
    %v437 = vsel %vm291, %v435, %v429
    %v438 = vld [vmem:[#allocation2] sm:$0xff]
    %v439 = vld [vmem:[#allocation2 + $0x8] sm:$0xff]
    %v440 = vld [vmem:[#allocation2 + $0x10] sm:$0xff]
    %v441 = vld [vmem:[#allocation2 + $0x18] sm:$0xff]
    %v442 = vld [vmem:[#allocation2 + $0x20] sm:$0xff]
    %v443 = vld [vmem:[#allocation2 + $0x28] sm:$0xff]
    %v444 = vld [vmem:[#allocation2 + $0x30] sm:$0xff]
    %v445 = vld [vmem:[#allocation2 + $0x38] sm:$0xff]
    %v446 = vld [vmem:[#allocation2 + $0x40] sm:$0xff]
    %v447 = vld [vmem:[#allocation2 + $0x48] sm:$0xff]
    %v448 = vld [vmem:[#allocation2 + $0x50] sm:$0xff]
    %v449 = vld [vmem:[#allocation2 + $0x58] sm:$0xff]
    %v450 = vld [vmem:[#allocation2 + $0x60] sm:$0xff]
    %v451 = vld [vmem:[#allocation2 + $0x68] sm:$0xff]
    %v452 = vld [vmem:[#allocation2 + $0x70] sm:$0xff]
    %v453 = vld [vmem:[#allocation2 + $0x78] sm:$0xff]
    %v454 = vld [vmem:[#allocation2 + $0x80] sm:$0xff]
    %v455 = vld [vmem:[#allocation2 + $0x88] sm:$0xff]
    %v456 = vld [vmem:[#allocation2 + $0x90] sm:$0xff]
    %v457 = vld [vmem:[#allocation2 + $0x98] sm:$0xff]
    %v458 = vld [vmem:[#allocation2 + $0xa0] sm:$0xff]
    %v459 = vld [vmem:[#allocation2 + $0xa8] sm:$0xff]
    %v460 = vld [vmem:[#allocation2 + $0xb0] sm:$0xff]
    %v461 = vld [vmem:[#allocation2 + $0xb8] sm:$0xff]
    %v462 = vld [vmem:[#allocation2 + $0xc0] sm:$0xff]
    %v463 = vld [vmem:[#allocation2 + $0xc8] sm:$0xff]
    %v464 = vld [vmem:[#allocation2 + $0xd0] sm:$0xff]
    %v465 = vld [vmem:[#allocation2 + $0xd8] sm:$0xff]
    %v466 = vld [vmem:[#allocation2 + $0xe0] sm:$0xff]
    %v467 = vld [vmem:[#allocation2 + $0xe8] sm:$0xff]
    %v468 = vld [vmem:[#allocation2 + $0xf0] sm:$0xff]
    %v469 = vld [vmem:[#allocation2 + $0xf8] sm:$0xff]
    %v470 = vld [vmem:[#allocation2 + $0x100] sm:$0xff]
    %v471 = vld [vmem:[#allocation2 + $0x108] sm:$0xff]
    %v472 = vld [vmem:[#allocation2 + $0x110] sm:$0xff]
    %v473 = vld [vmem:[#allocation2 + $0x118] sm:$0xff]
    %v474 = vld [vmem:[#allocation2 + $0x120] sm:$0xff]
    %v475 = vld [vmem:[#allocation2 + $0x128] sm:$0xff]
    %v476 = vld [vmem:[#allocation2 + $0x130] sm:$0xff]
    %v477 = vld [vmem:[#allocation2 + $0x138] sm:$0xff]
    %v478 = vld [vmem:[#allocation2 + $0x140] sm:$0xff]
    %v479 = vld [vmem:[#allocation2 + $0x148] sm:$0xff]
    %v480 = vld [vmem:[#allocation2 + $0x150] sm:$0xff]
    %v481 = vld [vmem:[#allocation2 + $0x158] sm:$0xff]
    %v482 = vld [vmem:[#allocation2 + $0x160] sm:$0xff]
    %v483 = vld [vmem:[#allocation2 + $0x168] sm:$0xff]
    %v484 = vld [vmem:[#allocation2 + $0x170] sm:$0xff]
    %v485 = vld [vmem:[#allocation2 + $0x178] sm:$0xff]
    %v486 = vld [vmem:[#allocation2 + $0x180] sm:$0xff]
    %v487 = vld [vmem:[#allocation2 + $0x188] sm:$0xff]
    %v488 = vld [vmem:[#allocation2 + $0x190] sm:$0xff]
    %v489 = vld [vmem:[#allocation2 + $0x198] sm:$0xff]
    %v490 = vld [vmem:[#allocation2 + $0x1a0] sm:$0xff]
    %v491 = vld [vmem:[#allocation2 + $0x1a8] sm:$0xff]
    %v492 = vld [vmem:[#allocation2 + $0x1b0] sm:$0xff]
    %v493 = vld [vmem:[#allocation2 + $0x1b8] sm:$0xff]
    %v494 = vld [vmem:[#allocation2 + $0x1c0] sm:$0xff]
    %v495 = vld [vmem:[#allocation2 + $0x1c8] sm:$0xff]
    %v496 = vld [vmem:[#allocation2 + $0x1d0] sm:$0xff]
    %v497 = vld [vmem:[#allocation2 + $0x1d8] sm:$0xff]
    %v498 = vld [vmem:[#allocation2 + $0x1e0] sm:$0xff]
    %v499 = vld [vmem:[#allocation2 + $0x1e8] sm:$0xff]
    %v500 = vld [vmem:[#allocation2 + $0x1f0] sm:$0xff]
    %v501 = vld [vmem:[#allocation2 + $0x1f8] sm:$0xff]
    %v502 = vld [vmem:[#allocation2 + $0x200] sm:$0xff]
    %v503 = vld [vmem:[#allocation2 + $0x208] sm:$0xff]
    %v504 = vld [vmem:[#allocation2 + $0x210] sm:$0xff]
    %v505 = vld [vmem:[#allocation2 + $0x218] sm:$0xff]
    %v506 = vld [vmem:[#allocation2 + $0x220] sm:$0xff]
    %v507 = vld [vmem:[#allocation2 + $0x228] sm:$0xff]
    %v508 = vld [vmem:[#allocation2 + $0x230] sm:$0xff]
    %v509 = vld [vmem:[#allocation2 + $0x238] sm:$0xff]
    %v510 = vld [vmem:[#allocation2 + $0x240] sm:$0xff]
    %v511 = vld [vmem:[#allocation2 + $0x248] sm:$0xff]
    %v512 = vld [vmem:[#allocation2 + $0x250] sm:$0xff]
    %v513 = vld [vmem:[#allocation2 + $0x258] sm:$0xff]
    %v514 = vld [vmem:[#allocation2 + $0x260] sm:$0xff]
    %v515 = vld [vmem:[#allocation2 + $0x268] sm:$0xff]
    %v516 = vld [vmem:[#allocation2 + $0x270] sm:$0xff]
    %v517 = vld [vmem:[#allocation2 + $0x278] sm:$0xff]
    %v518 = vld [vmem:[#allocation2 + $0x280] sm:$0xff]
    %v519 = vld [vmem:[#allocation2 + $0x288] sm:$0xff]
    %v520 = vld [vmem:[#allocation2 + $0x290] sm:$0xff]
    %v521 = vld [vmem:[#allocation2 + $0x298] sm:$0xff]
    %v522 = vld [vmem:[#allocation2 + $0x2a0] sm:$0xff]
    %v523 = vld [vmem:[#allocation2 + $0x2a8] sm:$0xff]
    %v524 = vld [vmem:[#allocation2 + $0x2b0] sm:$0xff]
    %v525 = vld [vmem:[#allocation2 + $0x2b8] sm:$0xff]
    %v526 = vld [vmem:[#allocation2 + $0x2c0] sm:$0xff]
    %v527 = vld [vmem:[#allocation2 + $0x2c8] sm:$0xff]
    %v528 = vld [vmem:[#allocation2 + $0x2d0] sm:$0xff]
    %v529 = vld [vmem:[#allocation2 + $0x2d8] sm:$0xff]
    %v530 = vld [vmem:[#allocation2 + $0x2e0] sm:$0xff]
    %v531 = vld [vmem:[#allocation2 + $0x2e8] sm:$0xff]
    %v532 = vld [vmem:[#allocation2 + $0x2f0] sm:$0xff]
    %v533 = vld [vmem:[#allocation2 + $0x2f8] sm:$0xff]
    %v534 = vld [vmem:[%s6] sm:$0x3]
    %v537 = vrot.slane %v436, 7
    %v538 = vrot.slane %v437, 7
    %v541 = vsel %vm129, 0.0, %v537
    %v542 = vsel %vm129, 0.0, %v538
    %v543 = vrot.slane %v436, 1
    %v544 = vrot.slane %v437, 1
    %v547 = vsel %vm291, %v543, 0.0
    %v548 = vsel %vm291, %v544, 0.0
    %v550 = vperm.slane %v534, 0
    %v551 = vperm.slane %v534, 1
    %v556 = vrot.slane %v436, 4
    %v557 = vrot.slane %v437, 4
    %v558 = vsel %vm294, %v541, %v556
    %v559 = vsel %vm294, %v542, %v557
    %v560 = vrot.slane %v551, 4
    %v561 = vsel %vm294, %v550, %v560
    %562 = vst [vmem:[#allocation1] ss:$2 sm:$0xff] %v558
    %s563 = scalar_lea.vmem [#allocation1], 1
    %564 = vst [vmem:[%s563] ss:$2 sm:$0xff] %v559
    %s565 = scalar_lea.vmem [#allocation1], 16
    %566 = vst [vmem:[%s565] ss:$2 sm:$0xff] %v547
    %s567 = scalar_lea.vmem [#allocation1], 17
    %568 = vst [vmem:[%s567] ss:$2 sm:$0xff] %v548
    %v569 = vld.sshfl [vmem:[#allocation1] sm:$0xff pattern:$0x75316420]
    %v570 = vld.sshfl [vmem:[#allocation1 + $0x8] sm:$0xff pattern:$0x75316420]
    %v571 = vld.sshfl [vmem:[#allocation1 + $0x10] sm:$0xff pattern:$0x75316420]
    %575 = vst [vmem:[#allocation1] ss:$2 sm:$0xff] %v561
    %s576 = scalar_lea.vmem [#allocation1], 1
    %577 = vst [vmem:[%s576] ss:$2 sm:$0xff] %v561
    %v578 = vld.sshfl [vmem:[#allocation1] sm:$0xff pattern:$0x75316420]
    %v579 = vld.sshfl [vmem:[#allocation1 + $0x8] sm:$0xff pattern:$0x75316420]
    %582 = vmatpush.msra.mxu0 %v468
    %583 = vmatpush.msra.mxu0 %v466
    %584 = vmatpush.msra.mxu0 %v464
    %585 = vmatpush.msra.mxu0 %v462
    %586 = vmatpush.msra.mxu0 %v460
    %587 = vmatpush.msra.mxu0 %v458
    %588 = vmatpush.msra.mxu0 %v456
    %589 = vmatpush.msra.mxu0 %v454
    %590 = vmatpush.msra.mxu0 %v452
    %591 = vmatpush.msra.mxu0 %v450
    %592 = vmatpush.msra.mxu0 %v448
    %593 = vmatpush.msra.mxu0 %v446
    %594 = vmatpush.msra.mxu0 %v444
    %595 = vmatpush.msra.mxu0 %v442
    %596 = vmatpush.msra.mxu0 %v440
    %597 = vmatpush.msra.mxu0 %v438
    %598 = vmatmul.f32.gmra.mxu0 %v569
    %v599 = vpop.f32.mrf.mxu0
    %v600 = vadd.f32 %v578, %v599
    %601 = vdwg.mxu0
    %602 = vmatpush.msra.mxu0 %v500
    %603 = vmatpush.msra.mxu0 %v498
    %604 = vmatpush.msra.mxu0 %v496
    %605 = vmatpush.msra.mxu0 %v494
    %606 = vmatpush.msra.mxu0 %v492
    %607 = vmatpush.msra.mxu0 %v490
    %608 = vmatpush.msra.mxu0 %v488
    %609 = vmatpush.msra.mxu0 %v486
    %610 = vmatpush.msra.mxu0 %v484
    %611 = vmatpush.msra.mxu0 %v482
    %612 = vmatpush.msra.mxu0 %v480
    %613 = vmatpush.msra.mxu0 %v478
    %614 = vmatpush.msra.mxu0 %v476
    %615 = vmatpush.msra.mxu0 %v474
    %616 = vmatpush.msra.mxu0 %v472
    %617 = vmatpush.msra.mxu0 %v470
    %618 = vmatmul.f32.gmra.mxu0 %v570
    %v619 = vpop.f32.mrf.mxu0
    %v620 = vadd.f32 %v600, %v619
    %621 = vdwg.mxu0
    %622 = vmatpush.msra.mxu0 %v532
    %623 = vmatpush.msra.mxu0 %v530
    %624 = vmatpush.msra.mxu0 %v528
    %625 = vmatpush.msra.mxu0 %v526
    %626 = vmatpush.msra.mxu0 %v524
    %627 = vmatpush.msra.mxu0 %v522
    %628 = vmatpush.msra.mxu0 %v520
    %629 = vmatpush.msra.mxu0 %v518
    %630 = vmatpush.msra.mxu0 %v516
    %631 = vmatpush.msra.mxu0 %v514
    %632 = vmatpush.msra.mxu0 %v512
    %633 = vmatpush.msra.mxu0 %v510
    %634 = vmatpush.msra.mxu0 %v508
    %635 = vmatpush.msra.mxu0 %v506
    %636 = vmatpush.msra.mxu0 %v504
    %637 = vmatpush.msra.mxu0 %v502
    %638 = vmatmul.f32.gmra.mxu0 %v571
    %v639 = vpop.f32.mrf.mxu0
    %v640 = vadd.f32 %v620, %v639
    %641 = vdwg.mxu0
    %642 = vmatpush.msra.mxu0 %v469
    %643 = vmatpush.msra.mxu0 %v467
    %644 = vmatpush.msra.mxu0 %v465
    %645 = vmatpush.msra.mxu0 %v463
    %646 = vmatpush.msra.mxu0 %v461
    %647 = vmatpush.msra.mxu0 %v459
    %648 = vmatpush.msra.mxu0 %v457
    %649 = vmatpush.msra.mxu0 %v455
    %650 = vmatpush.msra.mxu0 %v453
    %651 = vmatpush.msra.mxu0 %v451
    %652 = vmatpush.msra.mxu0 %v449
    %653 = vmatpush.msra.mxu0 %v447
    %654 = vmatpush.msra.mxu0 %v445
    %655 = vmatpush.msra.mxu0 %v443
    %656 = vmatpush.msra.mxu0 %v441
    %657 = vmatpush.msra.mxu0 %v439
    %658 = vmatmul.f32.gmra.mxu0 %v569
    %v659 = vpop.f32.mrf.mxu0
    %v660 = vadd.f32 %v579, %v659
    %661 = vdwg.mxu0
    %662 = vmatpush.msra.mxu0 %v501
    %663 = vmatpush.msra.mxu0 %v499
    %664 = vmatpush.msra.mxu0 %v497
    %665 = vmatpush.msra.mxu0 %v495
    %666 = vmatpush.msra.mxu0 %v493
    %667 = vmatpush.msra.mxu0 %v491
    %668 = vmatpush.msra.mxu0 %v489
    %669 = vmatpush.msra.mxu0 %v487
    %670 = vmatpush.msra.mxu0 %v485
    %671 = vmatpush.msra.mxu0 %v483
    %672 = vmatpush.msra.mxu0 %v481
    %673 = vmatpush.msra.mxu0 %v479
    %674 = vmatpush.msra.mxu0 %v477
    %675 = vmatpush.msra.mxu0 %v475
    %676 = vmatpush.msra.mxu0 %v473
    %677 = vmatpush.msra.mxu0 %v471
    %678 = vmatmul.f32.gmra.mxu0 %v570
    %v679 = vpop.f32.mrf.mxu0
    %v680 = vadd.f32 %v660, %v679
    %681 = vdwg.mxu0
    %682 = vmatpush.msra.mxu0 %v533
    %683 = vmatpush.msra.mxu0 %v531
    %684 = vmatpush.msra.mxu0 %v529
    %685 = vmatpush.msra.mxu0 %v527
    %686 = vmatpush.msra.mxu0 %v525
    %687 = vmatpush.msra.mxu0 %v523
    %688 = vmatpush.msra.mxu0 %v521
    %689 = vmatpush.msra.mxu0 %v519
    %690 = vmatpush.msra.mxu0 %v517
    %691 = vmatpush.msra.mxu0 %v515
    %692 = vmatpush.msra.mxu0 %v513
    %693 = vmatpush.msra.mxu0 %v511
    %694 = vmatpush.msra.mxu0 %v509
    %695 = vmatpush.msra.mxu0 %v507
    %696 = vmatpush.msra.mxu0 %v505
    %697 = vmatpush.msra.mxu0 %v503
    %698 = vmatmul.f32.gmra.mxu0 %v571
    %v699 = vpop.f32.mrf.mxu0
    %v700 = vadd.f32 %v680, %v699
    %701 = vdwg.mxu0
    %v704 = vrot.slane %v700, 4
    %v705 = vsel %vm294, %v640, %v704
    %v706 = vsel %vm294, %v704, %v640
    %v707 = vrot.slane %v706, 4
    %v710 = vmax.f32 %v705, 0.0
    %v711 = vmax.f32 %v707, 0.0
    %v712 = vld [vmem:[#allocation5] sm:$0xff]
    %v713 = vld [vmem:[#allocation5 + $0x8] sm:$0xff]
    %v714 = vld [vmem:[#allocation5 + $0x10] sm:$0xff]
    %v715 = vld [vmem:[#allocation5 + $0x18] sm:$0xff]
    %v716 = vld [vmem:[#allocation5 + $0x20] sm:$0xff]
    %v717 = vld [vmem:[#allocation5 + $0x28] sm:$0xff]
    %v718 = vld [vmem:[#allocation5 + $0x30] sm:$0xff]
    %v719 = vld [vmem:[#allocation5 + $0x38] sm:$0xff]
    %v720 = vld [vmem:[#allocation5 + $0x40] sm:$0xff]
    %v721 = vld [vmem:[#allocation5 + $0x48] sm:$0xff]
    %v722 = vld [vmem:[#allocation5 + $0x50] sm:$0xff]
    %v723 = vld [vmem:[#allocation5 + $0x58] sm:$0xff]
    %v724 = vld [vmem:[#allocation5 + $0x60] sm:$0xff]
    %v725 = vld [vmem:[#allocation5 + $0x68] sm:$0xff]
    %v726 = vld [vmem:[#allocation5 + $0x70] sm:$0xff]
    %v727 = vld [vmem:[#allocation5 + $0x78] sm:$0xff]
    %v728 = vld [vmem:[#allocation5 + $0x80] sm:$0xff]
    %v729 = vld [vmem:[#allocation5 + $0x88] sm:$0xff]
    %v730 = vld [vmem:[#allocation5 + $0x90] sm:$0xff]
    %v731 = vld [vmem:[#allocation5 + $0x98] sm:$0xff]
    %v732 = vld [vmem:[#allocation5 + $0xa0] sm:$0xff]
    %v733 = vld [vmem:[#allocation5 + $0xa8] sm:$0xff]
    %v734 = vld [vmem:[#allocation5 + $0xb0] sm:$0xff]
    %v735 = vld [vmem:[#allocation5 + $0xb8] sm:$0xff]
    %v736 = vld [vmem:[#allocation5 + $0xc0] sm:$0xff]
    %v737 = vld [vmem:[#allocation5 + $0xc8] sm:$0xff]
    %v738 = vld [vmem:[#allocation5 + $0xd0] sm:$0xff]
    %v739 = vld [vmem:[#allocation5 + $0xd8] sm:$0xff]
    %v740 = vld [vmem:[#allocation5 + $0xe0] sm:$0xff]
    %v741 = vld [vmem:[#allocation5 + $0xe8] sm:$0xff]
    %v742 = vld [vmem:[#allocation5 + $0xf0] sm:$0xff]
    %v743 = vld [vmem:[#allocation5 + $0xf8] sm:$0xff]
    %v744 = vld [vmem:[#allocation5 + $0x100] sm:$0xff]
    %v745 = vld [vmem:[#allocation5 + $0x108] sm:$0xff]
    %v746 = vld [vmem:[#allocation5 + $0x110] sm:$0xff]
    %v747 = vld [vmem:[#allocation5 + $0x118] sm:$0xff]
    %v748 = vld [vmem:[#allocation5 + $0x120] sm:$0xff]
    %v749 = vld [vmem:[#allocation5 + $0x128] sm:$0xff]
    %v750 = vld [vmem:[#allocation5 + $0x130] sm:$0xff]
    %v751 = vld [vmem:[#allocation5 + $0x138] sm:$0xff]
    %v752 = vld [vmem:[#allocation5 + $0x140] sm:$0xff]
    %v753 = vld [vmem:[#allocation5 + $0x148] sm:$0xff]
    %v754 = vld [vmem:[#allocation5 + $0x150] sm:$0xff]
    %v755 = vld [vmem:[#allocation5 + $0x158] sm:$0xff]
    %v756 = vld [vmem:[#allocation5 + $0x160] sm:$0xff]
    %v757 = vld [vmem:[#allocation5 + $0x168] sm:$0xff]
    %v758 = vld [vmem:[#allocation5 + $0x170] sm:$0xff]
    %v759 = vld [vmem:[#allocation5 + $0x178] sm:$0xff]
    %v760 = vld [vmem:[#allocation5 + $0x180] sm:$0xff]
    %v761 = vld [vmem:[#allocation5 + $0x188] sm:$0xff]
    %v762 = vld [vmem:[#allocation5 + $0x190] sm:$0xff]
    %v763 = vld [vmem:[#allocation5 + $0x198] sm:$0xff]
    %v764 = vld [vmem:[#allocation5 + $0x1a0] sm:$0xff]
    %v765 = vld [vmem:[#allocation5 + $0x1a8] sm:$0xff]
    %v766 = vld [vmem:[#allocation5 + $0x1b0] sm:$0xff]
    %v767 = vld [vmem:[#allocation5 + $0x1b8] sm:$0xff]
    %v768 = vld [vmem:[#allocation5 + $0x1c0] sm:$0xff]
    %v769 = vld [vmem:[#allocation5 + $0x1c8] sm:$0xff]
    %v770 = vld [vmem:[#allocation5 + $0x1d0] sm:$0xff]
    %v771 = vld [vmem:[#allocation5 + $0x1d8] sm:$0xff]
    %v772 = vld [vmem:[#allocation5 + $0x1e0] sm:$0xff]
    %v773 = vld [vmem:[#allocation5 + $0x1e8] sm:$0xff]
    %v774 = vld [vmem:[#allocation5 + $0x1f0] sm:$0xff]
    %v775 = vld [vmem:[#allocation5 + $0x1f8] sm:$0xff]
    %v776 = vld [vmem:[#allocation5 + $0x200] sm:$0xff]
    %v777 = vld [vmem:[#allocation5 + $0x208] sm:$0xff]
    %v778 = vld [vmem:[#allocation5 + $0x210] sm:$0xff]
    %v779 = vld [vmem:[#allocation5 + $0x218] sm:$0xff]
    %v780 = vld [vmem:[#allocation5 + $0x220] sm:$0xff]
    %v781 = vld [vmem:[#allocation5 + $0x228] sm:$0xff]
    %v782 = vld [vmem:[#allocation5 + $0x230] sm:$0xff]
    %v783 = vld [vmem:[#allocation5 + $0x238] sm:$0xff]
    %v784 = vld [vmem:[#allocation5 + $0x240] sm:$0xff]
    %v785 = vld [vmem:[#allocation5 + $0x248] sm:$0xff]
    %v786 = vld [vmem:[#allocation5 + $0x250] sm:$0xff]
    %v787 = vld [vmem:[#allocation5 + $0x258] sm:$0xff]
    %v788 = vld [vmem:[#allocation5 + $0x260] sm:$0xff]
    %v789 = vld [vmem:[#allocation5 + $0x268] sm:$0xff]
    %v790 = vld [vmem:[#allocation5 + $0x270] sm:$0xff]
    %v791 = vld [vmem:[#allocation5 + $0x278] sm:$0xff]
    %v792 = vld [vmem:[#allocation5 + $0x280] sm:$0xff]
    %v793 = vld [vmem:[#allocation5 + $0x288] sm:$0xff]
    %v794 = vld [vmem:[#allocation5 + $0x290] sm:$0xff]
    %v795 = vld [vmem:[#allocation5 + $0x298] sm:$0xff]
    %v796 = vld [vmem:[#allocation5 + $0x2a0] sm:$0xff]
    %v797 = vld [vmem:[#allocation5 + $0x2a8] sm:$0xff]
    %v798 = vld [vmem:[#allocation5 + $0x2b0] sm:$0xff]
    %v799 = vld [vmem:[#allocation5 + $0x2b8] sm:$0xff]
    %v800 = vld [vmem:[#allocation5 + $0x2c0] sm:$0xff]
    %v801 = vld [vmem:[#allocation5 + $0x2c8] sm:$0xff]
    %v802 = vld [vmem:[#allocation5 + $0x2d0] sm:$0xff]
    %v803 = vld [vmem:[#allocation5 + $0x2d8] sm:$0xff]
    %v804 = vld [vmem:[#allocation5 + $0x2e0] sm:$0xff]
    %v805 = vld [vmem:[#allocation5 + $0x2e8] sm:$0xff]
    %v806 = vld [vmem:[#allocation5 + $0x2f0] sm:$0xff]
    %v807 = vld [vmem:[#allocation5 + $0x2f8] sm:$0xff]
    %v808 = vld [vmem:[#allocation5 + $0x300] sm:$0xff]
    %v809 = vld [vmem:[#allocation5 + $0x308] sm:$0xff]
    %v810 = vld [vmem:[#allocation5 + $0x310] sm:$0xff]
    %v811 = vld [vmem:[#allocation5 + $0x318] sm:$0xff]
    %v812 = vld [vmem:[#allocation5 + $0x320] sm:$0xff]
    %v813 = vld [vmem:[#allocation5 + $0x328] sm:$0xff]
    %v814 = vld [vmem:[#allocation5 + $0x330] sm:$0xff]
    %v815 = vld [vmem:[#allocation5 + $0x338] sm:$0xff]
    %v816 = vld [vmem:[#allocation5 + $0x340] sm:$0xff]
    %v817 = vld [vmem:[#allocation5 + $0x348] sm:$0xff]
    %v818 = vld [vmem:[#allocation5 + $0x350] sm:$0xff]
    %v819 = vld [vmem:[#allocation5 + $0x358] sm:$0xff]
    %v820 = vld [vmem:[#allocation5 + $0x360] sm:$0xff]
    %v821 = vld [vmem:[#allocation5 + $0x368] sm:$0xff]
    %v822 = vld [vmem:[#allocation5 + $0x370] sm:$0xff]
    %v823 = vld [vmem:[#allocation5 + $0x378] sm:$0xff]
    %v824 = vld [vmem:[#allocation5 + $0x380] sm:$0xff]
    %v825 = vld [vmem:[#allocation5 + $0x388] sm:$0xff]
    %v826 = vld [vmem:[#allocation5 + $0x390] sm:$0xff]
    %v827 = vld [vmem:[#allocation5 + $0x398] sm:$0xff]
    %v828 = vld [vmem:[#allocation5 + $0x3a0] sm:$0xff]
    %v829 = vld [vmem:[#allocation5 + $0x3a8] sm:$0xff]
    %v830 = vld [vmem:[#allocation5 + $0x3b0] sm:$0xff]
    %v831 = vld [vmem:[#allocation5 + $0x3b8] sm:$0xff]
    %v832 = vld [vmem:[#allocation5 + $0x3c0] sm:$0xff]
    %v833 = vld [vmem:[#allocation5 + $0x3c8] sm:$0xff]
    %v834 = vld [vmem:[#allocation5 + $0x3d0] sm:$0xff]
    %v835 = vld [vmem:[#allocation5 + $0x3d8] sm:$0xff]
    %v836 = vld [vmem:[#allocation5 + $0x3e0] sm:$0xff]
    %v837 = vld [vmem:[#allocation5 + $0x3e8] sm:$0xff]
    %v838 = vld [vmem:[#allocation5 + $0x3f0] sm:$0xff]
    %v839 = vld [vmem:[#allocation5 + $0x3f8] sm:$0xff]
    %v840 = vld [vmem:[%s10] sm:$0xf]
    %v842 = vperm.slane %v840, 0
    %v843 = vperm.slane %v840, 1
    %v844 = vperm.slane %v840, 2
    %v845 = vperm.slane %v840, 3
    %v846 = vrot.slane %v843, 4
    %v847 = vrot.slane %v845, 4
    %v848 = vsel %vm294, %v842, %v846
    %v849 = vsel %vm294, %v844, %v847
    %852 = vst [vmem:[#allocation1] ss:$2 sm:$0xff] %v710
    %s853 = scalar_lea.vmem [#allocation1], 1
    %854 = vst [vmem:[%s853] ss:$2 sm:$0xff] %v711
    %v855 = vld.sshfl [vmem:[#allocation1] sm:$0xff pattern:$0x75316420]
    %v856 = vld.sshfl [vmem:[#allocation1 + $0x8] sm:$0xff pattern:$0x75316420]
    %859 = vst [vmem:[#allocation1] ss:$2 sm:$0xff] %v848
    %s860 = scalar_lea.vmem [#allocation1], 1
    %861 = vst [vmem:[%s860] ss:$2 sm:$0xff] %v848
    %s862 = scalar_lea.vmem [#allocation1], 16
    %863 = vst [vmem:[%s862] ss:$2 sm:$0xff] %v849
    %s864 = scalar_lea.vmem [#allocation1], 17
    %865 = vst [vmem:[%s864] ss:$2 sm:$0xff] %v849
    %v866 = vld.sshfl [vmem:[#allocation1] sm:$0xff pattern:$0x75316420]
    %v867 = vld.sshfl [vmem:[#allocation1 + $0x8] sm:$0xff pattern:$0x75316420]
    %v868 = vld.sshfl [vmem:[#allocation1 + $0x10] sm:$0xff pattern:$0x75316420]
    %v869 = vld.sshfl [vmem:[#allocation1 + $0x18] sm:$0xff pattern:$0x75316420]
    %874 = vmatpush.msra.mxu0 %v772
    %875 = vmatpush.msra.mxu0 %v768
    %876 = vmatpush.msra.mxu0 %v764
    %877 = vmatpush.msra.mxu0 %v760
    %878 = vmatpush.msra.mxu0 %v756
    %879 = vmatpush.msra.mxu0 %v752
    %880 = vmatpush.msra.mxu0 %v748
    %881 = vmatpush.msra.mxu0 %v744
    %882 = vmatpush.msra.mxu0 %v740
    %883 = vmatpush.msra.mxu0 %v736
    %884 = vmatpush.msra.mxu0 %v732
    %885 = vmatpush.msra.mxu0 %v728
    %886 = vmatpush.msra.mxu0 %v724
    %887 = vmatpush.msra.mxu0 %v720
    %888 = vmatpush.msra.mxu0 %v716
    %889 = vmatpush.msra.mxu0 %v712
    %890 = vmatmul.f32.gmra.mxu0 %v855
    %v891 = vpop.f32.mrf.mxu0
    %v892 = vadd.f32 %v866, %v891
    %893 = vdwg.mxu0
    %894 = vmatpush.msra.mxu0 %v836
    %895 = vmatpush.msra.mxu0 %v832
    %896 = vmatpush.msra.mxu0 %v828
    %897 = vmatpush.msra.mxu0 %v824
    %898 = vmatpush.msra.mxu0 %v820
    %899 = vmatpush.msra.mxu0 %v816
    %900 = vmatpush.msra.mxu0 %v812
    %901 = vmatpush.msra.mxu0 %v808
    %902 = vmatpush.msra.mxu0 %v804
    %903 = vmatpush.msra.mxu0 %v800
    %904 = vmatpush.msra.mxu0 %v796
    %905 = vmatpush.msra.mxu0 %v792
    %906 = vmatpush.msra.mxu0 %v788
    %907 = vmatpush.msra.mxu0 %v784
    %908 = vmatpush.msra.mxu0 %v780
    %909 = vmatpush.msra.mxu0 %v776
    %910 = vmatmul.f32.gmra.mxu0 %v856
    %v911 = vpop.f32.mrf.mxu0
    %v912 = vadd.f32 %v892, %v911
    %913 = vdwg.mxu0
    %914 = vmatpush.msra.mxu0 %v773
    %915 = vmatpush.msra.mxu0 %v769
    %916 = vmatpush.msra.mxu0 %v765
    %917 = vmatpush.msra.mxu0 %v761
    %918 = vmatpush.msra.mxu0 %v757
    %919 = vmatpush.msra.mxu0 %v753
    %920 = vmatpush.msra.mxu0 %v749
    %921 = vmatpush.msra.mxu0 %v745
    %922 = vmatpush.msra.mxu0 %v741
    %923 = vmatpush.msra.mxu0 %v737
    %924 = vmatpush.msra.mxu0 %v733
    %925 = vmatpush.msra.mxu0 %v729
    %926 = vmatpush.msra.mxu0 %v725
    %927 = vmatpush.msra.mxu0 %v721
    %928 = vmatpush.msra.mxu0 %v717
    %929 = vmatpush.msra.mxu0 %v713
    %930 = vmatmul.f32.gmra.mxu0 %v855
    %v931 = vpop.f32.mrf.mxu0
    %v932 = vadd.f32 %v867, %v931
    %933 = vdwg.mxu0
    %934 = vmatpush.msra.mxu0 %v837
    %935 = vmatpush.msra.mxu0 %v833
    %936 = vmatpush.msra.mxu0 %v829
    %937 = vmatpush.msra.mxu0 %v825
    %938 = vmatpush.msra.mxu0 %v821
    %939 = vmatpush.msra.mxu0 %v817
    %940 = vmatpush.msra.mxu0 %v813
    %941 = vmatpush.msra.mxu0 %v809
    %942 = vmatpush.msra.mxu0 %v805
    %943 = vmatpush.msra.mxu0 %v801
    %944 = vmatpush.msra.mxu0 %v797
    %945 = vmatpush.msra.mxu0 %v793
    %946 = vmatpush.msra.mxu0 %v789
    %947 = vmatpush.msra.mxu0 %v785
    %948 = vmatpush.msra.mxu0 %v781
    %949 = vmatpush.msra.mxu0 %v777
    %950 = vmatmul.f32.gmra.mxu0 %v856
    %v951 = vpop.f32.mrf.mxu0
    %v952 = vadd.f32 %v932, %v951
    %953 = vdwg.mxu0
    %954 = vmatpush.msra.mxu0 %v774
    %955 = vmatpush.msra.mxu0 %v770
    %956 = vmatpush.msra.mxu0 %v766
    %957 = vmatpush.msra.mxu0 %v762
    %958 = vmatpush.msra.mxu0 %v758
    %959 = vmatpush.msra.mxu0 %v754
    %960 = vmatpush.msra.mxu0 %v750
    %961 = vmatpush.msra.mxu0 %v746
    %962 = vmatpush.msra.mxu0 %v742
    %963 = vmatpush.msra.mxu0 %v738
    %964 = vmatpush.msra.mxu0 %v734
    %965 = vmatpush.msra.mxu0 %v730
    %966 = vmatpush.msra.mxu0 %v726
    %967 = vmatpush.msra.mxu0 %v722
    %968 = vmatpush.msra.mxu0 %v718
    %969 = vmatpush.msra.mxu0 %v714
    %970 = vmatmul.f32.gmra.mxu0 %v855
    %v971 = vpop.f32.mrf.mxu0
    %v972 = vadd.f32 %v868, %v971
    %973 = vdwg.mxu0
    %974 = vmatpush.msra.mxu0 %v838
    %975 = vmatpush.msra.mxu0 %v834
    %976 = vmatpush.msra.mxu0 %v830
    %977 = vmatpush.msra.mxu0 %v826
    %978 = vmatpush.msra.mxu0 %v822
    %979 = vmatpush.msra.mxu0 %v818
    %980 = vmatpush.msra.mxu0 %v814
    %981 = vmatpush.msra.mxu0 %v810
    %982 = vmatpush.msra.mxu0 %v806
    %983 = vmatpush.msra.mxu0 %v802
    %984 = vmatpush.msra.mxu0 %v798
    %985 = vmatpush.msra.mxu0 %v794
    %986 = vmatpush.msra.mxu0 %v790
    %987 = vmatpush.msra.mxu0 %v786
    %988 = vmatpush.msra.mxu0 %v782
    %989 = vmatpush.msra.mxu0 %v778
    %990 = vmatmul.f32.gmra.mxu0 %v856
    %v991 = vpop.f32.mrf.mxu0
    %v992 = vadd.f32 %v972, %v991
    %993 = vdwg.mxu0
    %994 = vmatpush.msra.mxu0 %v775
    %995 = vmatpush.msra.mxu0 %v771
    %996 = vmatpush.msra.mxu0 %v767
    %997 = vmatpush.msra.mxu0 %v763
    %998 = vmatpush.msra.mxu0 %v759
    %999 = vmatpush.msra.mxu0 %v755
    %1000 = vmatpush.msra.mxu0 %v751
    %1001 = vmatpush.msra.mxu0 %v747
    %1002 = vmatpush.msra.mxu0 %v743
    %1003 = vmatpush.msra.mxu0 %v739
    %1004 = vmatpush.msra.mxu0 %v735
    %1005 = vmatpush.msra.mxu0 %v731
    %1006 = vmatpush.msra.mxu0 %v727
    %1007 = vmatpush.msra.mxu0 %v723
    %1008 = vmatpush.msra.mxu0 %v719
    %1009 = vmatpush.msra.mxu0 %v715
    %1010 = vmatmul.f32.gmra.mxu0 %v855
    %v1011 = vpop.f32.mrf.mxu0
    %v1012 = vadd.f32 %v869, %v1011
    %1013 = vdwg.mxu0
    %1014 = vmatpush.msra.mxu0 %v839
    %1015 = vmatpush.msra.mxu0 %v835
    %1016 = vmatpush.msra.mxu0 %v831
    %1017 = vmatpush.msra.mxu0 %v827
    %1018 = vmatpush.msra.mxu0 %v823
    %1019 = vmatpush.msra.mxu0 %v819
    %1020 = vmatpush.msra.mxu0 %v815
    %1021 = vmatpush.msra.mxu0 %v811
    %1022 = vmatpush.msra.mxu0 %v807
    %1023 = vmatpush.msra.mxu0 %v803
    %1024 = vmatpush.msra.mxu0 %v799
    %1025 = vmatpush.msra.mxu0 %v795
    %1026 = vmatpush.msra.mxu0 %v791
    %1027 = vmatpush.msra.mxu0 %v787
    %1028 = vmatpush.msra.mxu0 %v783
    %1029 = vmatpush.msra.mxu0 %v779
    %1030 = vmatmul.f32.gmra.mxu0 %v856
    %v1031 = vpop.f32.mrf.mxu0
    %v1032 = vadd.f32 %v1012, %v1031
    %1033 = vdwg.mxu0
    %v1038 = vrot.slane %v952, 4
    %v1039 = vrot.slane %v1032, 4
    %v1040 = vsel %vm294, %v912, %v1038
    %v1041 = vsel %vm294, %v992, %v1039
    %v1042 = vsel %vm294, %v1038, %v912
    %v1043 = vrot.slane %v1042, 4
    %v1044 = vsel %vm294, %v1039, %v992
    %v1045 = vrot.slane %v1044, 4
    %v1050 = vld [vmem:[#allocation7] sm:$0xff]
    %v1051 = vld [vmem:[#allocation7 + $0x8] sm:$0xff]
    %v1052 = vld [vmem:[#allocation7 + $0x10] sm:$0xff]
    %v1053 = vld [vmem:[#allocation7 + $0x18] sm:$0xff]
    %v1054 = vld [vmem:[#allocation7 + $0x20] sm:$0xff]
    %v1055 = vld [vmem:[#allocation7 + $0x28] sm:$0xff]
    %v1056 = vld [vmem:[#allocation7 + $0x30] sm:$0xff]
    %v1057 = vld [vmem:[#allocation7 + $0x38] sm:$0xff]
    %v1058 = vld [vmem:[#allocation7 + $0x40] sm:$0xff]
    %v1059 = vld [vmem:[#allocation7 + $0x48] sm:$0xff]
    %v1060 = vld [vmem:[#allocation7 + $0x50] sm:$0xff]
    %v1061 = vld [vmem:[#allocation7 + $0x58] sm:$0xff]
    %v1062 = vld [vmem:[#allocation7 + $0x60] sm:$0xff]
    %v1063 = vld [vmem:[#allocation7 + $0x68] sm:$0xff]
    %v1064 = vld [vmem:[#allocation7 + $0x70] sm:$0xff]
    %v1065 = vld [vmem:[#allocation7 + $0x78] sm:$0xff]
    %v1066 = vld [vmem:[#allocation7 + $0x80] sm:$0xff]
    %v1067 = vld [vmem:[#allocation7 + $0x88] sm:$0xff]
    %v1068 = vld [vmem:[#allocation7 + $0x90] sm:$0xff]
    %v1069 = vld [vmem:[#allocation7 + $0x98] sm:$0xff]
    %v1070 = vld [vmem:[#allocation7 + $0xa0] sm:$0xff]
    %v1071 = vld [vmem:[#allocation7 + $0xa8] sm:$0xff]
    %v1072 = vld [vmem:[#allocation7 + $0xb0] sm:$0xff]
    %v1073 = vld [vmem:[#allocation7 + $0xb8] sm:$0xff]
    %v1074 = vld [vmem:[#allocation7 + $0xc0] sm:$0xff]
    %v1075 = vld [vmem:[#allocation7 + $0xc8] sm:$0xff]
    %v1076 = vld [vmem:[#allocation7 + $0xd0] sm:$0xff]
    %v1077 = vld [vmem:[#allocation7 + $0xd8] sm:$0xff]
    %v1078 = vld [vmem:[#allocation7 + $0xe0] sm:$0xff]
    %v1079 = vld [vmem:[#allocation7 + $0xe8] sm:$0xff]
    %v1080 = vld [vmem:[#allocation7 + $0xf0] sm:$0xff]
    %v1081 = vld [vmem:[#allocation7 + $0xf8] sm:$0xff]
    %v1082 = vld [vmem:[#allocation7 + $0x100] sm:$0xff]
    %v1083 = vld [vmem:[#allocation7 + $0x108] sm:$0xff]
    %v1084 = vld [vmem:[#allocation7 + $0x110] sm:$0xff]
    %v1085 = vld [vmem:[#allocation7 + $0x118] sm:$0xff]
    %v1086 = vld [vmem:[#allocation7 + $0x120] sm:$0xff]
    %v1087 = vld [vmem:[#allocation7 + $0x128] sm:$0xff]
    %v1088 = vld [vmem:[#allocation7 + $0x130] sm:$0xff]
    %v1089 = vld [vmem:[#allocation7 + $0x138] sm:$0xff]
    %v1090 = vld [vmem:[#allocation7 + $0x140] sm:$0xff]
    %v1091 = vld [vmem:[#allocation7 + $0x148] sm:$0xff]
    %v1092 = vld [vmem:[#allocation7 + $0x150] sm:$0xff]
    %v1093 = vld [vmem:[#allocation7 + $0x158] sm:$0xff]
    %v1094 = vld [vmem:[#allocation7 + $0x160] sm:$0xff]
    %v1095 = vld [vmem:[#allocation7 + $0x168] sm:$0xff]
    %v1096 = vld [vmem:[#allocation7 + $0x170] sm:$0xff]
    %v1097 = vld [vmem:[#allocation7 + $0x178] sm:$0xff]
    %v1098 = vld [vmem:[#allocation7 + $0x180] sm:$0xff]
    %v1099 = vld [vmem:[#allocation7 + $0x188] sm:$0xff]
    %v1100 = vld [vmem:[#allocation7 + $0x190] sm:$0xff]
    %v1101 = vld [vmem:[#allocation7 + $0x198] sm:$0xff]
    %v1102 = vld [vmem:[#allocation7 + $0x1a0] sm:$0xff]
    %v1103 = vld [vmem:[#allocation7 + $0x1a8] sm:$0xff]
    %v1104 = vld [vmem:[#allocation7 + $0x1b0] sm:$0xff]
    %v1105 = vld [vmem:[#allocation7 + $0x1b8] sm:$0xff]
    %v1106 = vld [vmem:[#allocation7 + $0x1c0] sm:$0xff]
    %v1107 = vld [vmem:[#allocation7 + $0x1c8] sm:$0xff]
    %v1108 = vld [vmem:[#allocation7 + $0x1d0] sm:$0xff]
    %v1109 = vld [vmem:[#allocation7 + $0x1d8] sm:$0xff]
    %v1110 = vld [vmem:[#allocation7 + $0x1e0] sm:$0xff]
    %v1111 = vld [vmem:[#allocation7 + $0x1e8] sm:$0xff]
    %v1112 = vld [vmem:[#allocation7 + $0x1f0] sm:$0xff]
    %v1113 = vld [vmem:[#allocation7 + $0x1f8] sm:$0xff]
    %v1114 = vld [vmem:[#allocation7 + $0x200] sm:$0xff]
    %v1115 = vld [vmem:[#allocation7 + $0x208] sm:$0xff]
    %v1116 = vld [vmem:[#allocation7 + $0x210] sm:$0xff]
    %v1117 = vld [vmem:[#allocation7 + $0x218] sm:$0xff]
    %v1118 = vld [vmem:[#allocation7 + $0x220] sm:$0xff]
    %v1119 = vld [vmem:[#allocation7 + $0x228] sm:$0xff]
    %v1120 = vld [vmem:[#allocation7 + $0x230] sm:$0xff]
    %v1121 = vld [vmem:[#allocation7 + $0x238] sm:$0xff]
    %v1122 = vld [vmem:[#allocation7 + $0x240] sm:$0xff]
    %v1123 = vld [vmem:[#allocation7 + $0x248] sm:$0xff]
    %v1124 = vld [vmem:[#allocation7 + $0x250] sm:$0xff]
    %v1125 = vld [vmem:[#allocation7 + $0x258] sm:$0xff]
    %v1126 = vld [vmem:[#allocation7 + $0x260] sm:$0xff]
    %v1127 = vld [vmem:[#allocation7 + $0x268] sm:$0xff]
    %v1128 = vld [vmem:[#allocation7 + $0x270] sm:$0xff]
    %v1129 = vld [vmem:[#allocation7 + $0x278] sm:$0xff]
    %v1130 = vld [vmem:[#allocation7 + $0x280] sm:$0xff]
    %v1131 = vld [vmem:[#allocation7 + $0x288] sm:$0xff]
    %v1132 = vld [vmem:[#allocation7 + $0x290] sm:$0xff]
    %v1133 = vld [vmem:[#allocation7 + $0x298] sm:$0xff]
    %v1134 = vld [vmem:[#allocation7 + $0x2a0] sm:$0xff]
    %v1135 = vld [vmem:[#allocation7 + $0x2a8] sm:$0xff]
    %v1136 = vld [vmem:[#allocation7 + $0x2b0] sm:$0xff]
    %v1137 = vld [vmem:[#allocation7 + $0x2b8] sm:$0xff]
    %v1138 = vld [vmem:[#allocation7 + $0x2c0] sm:$0xff]
    %v1139 = vld [vmem:[#allocation7 + $0x2c8] sm:$0xff]
    %v1140 = vld [vmem:[#allocation7 + $0x2d0] sm:$0xff]
    %v1141 = vld [vmem:[#allocation7 + $0x2d8] sm:$0xff]
    %v1142 = vld [vmem:[#allocation7 + $0x2e0] sm:$0xff]
    %v1143 = vld [vmem:[#allocation7 + $0x2e8] sm:$0xff]
    %v1144 = vld [vmem:[#allocation7 + $0x2f0] sm:$0xff]
    %v1145 = vld [vmem:[#allocation7 + $0x2f8] sm:$0xff]
    %v1146 = vld [vmem:[#allocation7 + $0x300] sm:$0xff]
    %v1147 = vld [vmem:[#allocation7 + $0x308] sm:$0xff]
    %v1148 = vld [vmem:[#allocation7 + $0x310] sm:$0xff]
    %v1149 = vld [vmem:[#allocation7 + $0x318] sm:$0xff]
    %v1150 = vld [vmem:[#allocation7 + $0x320] sm:$0xff]
    %v1151 = vld [vmem:[#allocation7 + $0x328] sm:$0xff]
    %v1152 = vld [vmem:[#allocation7 + $0x330] sm:$0xff]
    %v1153 = vld [vmem:[#allocation7 + $0x338] sm:$0xff]
    %v1154 = vld [vmem:[#allocation7 + $0x340] sm:$0xff]
    %v1155 = vld [vmem:[#allocation7 + $0x348] sm:$0xff]
    %v1156 = vld [vmem:[#allocation7 + $0x350] sm:$0xff]
    %v1157 = vld [vmem:[#allocation7 + $0x358] sm:$0xff]
    %v1158 = vld [vmem:[#allocation7 + $0x360] sm:$0xff]
    %v1159 = vld [vmem:[#allocation7 + $0x368] sm:$0xff]
    %v1160 = vld [vmem:[#allocation7 + $0x370] sm:$0xff]
    %v1161 = vld [vmem:[#allocation7 + $0x378] sm:$0xff]
    %v1162 = vld [vmem:[#allocation7 + $0x380] sm:$0xff]
    %v1163 = vld [vmem:[#allocation7 + $0x388] sm:$0xff]
    %v1164 = vld [vmem:[#allocation7 + $0x390] sm:$0xff]
    %v1165 = vld [vmem:[#allocation7 + $0x398] sm:$0xff]
    %v1166 = vld [vmem:[#allocation7 + $0x3a0] sm:$0xff]
    %v1167 = vld [vmem:[#allocation7 + $0x3a8] sm:$0xff]
    %v1168 = vld [vmem:[#allocation7 + $0x3b0] sm:$0xff]
    %v1169 = vld [vmem:[#allocation7 + $0x3b8] sm:$0xff]
    %v1170 = vld [vmem:[#allocation7 + $0x3c0] sm:$0xff]
    %v1171 = vld [vmem:[#allocation7 + $0x3c8] sm:$0xff]
    %v1172 = vld [vmem:[#allocation7 + $0x3d0] sm:$0xff]
    %v1173 = vld [vmem:[#allocation7 + $0x3d8] sm:$0xff]
    %v1174 = vld [vmem:[#allocation7 + $0x3e0] sm:$0xff]
    %v1175 = vld [vmem:[#allocation7 + $0x3e8] sm:$0xff]
    %v1176 = vld [vmem:[#allocation7 + $0x3f0] sm:$0xff]
    %v1177 = vld [vmem:[#allocation7 + $0x3f8] sm:$0xff]
    %v1178 = vld [vmem:[#allocation8] sm:$0xff]
    %v1179 = vld [vmem:[#allocation8 + $0x8] sm:$0xff]
    %v1180 = vld [vmem:[#allocation8 + $0x10] sm:$0xff]
    %v1181 = vld [vmem:[#allocation8 + $0x18] sm:$0xff]
    %v1182 = vld [vmem:[#allocation8 + $0x20] sm:$0xff]
    %v1183 = vld [vmem:[#allocation8 + $0x28] sm:$0xff]
    %v1184 = vld [vmem:[#allocation8 + $0x30] sm:$0xff]
    %v1185 = vld [vmem:[#allocation8 + $0x38] sm:$0xff]
    %v1186 = vld [vmem:[#allocation8 + $0x40] sm:$0xff]
    %v1187 = vld [vmem:[#allocation8 + $0x48] sm:$0xff]
    %v1188 = vld [vmem:[#allocation8 + $0x50] sm:$0xff]
    %v1189 = vld [vmem:[#allocation8 + $0x58] sm:$0xff]
    %v1190 = vld [vmem:[#allocation8 + $0x60] sm:$0xff]
    %v1191 = vld [vmem:[#allocation8 + $0x68] sm:$0xff]
    %v1192 = vld [vmem:[#allocation8 + $0x70] sm:$0xff]
    %v1193 = vld [vmem:[#allocation8 + $0x78] sm:$0xff]
    %v1194 = vld [vmem:[#allocation8 + $0x80] sm:$0xff]
    %v1195 = vld [vmem:[#allocation8 + $0x88] sm:$0xff]
    %v1196 = vld [vmem:[#allocation8 + $0x90] sm:$0xff]
    %v1197 = vld [vmem:[#allocation8 + $0x98] sm:$0xff]
    %v1198 = vld [vmem:[#allocation8 + $0xa0] sm:$0xff]
    %v1199 = vld [vmem:[#allocation8 + $0xa8] sm:$0xff]
    %v1200 = vld [vmem:[#allocation8 + $0xb0] sm:$0xff]
    %v1201 = vld [vmem:[#allocation8 + $0xb8] sm:$0xff]
    %v1202 = vld [vmem:[#allocation8 + $0xc0] sm:$0xff]
    %v1203 = vld [vmem:[#allocation8 + $0xc8] sm:$0xff]
    %v1204 = vld [vmem:[#allocation8 + $0xd0] sm:$0xff]
    %v1205 = vld [vmem:[#allocation8 + $0xd8] sm:$0xff]
    %v1206 = vld [vmem:[#allocation8 + $0xe0] sm:$0xff]
    %v1207 = vld [vmem:[#allocation8 + $0xe8] sm:$0xff]
    %v1208 = vld [vmem:[#allocation8 + $0xf0] sm:$0xff]
    %v1209 = vld [vmem:[#allocation8 + $0xf8] sm:$0xff]
    %v1210 = vld [vmem:[#allocation8 + $0x100] sm:$0xff]
    %v1211 = vld [vmem:[#allocation8 + $0x108] sm:$0xff]
    %v1212 = vld [vmem:[#allocation8 + $0x110] sm:$0xff]
    %v1213 = vld [vmem:[#allocation8 + $0x118] sm:$0xff]
    %v1214 = vld [vmem:[#allocation8 + $0x120] sm:$0xff]
    %v1215 = vld [vmem:[#allocation8 + $0x128] sm:$0xff]
    %v1216 = vld [vmem:[#allocation8 + $0x130] sm:$0xff]
    %v1217 = vld [vmem:[#allocation8 + $0x138] sm:$0xff]
    %v1218 = vld [vmem:[#allocation8 + $0x140] sm:$0xff]
    %v1219 = vld [vmem:[#allocation8 + $0x148] sm:$0xff]
    %v1220 = vld [vmem:[#allocation8 + $0x150] sm:$0xff]
    %v1221 = vld [vmem:[#allocation8 + $0x158] sm:$0xff]
    %v1222 = vld [vmem:[#allocation8 + $0x160] sm:$0xff]
    %v1223 = vld [vmem:[#allocation8 + $0x168] sm:$0xff]
    %v1224 = vld [vmem:[#allocation8 + $0x170] sm:$0xff]
    %v1225 = vld [vmem:[#allocation8 + $0x178] sm:$0xff]
    %v1226 = vld [vmem:[#allocation8 + $0x180] sm:$0xff]
    %v1227 = vld [vmem:[#allocation8 + $0x188] sm:$0xff]
    %v1228 = vld [vmem:[#allocation8 + $0x190] sm:$0xff]
    %v1229 = vld [vmem:[#allocation8 + $0x198] sm:$0xff]
    %v1230 = vld [vmem:[#allocation8 + $0x1a0] sm:$0xff]
    %v1231 = vld [vmem:[#allocation8 + $0x1a8] sm:$0xff]
    %v1232 = vld [vmem:[#allocation8 + $0x1b0] sm:$0xff]
    %v1233 = vld [vmem:[#allocation8 + $0x1b8] sm:$0xff]
    %v1234 = vld [vmem:[#allocation8 + $0x1c0] sm:$0xff]
    %v1235 = vld [vmem:[#allocation8 + $0x1c8] sm:$0xff]
    %v1236 = vld [vmem:[#allocation8 + $0x1d0] sm:$0xff]
    %v1237 = vld [vmem:[#allocation8 + $0x1d8] sm:$0xff]
    %v1238 = vld [vmem:[#allocation8 + $0x1e0] sm:$0xff]
    %v1239 = vld [vmem:[#allocation8 + $0x1e8] sm:$0xff]
    %v1240 = vld [vmem:[#allocation8 + $0x1f0] sm:$0xff]
    %v1241 = vld [vmem:[#allocation8 + $0x1f8] sm:$0xff]
    %v1242 = vld [vmem:[%s11] sm:$0xf]
    %v1243 = vadd.f32 %v1040, 0.0
    %v1244 = vadd.f32 %v1041, 0.0
    %v1245 = vadd.f32 %v1043, 0.0
    %v1246 = vadd.f32 %v1045, 0.0
    %v1247 = vxor.u32 %v1243, 2147483648
    %v1248 = vxor.u32 %v1245, 2147483648
    %v1249 = vmul.f32 %v1247, 1.442695
    %v1250 = vpow.pop %v1249
    %v1251 = vmul.f32 %v1248, 1.442695
    %v1252 = vpow.pop %v1251
    %v1253 = vadd.f32 %v1250, 1.0
    %v1254 = vadd.f32 %v1252, 1.0
    %v1255 = vrcp.pop %v1253
    %v1256 = vmul.f32 %v1253, %v1255
    %v1257 = vsub.f32 1.0, %v1256
    %v1258 = vmul.f32 %v1255, %v1257
    %v1259 = vadd.f32 %v1255, %v1258
    %vm1260 = vweird.f32 %v1253
    %vm1261 = vweird.f32 %v1255
    %vm1262 = vmor %vm1260, %vm1261
    %v1263 = vsel %vm1262, %v1255, %v1259
    %v1264 = vand.u32 2147483647, %v1253
    %vm1265 = vcmp.eq.f32.partialorder %v1264, 8.507059e+37
    %v1266 = vand.u32 %v1253, 2147483648
    %v1267 = vor.u32 1.1754944e-38, %v1266
    %v1268 = vsel %vm1265, %v1267, %v1263
    %v1269 = vmul.f32 1.0, %v1268
    %v1270 = vrcp.pop %v1254
    %v1271 = vmul.f32 %v1254, %v1270
    %v1272 = vsub.f32 1.0, %v1271
    %v1273 = vmul.f32 %v1270, %v1272
    %v1274 = vadd.f32 %v1270, %v1273
    %vm1275 = vweird.f32 %v1254
    %vm1276 = vweird.f32 %v1270
    %vm1277 = vmor %vm1275, %vm1276
    %v1278 = vsel %vm1277, %v1270, %v1274
    %v1279 = vand.u32 2147483647, %v1254
    %vm1280 = vcmp.eq.f32.partialorder %v1279, 8.507059e+37
    %v1281 = vand.u32 %v1254, 2147483648
    %v1282 = vor.u32 1.1754944e-38, %v1281
    %v1283 = vsel %vm1280, %v1282, %v1278
    %v1284 = vmul.f32 1.0, %v1283
    %v1287 = vrot.slane %v1243, 4
    %v1288 = vrot.slane %v1245, 4
    %v1291 = vxor.u32 %v1287, 2147483648
    %v1292 = vxor.u32 %v1288, 2147483648
    %v1293 = vmul.f32 %v1291, 1.442695
    %v1294 = vpow.pop %v1293
    %v1295 = vmul.f32 %v1292, 1.442695
    %v1296 = vpow.pop %v1295
    %v1297 = vadd.f32 %v1294, 1.0
    %v1298 = vadd.f32 %v1296, 1.0
    %v1299 = vrcp.pop %v1297
    %v1300 = vmul.f32 %v1297, %v1299
    %v1301 = vsub.f32 1.0, %v1300
    %v1302 = vmul.f32 %v1299, %v1301
    %v1303 = vadd.f32 %v1299, %v1302
    %vm1304 = vweird.f32 %v1297
    %vm1305 = vweird.f32 %v1299
    %vm1306 = vmor %vm1304, %vm1305
    %v1307 = vsel %vm1306, %v1299, %v1303
    %v1308 = vand.u32 2147483647, %v1297
    %vm1309 = vcmp.eq.f32.partialorder %v1308, 8.507059e+37
    %v1310 = vand.u32 %v1297, 2147483648
    %v1311 = vor.u32 1.1754944e-38, %v1310
    %v1312 = vsel %vm1309, %v1311, %v1307
    %v1313 = vmul.f32 1.0, %v1312
    %v1314 = vrcp.pop %v1298
    %v1315 = vmul.f32 %v1298, %v1314
    %v1316 = vsub.f32 1.0, %v1315
    %v1317 = vmul.f32 %v1314, %v1316
    %v1318 = vadd.f32 %v1314, %v1317
    %vm1319 = vweird.f32 %v1298
    %vm1320 = vweird.f32 %v1314
    %vm1321 = vmor %vm1319, %vm1320
    %v1322 = vsel %vm1321, %v1314, %v1318
    %v1323 = vand.u32 2147483647, %v1298
    %vm1324 = vcmp.eq.f32.partialorder %v1323, 8.507059e+37
    %v1325 = vand.u32 %v1298, 2147483648
    %v1326 = vor.u32 1.1754944e-38, %v1325
    %v1327 = vsel %vm1324, %v1326, %v1322
    %v1328 = vmul.f32 1.0, %v1327
    %v1329 = vtanh.pop %v1244
    %v1330 = vtanh.pop %v1246
    %v1333 = vrot.slane %v1244, 4
    %v1334 = vrot.slane %v1246, 4
    %v1337 = vxor.u32 %v1333, 2147483648
    %v1338 = vxor.u32 %v1334, 2147483648
    %v1339 = vmul.f32 %v1337, 1.442695
    %v1340 = vpow.pop %v1339
    %v1341 = vmul.f32 %v1338, 1.442695
    %v1342 = vpow.pop %v1341
    %v1343 = vadd.f32 %v1340, 1.0
    %v1344 = vadd.f32 %v1342, 1.0
    %v1345 = vrcp.pop %v1343
    %v1346 = vmul.f32 %v1343, %v1345
    %v1347 = vsub.f32 1.0, %v1346
    %v1348 = vmul.f32 %v1345, %v1347
    %v1349 = vadd.f32 %v1345, %v1348
    %vm1350 = vweird.f32 %v1343
    %vm1351 = vweird.f32 %v1345
    %vm1352 = vmor %vm1350, %vm1351
    %v1353 = vsel %vm1352, %v1345, %v1349
    %v1354 = vand.u32 2147483647, %v1343
    %vm1355 = vcmp.eq.f32.partialorder %v1354, 8.507059e+37
    %v1356 = vand.u32 %v1343, 2147483648
    %v1357 = vor.u32 1.1754944e-38, %v1356
    %v1358 = vsel %vm1355, %v1357, %v1353
    %v1359 = vmul.f32 1.0, %v1358
    %v1360 = vrcp.pop %v1344
    %v1361 = vmul.f32 %v1344, %v1360
    %v1362 = vsub.f32 1.0, %v1361
    %v1363 = vmul.f32 %v1360, %v1362
    %v1364 = vadd.f32 %v1360, %v1363
    %vm1365 = vweird.f32 %v1344
    %vm1366 = vweird.f32 %v1360
    %vm1367 = vmor %vm1365, %vm1366
    %v1368 = vsel %vm1367, %v1360, %v1364
    %v1369 = vand.u32 2147483647, %v1344
    %vm1370 = vcmp.eq.f32.partialorder %v1369, 8.507059e+37
    %v1371 = vand.u32 %v1344, 2147483648
    %v1372 = vor.u32 1.1754944e-38, %v1371
    %v1373 = vsel %vm1370, %v1372, %v1368
    %v1374 = vmul.f32 1.0, %v1373
    %v1375 = vmul.f32 %v1313, 0.0
    %v1376 = vmul.f32 %v1328, 0.0
    %v1377 = vmul.f32 %v1269, %v1329
    %v1378 = vmul.f32 %v1284, %v1330
    %v1379 = vadd.f32 %v1375, %v1377
    %v1380 = vadd.f32 %v1376, %v1378
    %v1381 = vtanh.pop %v1379
    %v1382 = vtanh.pop %v1380
    %v1383 = vmul.f32 %v1359, %v1381
    %v1384 = vmul.f32 %v1374, %v1382
    %v1387 = vperm.slane %v1383, 0
    %v1388 = vperm.slane %v1384, 0
    %vm1389 = vcmask 1041409
    %v1390 = vsel %vm1389, %v1388, %v1387
    %1392 = vmatpush.msra.mxu0 %v1170
    %1393 = vmatpush.msra.mxu0 %v1162
    %1394 = vmatpush.msra.mxu0 %v1154
    %1395 = vmatpush.msra.mxu0 %v1146
    %1396 = vmatpush.msra.mxu0 %v1138
    %1397 = vmatpush.msra.mxu0 %v1130
    %1398 = vmatpush.msra.mxu0 %v1122
    %1399 = vmatpush.msra.mxu0 %v1114
    %1400 = vmatpush.msra.mxu0 %v1106
    %1401 = vmatpush.msra.mxu0 %v1098
    %1402 = vmatpush.msra.mxu0 %v1090
    %1403 = vmatpush.msra.mxu0 %v1082
    %1404 = vmatpush.msra.mxu0 %v1074
    %1405 = vmatpush.msra.mxu0 %v1066
    %1406 = vmatpush.msra.mxu0 %v1058
    %1407 = vmatpush.msra.mxu0 %v1050
    %1408 = vmatmul.f32.gmra.mxu0 %v1390
    %v1409 = vpop.f32.mrf.mxu0
    %v1410 = vadd.f32 0.0, %v1409
    %1411 = vdwg.mxu0
    %1412 = vmatpush.msra.mxu0 %v1171
    %1413 = vmatpush.msra.mxu0 %v1163
    %1414 = vmatpush.msra.mxu0 %v1155
    %1415 = vmatpush.msra.mxu0 %v1147
    %1416 = vmatpush.msra.mxu0 %v1139
    %1417 = vmatpush.msra.mxu0 %v1131
    %1418 = vmatpush.msra.mxu0 %v1123
    %1419 = vmatpush.msra.mxu0 %v1115
    %1420 = vmatpush.msra.mxu0 %v1107
    %1421 = vmatpush.msra.mxu0 %v1099
    %1422 = vmatpush.msra.mxu0 %v1091
    %1423 = vmatpush.msra.mxu0 %v1083
    %1424 = vmatpush.msra.mxu0 %v1075
    %1425 = vmatpush.msra.mxu0 %v1067
    %1426 = vmatpush.msra.mxu0 %v1059
    %1427 = vmatpush.msra.mxu0 %v1051
    %1428 = vmatmul.f32.gmra.mxu0 %v1390
    %v1429 = vpop.f32.mrf.mxu0
    %v1430 = vadd.f32 0.0, %v1429
    %1431 = vdwg.mxu0
    %1432 = vmatpush.msra.mxu0 %v1172
    %1433 = vmatpush.msra.mxu0 %v1164
    %1434 = vmatpush.msra.mxu0 %v1156
    %1435 = vmatpush.msra.mxu0 %v1148
    %1436 = vmatpush.msra.mxu0 %v1140
    %1437 = vmatpush.msra.mxu0 %v1132
    %1438 = vmatpush.msra.mxu0 %v1124
    %1439 = vmatpush.msra.mxu0 %v1116
    %1440 = vmatpush.msra.mxu0 %v1108
    %1441 = vmatpush.msra.mxu0 %v1100
    %1442 = vmatpush.msra.mxu0 %v1092
    %1443 = vmatpush.msra.mxu0 %v1084
    %1444 = vmatpush.msra.mxu0 %v1076
    %1445 = vmatpush.msra.mxu0 %v1068
    %1446 = vmatpush.msra.mxu0 %v1060
    %1447 = vmatpush.msra.mxu0 %v1052
    %1448 = vmatmul.f32.gmra.mxu0 %v1390
    %v1449 = vpop.f32.mrf.mxu0
    %v1450 = vadd.f32 0.0, %v1449
    %1451 = vdwg.mxu0
    %1452 = vmatpush.msra.mxu0 %v1173
    %1453 = vmatpush.msra.mxu0 %v1165
    %1454 = vmatpush.msra.mxu0 %v1157
    %1455 = vmatpush.msra.mxu0 %v1149
    %1456 = vmatpush.msra.mxu0 %v1141
    %1457 = vmatpush.msra.mxu0 %v1133
    %1458 = vmatpush.msra.mxu0 %v1125
    %1459 = vmatpush.msra.mxu0 %v1117
    %1460 = vmatpush.msra.mxu0 %v1109
    %1461 = vmatpush.msra.mxu0 %v1101
    %1462 = vmatpush.msra.mxu0 %v1093
    %1463 = vmatpush.msra.mxu0 %v1085
    %1464 = vmatpush.msra.mxu0 %v1077
    %1465 = vmatpush.msra.mxu0 %v1069
    %1466 = vmatpush.msra.mxu0 %v1061
    %1467 = vmatpush.msra.mxu0 %v1053
    %1468 = vmatmul.f32.gmra.mxu0 %v1390
    %v1469 = vpop.f32.mrf.mxu0
    %v1470 = vadd.f32 0.0, %v1469
    %1471 = vdwg.mxu0
    %1472 = vmatpush.msra.mxu0 %v1174
    %1473 = vmatpush.msra.mxu0 %v1166
    %1474 = vmatpush.msra.mxu0 %v1158
    %1475 = vmatpush.msra.mxu0 %v1150
    %1476 = vmatpush.msra.mxu0 %v1142
    %1477 = vmatpush.msra.mxu0 %v1134
    %1478 = vmatpush.msra.mxu0 %v1126
    %1479 = vmatpush.msra.mxu0 %v1118
    %1480 = vmatpush.msra.mxu0 %v1110
    %1481 = vmatpush.msra.mxu0 %v1102
    %1482 = vmatpush.msra.mxu0 %v1094
    %1483 = vmatpush.msra.mxu0 %v1086
    %1484 = vmatpush.msra.mxu0 %v1078
    %1485 = vmatpush.msra.mxu0 %v1070
    %1486 = vmatpush.msra.mxu0 %v1062
    %1487 = vmatpush.msra.mxu0 %v1054
    %1488 = vmatmul.f32.gmra.mxu0 %v1390
    %v1489 = vpop.f32.mrf.mxu0
    %v1490 = vadd.f32 0.0, %v1489
    %1491 = vdwg.mxu0
    %1492 = vmatpush.msra.mxu0 %v1175
    %1493 = vmatpush.msra.mxu0 %v1167
    %1494 = vmatpush.msra.mxu0 %v1159
    %1495 = vmatpush.msra.mxu0 %v1151
    %1496 = vmatpush.msra.mxu0 %v1143
    %1497 = vmatpush.msra.mxu0 %v1135
    %1498 = vmatpush.msra.mxu0 %v1127
    %1499 = vmatpush.msra.mxu0 %v1119
    %1500 = vmatpush.msra.mxu0 %v1111
    %1501 = vmatpush.msra.mxu0 %v1103
    %1502 = vmatpush.msra.mxu0 %v1095
    %1503 = vmatpush.msra.mxu0 %v1087
    %1504 = vmatpush.msra.mxu0 %v1079
    %1505 = vmatpush.msra.mxu0 %v1071
    %1506 = vmatpush.msra.mxu0 %v1063
    %1507 = vmatpush.msra.mxu0 %v1055
    %1508 = vmatmul.f32.gmra.mxu0 %v1390
    %v1509 = vpop.f32.mrf.mxu0
    %v1510 = vadd.f32 0.0, %v1509
    %1511 = vdwg.mxu0
    %1512 = vmatpush.msra.mxu0 %v1176
    %1513 = vmatpush.msra.mxu0 %v1168
    %1514 = vmatpush.msra.mxu0 %v1160
    %1515 = vmatpush.msra.mxu0 %v1152
    %1516 = vmatpush.msra.mxu0 %v1144
    %1517 = vmatpush.msra.mxu0 %v1136
    %1518 = vmatpush.msra.mxu0 %v1128
    %1519 = vmatpush.msra.mxu0 %v1120
    %1520 = vmatpush.msra.mxu0 %v1112
    %1521 = vmatpush.msra.mxu0 %v1104
    %1522 = vmatpush.msra.mxu0 %v1096
    %1523 = vmatpush.msra.mxu0 %v1088
    %1524 = vmatpush.msra.mxu0 %v1080
    %1525 = vmatpush.msra.mxu0 %v1072
    %1526 = vmatpush.msra.mxu0 %v1064
    %1527 = vmatpush.msra.mxu0 %v1056
    %1528 = vmatmul.f32.gmra.mxu0 %v1390
    %v1529 = vpop.f32.mrf.mxu0
    %v1530 = vadd.f32 0.0, %v1529
    %1531 = vdwg.mxu0
    %1532 = vmatpush.msra.mxu0 %v1177
    %1533 = vmatpush.msra.mxu0 %v1169
    %1534 = vmatpush.msra.mxu0 %v1161
    %1535 = vmatpush.msra.mxu0 %v1153
    %1536 = vmatpush.msra.mxu0 %v1145
    %1537 = vmatpush.msra.mxu0 %v1137
    %1538 = vmatpush.msra.mxu0 %v1129
    %1539 = vmatpush.msra.mxu0 %v1121
    %1540 = vmatpush.msra.mxu0 %v1113
    %1541 = vmatpush.msra.mxu0 %v1105
    %1542 = vmatpush.msra.mxu0 %v1097
    %1543 = vmatpush.msra.mxu0 %v1089
    %1544 = vmatpush.msra.mxu0 %v1081
    %1545 = vmatpush.msra.mxu0 %v1073
    %1546 = vmatpush.msra.mxu0 %v1065
    %1547 = vmatpush.msra.mxu0 %v1057
    %1548 = vmatmul.f32.gmra.mxu0 %v1390
    %v1549 = vpop.f32.mrf.mxu0
    %v1550 = vadd.f32 0.0, %v1549
    %1551 = vdwg.mxu0
    %1552 = vmatpush.msra.mxu0 %v1238
    %1553 = vmatpush.msra.mxu0 %v1234
    %1554 = vmatpush.msra.mxu0 %v1230
    %1555 = vmatpush.msra.mxu0 %v1226
    %1556 = vmatpush.msra.mxu0 %v1222
    %1557 = vmatpush.msra.mxu0 %v1218
    %1558 = vmatpush.msra.mxu0 %v1214
    %1559 = vmatpush.msra.mxu0 %v1210
    %1560 = vmatpush.msra.mxu0 %v1206
    %1561 = vmatpush.msra.mxu0 %v1202
    %1562 = vmatpush.msra.mxu0 %v1198
    %1563 = vmatpush.msra.mxu0 %v1194
    %1564 = vmatpush.msra.mxu0 %v1190
    %1565 = vmatpush.msra.mxu0 %v1186
    %1566 = vmatpush.msra.mxu0 %v1182
    %1567 = vmatpush.msra.mxu0 %v1178
    %1568 = vmatmul.f32.gmra.mxu0 0.0
    %v1569 = vpop.f32.mrf.mxu0
    %v1570 = vadd.f32 0.0, %v1569
    %1571 = vdwg.mxu0
    %1572 = vmatpush.msra.mxu0 %v1239
    %1573 = vmatpush.msra.mxu0 %v1235
    %1574 = vmatpush.msra.mxu0 %v1231
    %1575 = vmatpush.msra.mxu0 %v1227
    %1576 = vmatpush.msra.mxu0 %v1223
    %1577 = vmatpush.msra.mxu0 %v1219
    %1578 = vmatpush.msra.mxu0 %v1215
    %1579 = vmatpush.msra.mxu0 %v1211
    %1580 = vmatpush.msra.mxu0 %v1207
    %1581 = vmatpush.msra.mxu0 %v1203
    %1582 = vmatpush.msra.mxu0 %v1199
    %1583 = vmatpush.msra.mxu0 %v1195
    %1584 = vmatpush.msra.mxu0 %v1191
    %1585 = vmatpush.msra.mxu0 %v1187
    %1586 = vmatpush.msra.mxu0 %v1183
    %1587 = vmatpush.msra.mxu0 %v1179
    %1588 = vmatmul.f32.gmra.mxu0 0.0
    %v1589 = vpop.f32.mrf.mxu0
    %v1590 = vadd.f32 0.0, %v1589
    %1591 = vdwg.mxu0
    %1592 = vmatpush.msra.mxu0 %v1240
    %1593 = vmatpush.msra.mxu0 %v1236
    %1594 = vmatpush.msra.mxu0 %v1232
    %1595 = vmatpush.msra.mxu0 %v1228
    %1596 = vmatpush.msra.mxu0 %v1224
    %1597 = vmatpush.msra.mxu0 %v1220
    %1598 = vmatpush.msra.mxu0 %v1216
    %1599 = vmatpush.msra.mxu0 %v1212
    %1600 = vmatpush.msra.mxu0 %v1208
    %1601 = vmatpush.msra.mxu0 %v1204
    %1602 = vmatpush.msra.mxu0 %v1200
    %1603 = vmatpush.msra.mxu0 %v1196
    %1604 = vmatpush.msra.mxu0 %v1192
    %1605 = vmatpush.msra.mxu0 %v1188
    %1606 = vmatpush.msra.mxu0 %v1184
    %1607 = vmatpush.msra.mxu0 %v1180
    %1608 = vmatmul.f32.gmra.mxu0 0.0
    %v1609 = vpop.f32.mrf.mxu0
    %v1610 = vadd.f32 0.0, %v1609
    %1611 = vdwg.mxu0
    %1612 = vmatpush.msra.mxu0 %v1241
    %1613 = vmatpush.msra.mxu0 %v1237
    %1614 = vmatpush.msra.mxu0 %v1233
    %1615 = vmatpush.msra.mxu0 %v1229
    %1616 = vmatpush.msra.mxu0 %v1225
    %1617 = vmatpush.msra.mxu0 %v1221
    %1618 = vmatpush.msra.mxu0 %v1217
    %1619 = vmatpush.msra.mxu0 %v1213
    %1620 = vmatpush.msra.mxu0 %v1209
    %1621 = vmatpush.msra.mxu0 %v1205
    %1622 = vmatpush.msra.mxu0 %v1201
    %1623 = vmatpush.msra.mxu0 %v1197
    %1624 = vmatpush.msra.mxu0 %v1193
    %1625 = vmatpush.msra.mxu0 %v1189
    %1626 = vmatpush.msra.mxu0 %v1185
    %1627 = vmatpush.msra.mxu0 %v1181
    %1628 = vmatmul.f32.gmra.mxu0 0.0
    %v1629 = vpop.f32.mrf.mxu0
    %v1630 = vadd.f32 0.0, %v1629
    %1631 = vdwg.mxu0
    %v1632 = vadd.f32 %v1490, %v1570
    %v1633 = vadd.f32 %v1510, %v1590
    %v1634 = vadd.f32 %v1530, %v1610
    %v1635 = vadd.f32 %v1550, %v1630
    %v1637 = vperm.slane %v1242, 0
    %v1638 = vperm.slane %v1242, 1
    %v1639 = vperm.slane %v1242, 2
    %v1640 = vperm.slane %v1242, 3
    %v1645 = vadd.f32 %v1632, %v1637
    %v1646 = vadd.f32 %v1633, %v1638
    %v1647 = vadd.f32 %v1634, %v1639
    %v1648 = vadd.f32 %v1635, %v1640
    %v1649 = vxor.u32 %v1645, 2147483648
    %v1650 = vmul.f32 %v1649, 1.442695
    %v1651 = vpow.pop %v1650
    %v1652 = vadd.f32 %v1651, 1.0
    %v1653 = vrcp.pop %v1652
    %v1654 = vmul.f32 %v1652, %v1653
    %v1655 = vsub.f32 1.0, %v1654
    %v1656 = vmul.f32 %v1653, %v1655
    %v1657 = vadd.f32 %v1653, %v1656
    %vm1658 = vweird.f32 %v1652
    %vm1659 = vweird.f32 %v1653
    %vm1660 = vmor %vm1658, %vm1659
    %v1661 = vsel %vm1660, %v1653, %v1657
    %v1662 = vand.u32 2147483647, %v1652
    %vm1663 = vcmp.eq.f32.partialorder %v1662, 8.507059e+37
    %v1664 = vand.u32 %v1652, 2147483648
    %v1665 = vor.u32 1.1754944e-38, %v1664
    %v1666 = vsel %vm1663, %v1665, %v1661
    %v1667 = vmul.f32 1.0, %v1666
    %v1668 = vxor.u32 %v1646, 2147483648
    %v1669 = vmul.f32 %v1668, 1.442695
    %v1670 = vpow.pop %v1669
    %v1671 = vadd.f32 %v1670, 1.0
    %v1672 = vrcp.pop %v1671
    %v1673 = vmul.f32 %v1671, %v1672
    %v1674 = vsub.f32 1.0, %v1673
    %v1675 = vmul.f32 %v1672, %v1674
    %v1676 = vadd.f32 %v1672, %v1675
    %vm1677 = vweird.f32 %v1671
    %vm1678 = vweird.f32 %v1672
    %vm1679 = vmor %vm1677, %vm1678
    %v1680 = vsel %vm1679, %v1672, %v1676
    %v1681 = vand.u32 2147483647, %v1671
    %vm1682 = vcmp.eq.f32.partialorder %v1681, 8.507059e+37
    %v1683 = vand.u32 %v1671, 2147483648
    %v1684 = vor.u32 1.1754944e-38, %v1683
    %v1685 = vsel %vm1682, %v1684, %v1680
    %v1686 = vmul.f32 1.0, %v1685
    %v1687 = vtanh.pop %v1647
    %v1688 = vxor.u32 %v1648, 2147483648
    %v1689 = vmul.f32 %v1688, 1.442695
    %v1690 = vpow.pop %v1689
    %v1691 = vadd.f32 %v1690, 1.0
    %v1692 = vrcp.pop %v1691
    %v1693 = vmul.f32 %v1691, %v1692
    %v1694 = vsub.f32 1.0, %v1693
    %v1695 = vmul.f32 %v1692, %v1694
    %v1696 = vadd.f32 %v1692, %v1695
    %vm1697 = vweird.f32 %v1691
    %vm1698 = vweird.f32 %v1692
    %vm1699 = vmor %vm1697, %vm1698
    %v1700 = vsel %vm1699, %v1692, %v1696
    %v1701 = vand.u32 2147483647, %v1691
    %vm1702 = vcmp.eq.f32.partialorder %v1701, 8.507059e+37
    %v1703 = vand.u32 %v1691, 2147483648
    %v1704 = vor.u32 1.1754944e-38, %v1703
    %v1705 = vsel %vm1702, %v1704, %v1700
    %v1706 = vmul.f32 1.0, %v1705
    %v1707 = vmul.f32 %v1686, 0.0
    %v1708 = vmul.f32 %v1667, %v1687
    %v1709 = vadd.f32 %v1707, %v1708
    %v1710 = vtanh.pop %v1709
    %v1711 = vmul.f32 %v1706, %v1710
    %v1716 = vrot.slane %v1430, 4
    %v1717 = vrot.slane %v1470, 4
    %v1718 = vsel %vm294, %v1410, %v1716
    %v1719 = vsel %vm294, %v1450, %v1717
    %v1720 = vrot.slane %v1718, 7
    %v1721 = vrot.slane %v1719, 7
    %v1726 = vadd.f32 %v1040, %v1720
    %v1727 = vadd.f32 %v1041, %v1721
    %v1728 = vadd.f32 %v1043, %v1718
    %v1729 = vadd.f32 %v1045, %v1719
    %v1730 = vxor.u32 %v1726, 2147483648
    %v1731 = vxor.u32 %v1728, 2147483648
    %v1732 = vmul.f32 %v1730, 1.442695
    %v1733 = vpow.pop %v1732
    %v1734 = vmul.f32 %v1731, 1.442695
    %v1735 = vpow.pop %v1734
    %v1736 = vadd.f32 %v1733, 1.0
    %v1737 = vadd.f32 %v1735, 1.0
    %v1738 = vrcp.pop %v1736
    %v1739 = vmul.f32 %v1736, %v1738
    %v1740 = vsub.f32 1.0, %v1739
    %v1741 = vmul.f32 %v1738, %v1740
    %v1742 = vadd.f32 %v1738, %v1741
    %vm1743 = vweird.f32 %v1736
    %vm1744 = vweird.f32 %v1738
    %vm1745 = vmor %vm1743, %vm1744
    %v1746 = vsel %vm1745, %v1738, %v1742
    %v1747 = vand.u32 2147483647, %v1736
    %vm1748 = vcmp.eq.f32.partialorder %v1747, 8.507059e+37
    %v1749 = vand.u32 %v1736, 2147483648
    %v1750 = vor.u32 1.1754944e-38, %v1749
    %v1751 = vsel %vm1748, %v1750, %v1746
    %v1752 = vmul.f32 1.0, %v1751
    %v1753 = vrcp.pop %v1737
    %v1754 = vmul.f32 %v1737, %v1753
    %v1755 = vsub.f32 1.0, %v1754
    %v1756 = vmul.f32 %v1753, %v1755
    %v1757 = vadd.f32 %v1753, %v1756
    %vm1758 = vweird.f32 %v1737
    %vm1759 = vweird.f32 %v1753
    %vm1760 = vmor %vm1758, %vm1759
    %v1761 = vsel %vm1760, %v1753, %v1757
    %v1762 = vand.u32 2147483647, %v1737
    %vm1763 = vcmp.eq.f32.partialorder %v1762, 8.507059e+37
    %v1764 = vand.u32 %v1737, 2147483648
    %v1765 = vor.u32 1.1754944e-38, %v1764
    %v1766 = vsel %vm1763, %v1765, %v1761
    %v1767 = vmul.f32 1.0, %v1766
    %v1770 = vrot.slane %v1726, 4
    %v1771 = vrot.slane %v1728, 4
    %v1774 = vxor.u32 %v1770, 2147483648
    %v1775 = vxor.u32 %v1771, 2147483648
    %v1776 = vmul.f32 %v1774, 1.442695
    %v1777 = vpow.pop %v1776
    %v1778 = vmul.f32 %v1775, 1.442695
    %v1779 = vpow.pop %v1778
    %v1780 = vadd.f32 %v1777, 1.0
    %v1781 = vadd.f32 %v1779, 1.0
    %v1782 = vrcp.pop %v1780
    %v1783 = vmul.f32 %v1780, %v1782
    %v1784 = vsub.f32 1.0, %v1783
    %v1785 = vmul.f32 %v1782, %v1784
    %v1786 = vadd.f32 %v1782, %v1785
    %vm1787 = vweird.f32 %v1780
    %vm1788 = vweird.f32 %v1782
    %vm1789 = vmor %vm1787, %vm1788
    %v1790 = vsel %vm1789, %v1782, %v1786
    %v1791 = vand.u32 2147483647, %v1780
    %vm1792 = vcmp.eq.f32.partialorder %v1791, 8.507059e+37
    %v1793 = vand.u32 %v1780, 2147483648
    %v1794 = vor.u32 1.1754944e-38, %v1793
    %v1795 = vsel %vm1792, %v1794, %v1790
    %v1796 = vmul.f32 1.0, %v1795
    %v1797 = vrcp.pop %v1781
    %v1798 = vmul.f32 %v1781, %v1797
    %v1799 = vsub.f32 1.0, %v1798
    %v1800 = vmul.f32 %v1797, %v1799
    %v1801 = vadd.f32 %v1797, %v1800
    %vm1802 = vweird.f32 %v1781
    %vm1803 = vweird.f32 %v1797
    %vm1804 = vmor %vm1802, %vm1803
    %v1805 = vsel %vm1804, %v1797, %v1801
    %v1806 = vand.u32 2147483647, %v1781
    %vm1807 = vcmp.eq.f32.partialorder %v1806, 8.507059e+37
    %v1808 = vand.u32 %v1781, 2147483648
    %v1809 = vor.u32 1.1754944e-38, %v1808
    %v1810 = vsel %vm1807, %v1809, %v1805
    %v1811 = vmul.f32 1.0, %v1810
    %v1812 = vtanh.pop %v1727
    %v1813 = vtanh.pop %v1729
    %v1816 = vrot.slane %v1727, 4
    %v1817 = vrot.slane %v1729, 4
    %v1820 = vxor.u32 %v1816, 2147483648
    %v1821 = vxor.u32 %v1817, 2147483648
    %v1822 = vmul.f32 %v1820, 1.442695
    %v1823 = vpow.pop %v1822
    %v1824 = vmul.f32 %v1821, 1.442695
    %v1825 = vpow.pop %v1824
    %v1826 = vadd.f32 %v1823, 1.0
    %v1827 = vadd.f32 %v1825, 1.0
    %v1828 = vrcp.pop %v1826
    %v1829 = vmul.f32 %v1826, %v1828
    %v1830 = vsub.f32 1.0, %v1829
    %v1831 = vmul.f32 %v1828, %v1830
    %v1832 = vadd.f32 %v1828, %v1831
    %vm1833 = vweird.f32 %v1826
    %vm1834 = vweird.f32 %v1828
    %vm1835 = vmor %vm1833, %vm1834
    %v1836 = vsel %vm1835, %v1828, %v1832
    %v1837 = vand.u32 2147483647, %v1826
    %vm1838 = vcmp.eq.f32.partialorder %v1837, 8.507059e+37
    %v1839 = vand.u32 %v1826, 2147483648
    %v1840 = vor.u32 1.1754944e-38, %v1839
    %v1841 = vsel %vm1838, %v1840, %v1836
    %v1842 = vmul.f32 1.0, %v1841
    %v1843 = vrcp.pop %v1827
    %v1844 = vmul.f32 %v1827, %v1843
    %v1845 = vsub.f32 1.0, %v1844
    %v1846 = vmul.f32 %v1843, %v1845
    %v1847 = vadd.f32 %v1843, %v1846
    %vm1848 = vweird.f32 %v1827
    %vm1849 = vweird.f32 %v1843
    %vm1850 = vmor %vm1848, %vm1849
    %v1851 = vsel %vm1850, %v1843, %v1847
    %v1852 = vand.u32 2147483647, %v1827
    %vm1853 = vcmp.eq.f32.partialorder %v1852, 8.507059e+37
    %v1854 = vand.u32 %v1827, 2147483648
    %v1855 = vor.u32 1.1754944e-38, %v1854
    %v1856 = vsel %vm1853, %v1855, %v1851
    %v1857 = vmul.f32 1.0, %v1856
    %v1860 = vrot.slane %v1379, 7
    %v1861 = vrot.slane %v1380, 7
    %v1864 = vmul.f32 %v1796, %v1860
    %v1865 = vmul.f32 %v1811, %v1861
    %v1866 = vmul.f32 %v1752, %v1812
    %v1867 = vmul.f32 %v1767, %v1813
    %v1868 = vadd.f32 %v1864, %v1866
    %v1869 = vadd.f32 %v1865, %v1867
    %v1870 = vtanh.pop %v1868
    %v1871 = vtanh.pop %v1869
    %v1872 = vmul.f32 %v1842, %v1870
    %v1873 = vmul.f32 %v1857, %v1871
    %v1876 = vperm.slane %v1872, 1
    %v1877 = vperm.slane %v1873, 1
    %v1878 = vsel %vm1389, %v1877, %v1876
    %1880 = vmatpush.msra.mxu0 %v1170
    %1881 = vmatpush.msra.mxu0 %v1162
    %1882 = vmatpush.msra.mxu0 %v1154
    %1883 = vmatpush.msra.mxu0 %v1146
    %1884 = vmatpush.msra.mxu0 %v1138
    %1885 = vmatpush.msra.mxu0 %v1130
    %1886 = vmatpush.msra.mxu0 %v1122
    %1887 = vmatpush.msra.mxu0 %v1114
    %1888 = vmatpush.msra.mxu0 %v1106
    %1889 = vmatpush.msra.mxu0 %v1098
    %1890 = vmatpush.msra.mxu0 %v1090
    %1891 = vmatpush.msra.mxu0 %v1082
    %1892 = vmatpush.msra.mxu0 %v1074
    %1893 = vmatpush.msra.mxu0 %v1066
    %1894 = vmatpush.msra.mxu0 %v1058
    %1895 = vmatpush.msra.mxu0 %v1050
    %1896 = vmatmul.f32.gmra.mxu0 %v1878
    %v1897 = vpop.f32.mrf.mxu0
    %v1898 = vadd.f32 0.0, %v1897
    %1899 = vdwg.mxu0
    %1900 = vmatpush.msra.mxu0 %v1171
    %1901 = vmatpush.msra.mxu0 %v1163
    %1902 = vmatpush.msra.mxu0 %v1155
    %1903 = vmatpush.msra.mxu0 %v1147
    %1904 = vmatpush.msra.mxu0 %v1139
    %1905 = vmatpush.msra.mxu0 %v1131
    %1906 = vmatpush.msra.mxu0 %v1123
    %1907 = vmatpush.msra.mxu0 %v1115
    %1908 = vmatpush.msra.mxu0 %v1107
    %1909 = vmatpush.msra.mxu0 %v1099
    %1910 = vmatpush.msra.mxu0 %v1091
    %1911 = vmatpush.msra.mxu0 %v1083
    %1912 = vmatpush.msra.mxu0 %v1075
    %1913 = vmatpush.msra.mxu0 %v1067
    %1914 = vmatpush.msra.mxu0 %v1059
    %1915 = vmatpush.msra.mxu0 %v1051
    %1916 = vmatmul.f32.gmra.mxu0 %v1878
    %v1917 = vpop.f32.mrf.mxu0
    %v1918 = vadd.f32 0.0, %v1917
    %1919 = vdwg.mxu0
    %1920 = vmatpush.msra.mxu0 %v1172
    %1921 = vmatpush.msra.mxu0 %v1164
    %1922 = vmatpush.msra.mxu0 %v1156
    %1923 = vmatpush.msra.mxu0 %v1148
    %1924 = vmatpush.msra.mxu0 %v1140
    %1925 = vmatpush.msra.mxu0 %v1132
    %1926 = vmatpush.msra.mxu0 %v1124
    %1927 = vmatpush.msra.mxu0 %v1116
    %1928 = vmatpush.msra.mxu0 %v1108
    %1929 = vmatpush.msra.mxu0 %v1100
    %1930 = vmatpush.msra.mxu0 %v1092
    %1931 = vmatpush.msra.mxu0 %v1084
    %1932 = vmatpush.msra.mxu0 %v1076
    %1933 = vmatpush.msra.mxu0 %v1068
    %1934 = vmatpush.msra.mxu0 %v1060
    %1935 = vmatpush.msra.mxu0 %v1052
    %1936 = vmatmul.f32.gmra.mxu0 %v1878
    %v1937 = vpop.f32.mrf.mxu0
    %v1938 = vadd.f32 0.0, %v1937
    %1939 = vdwg.mxu0
    %1940 = vmatpush.msra.mxu0 %v1173
    %1941 = vmatpush.msra.mxu0 %v1165
    %1942 = vmatpush.msra.mxu0 %v1157
    %1943 = vmatpush.msra.mxu0 %v1149
    %1944 = vmatpush.msra.mxu0 %v1141
    %1945 = vmatpush.msra.mxu0 %v1133
    %1946 = vmatpush.msra.mxu0 %v1125
    %1947 = vmatpush.msra.mxu0 %v1117
    %1948 = vmatpush.msra.mxu0 %v1109
    %1949 = vmatpush.msra.mxu0 %v1101
    %1950 = vmatpush.msra.mxu0 %v1093
    %1951 = vmatpush.msra.mxu0 %v1085
    %1952 = vmatpush.msra.mxu0 %v1077
    %1953 = vmatpush.msra.mxu0 %v1069
    %1954 = vmatpush.msra.mxu0 %v1061
    %1955 = vmatpush.msra.mxu0 %v1053
    %1956 = vmatmul.f32.gmra.mxu0 %v1878
    %v1957 = vpop.f32.mrf.mxu0
    %v1958 = vadd.f32 0.0, %v1957
    %1959 = vdwg.mxu0
    %1960 = vmatpush.msra.mxu0 %v1174
    %1961 = vmatpush.msra.mxu0 %v1166
    %1962 = vmatpush.msra.mxu0 %v1158
    %1963 = vmatpush.msra.mxu0 %v1150
    %1964 = vmatpush.msra.mxu0 %v1142
    %1965 = vmatpush.msra.mxu0 %v1134
    %1966 = vmatpush.msra.mxu0 %v1126
    %1967 = vmatpush.msra.mxu0 %v1118
    %1968 = vmatpush.msra.mxu0 %v1110
    %1969 = vmatpush.msra.mxu0 %v1102
    %1970 = vmatpush.msra.mxu0 %v1094
    %1971 = vmatpush.msra.mxu0 %v1086
    %1972 = vmatpush.msra.mxu0 %v1078
    %1973 = vmatpush.msra.mxu0 %v1070
    %1974 = vmatpush.msra.mxu0 %v1062
    %1975 = vmatpush.msra.mxu0 %v1054
    %1976 = vmatmul.f32.gmra.mxu0 %v1878
    %v1977 = vpop.f32.mrf.mxu0
    %v1978 = vadd.f32 0.0, %v1977
    %1979 = vdwg.mxu0
    %1980 = vmatpush.msra.mxu0 %v1175
    %1981 = vmatpush.msra.mxu0 %v1167
    %1982 = vmatpush.msra.mxu0 %v1159
    %1983 = vmatpush.msra.mxu0 %v1151
    %1984 = vmatpush.msra.mxu0 %v1143
    %1985 = vmatpush.msra.mxu0 %v1135
    %1986 = vmatpush.msra.mxu0 %v1127
    %1987 = vmatpush.msra.mxu0 %v1119
    %1988 = vmatpush.msra.mxu0 %v1111
    %1989 = vmatpush.msra.mxu0 %v1103
    %1990 = vmatpush.msra.mxu0 %v1095
    %1991 = vmatpush.msra.mxu0 %v1087
    %1992 = vmatpush.msra.mxu0 %v1079
    %1993 = vmatpush.msra.mxu0 %v1071
    %1994 = vmatpush.msra.mxu0 %v1063
    %1995 = vmatpush.msra.mxu0 %v1055
    %1996 = vmatmul.f32.gmra.mxu0 %v1878
    %v1997 = vpop.f32.mrf.mxu0
    %v1998 = vadd.f32 0.0, %v1997
    %1999 = vdwg.mxu0
    %2000 = vmatpush.msra.mxu0 %v1176
    %2001 = vmatpush.msra.mxu0 %v1168
    %2002 = vmatpush.msra.mxu0 %v1160
    %2003 = vmatpush.msra.mxu0 %v1152
    %2004 = vmatpush.msra.mxu0 %v1144
    %2005 = vmatpush.msra.mxu0 %v1136
    %2006 = vmatpush.msra.mxu0 %v1128
    %2007 = vmatpush.msra.mxu0 %v1120
    %2008 = vmatpush.msra.mxu0 %v1112
    %2009 = vmatpush.msra.mxu0 %v1104
    %2010 = vmatpush.msra.mxu0 %v1096
    %2011 = vmatpush.msra.mxu0 %v1088
    %2012 = vmatpush.msra.mxu0 %v1080
    %2013 = vmatpush.msra.mxu0 %v1072
    %2014 = vmatpush.msra.mxu0 %v1064
    %2015 = vmatpush.msra.mxu0 %v1056
    %2016 = vmatmul.f32.gmra.mxu0 %v1878
    %v2017 = vpop.f32.mrf.mxu0
    %v2018 = vadd.f32 0.0, %v2017
    %2019 = vdwg.mxu0
    %2020 = vmatpush.msra.mxu0 %v1177
    %2021 = vmatpush.msra.mxu0 %v1169
    %2022 = vmatpush.msra.mxu0 %v1161
    %2023 = vmatpush.msra.mxu0 %v1153
    %2024 = vmatpush.msra.mxu0 %v1145
    %2025 = vmatpush.msra.mxu0 %v1137
    %2026 = vmatpush.msra.mxu0 %v1129
    %2027 = vmatpush.msra.mxu0 %v1121
    %2028 = vmatpush.msra.mxu0 %v1113
    %2029 = vmatpush.msra.mxu0 %v1105
    %2030 = vmatpush.msra.mxu0 %v1097
    %2031 = vmatpush.msra.mxu0 %v1089
    %2032 = vmatpush.msra.mxu0 %v1081
    %2033 = vmatpush.msra.mxu0 %v1073
    %2034 = vmatpush.msra.mxu0 %v1065
    %2035 = vmatpush.msra.mxu0 %v1057
    %2036 = vmatmul.f32.gmra.mxu0 %v1878
    %v2037 = vpop.f32.mrf.mxu0
    %v2038 = vadd.f32 0.0, %v2037
    %2039 = vdwg.mxu0
    %2040 = vmatpush.msra.mxu0 %v1238
    %2041 = vmatpush.msra.mxu0 %v1234
    %2042 = vmatpush.msra.mxu0 %v1230
    %2043 = vmatpush.msra.mxu0 %v1226
    %2044 = vmatpush.msra.mxu0 %v1222
    %2045 = vmatpush.msra.mxu0 %v1218
    %2046 = vmatpush.msra.mxu0 %v1214
    %2047 = vmatpush.msra.mxu0 %v1210
    %2048 = vmatpush.msra.mxu0 %v1206
    %2049 = vmatpush.msra.mxu0 %v1202
    %2050 = vmatpush.msra.mxu0 %v1198
    %2051 = vmatpush.msra.mxu0 %v1194
    %2052 = vmatpush.msra.mxu0 %v1190
    %2053 = vmatpush.msra.mxu0 %v1186
    %2054 = vmatpush.msra.mxu0 %v1182
    %2055 = vmatpush.msra.mxu0 %v1178
    %2056 = vmatmul.f32.gmra.mxu0 %v1711
    %v2057 = vpop.f32.mrf.mxu0
    %v2058 = vadd.f32 0.0, %v2057
    %2059 = vdwg.mxu0
    %2060 = vmatpush.msra.mxu0 %v1239
    %2061 = vmatpush.msra.mxu0 %v1235
    %2062 = vmatpush.msra.mxu0 %v1231
    %2063 = vmatpush.msra.mxu0 %v1227
    %2064 = vmatpush.msra.mxu0 %v1223
    %2065 = vmatpush.msra.mxu0 %v1219
    %2066 = vmatpush.msra.mxu0 %v1215
    %2067 = vmatpush.msra.mxu0 %v1211
    %2068 = vmatpush.msra.mxu0 %v1207
    %2069 = vmatpush.msra.mxu0 %v1203
    %2070 = vmatpush.msra.mxu0 %v1199
    %2071 = vmatpush.msra.mxu0 %v1195
    %2072 = vmatpush.msra.mxu0 %v1191
    %2073 = vmatpush.msra.mxu0 %v1187
    %2074 = vmatpush.msra.mxu0 %v1183
    %2075 = vmatpush.msra.mxu0 %v1179
    %2076 = vmatmul.f32.gmra.mxu0 %v1711
    %v2077 = vpop.f32.mrf.mxu0
    %v2078 = vadd.f32 0.0, %v2077
    %2079 = vdwg.mxu0
    %2080 = vmatpush.msra.mxu0 %v1240
    %2081 = vmatpush.msra.mxu0 %v1236
    %2082 = vmatpush.msra.mxu0 %v1232
    %2083 = vmatpush.msra.mxu0 %v1228
    %2084 = vmatpush.msra.mxu0 %v1224
    %2085 = vmatpush.msra.mxu0 %v1220
    %2086 = vmatpush.msra.mxu0 %v1216
    %2087 = vmatpush.msra.mxu0 %v1212
    %2088 = vmatpush.msra.mxu0 %v1208
    %2089 = vmatpush.msra.mxu0 %v1204
    %2090 = vmatpush.msra.mxu0 %v1200
    %2091 = vmatpush.msra.mxu0 %v1196
    %2092 = vmatpush.msra.mxu0 %v1192
    %2093 = vmatpush.msra.mxu0 %v1188
    %2094 = vmatpush.msra.mxu0 %v1184
    %2095 = vmatpush.msra.mxu0 %v1180
    %2096 = vmatmul.f32.gmra.mxu0 %v1711
    %v2097 = vpop.f32.mrf.mxu0
    %v2098 = vadd.f32 0.0, %v2097
    %2099 = vdwg.mxu0
    %2100 = vmatpush.msra.mxu0 %v1241
    %2101 = vmatpush.msra.mxu0 %v1237
    %2102 = vmatpush.msra.mxu0 %v1233
    %2103 = vmatpush.msra.mxu0 %v1229
    %2104 = vmatpush.msra.mxu0 %v1225
    %2105 = vmatpush.msra.mxu0 %v1221
    %2106 = vmatpush.msra.mxu0 %v1217
    %2107 = vmatpush.msra.mxu0 %v1213
    %2108 = vmatpush.msra.mxu0 %v1209
    %2109 = vmatpush.msra.mxu0 %v1205
    %2110 = vmatpush.msra.mxu0 %v1201
    %2111 = vmatpush.msra.mxu0 %v1197
    %2112 = vmatpush.msra.mxu0 %v1193
    %2113 = vmatpush.msra.mxu0 %v1189
    %2114 = vmatpush.msra.mxu0 %v1185
    %2115 = vmatpush.msra.mxu0 %v1181
    %2116 = vmatmul.f32.gmra.mxu0 %v1711
    %v2117 = vpop.f32.mrf.mxu0
    %v2118 = vadd.f32 0.0, %v2117
    %2119 = vdwg.mxu0
    %v2120 = vadd.f32 %v1978, %v2058
    %v2121 = vadd.f32 %v1998, %v2078
    %v2122 = vadd.f32 %v2018, %v2098
    %v2123 = vadd.f32 %v2038, %v2118
    %v2124 = vadd.f32 %v2120, %v1637
    %v2125 = vadd.f32 %v2121, %v1638
    %v2126 = vadd.f32 %v2122, %v1639
    %v2127 = vadd.f32 %v2123, %v1640
    %v2128 = vxor.u32 %v2124, 2147483648
    %v2129 = vmul.f32 %v2128, 1.442695
    %v2130 = vpow.pop %v2129
    %v2131 = vadd.f32 %v2130, 1.0
    %v2132 = vrcp.pop %v2131
    %v2133 = vmul.f32 %v2131, %v2132
    %v2134 = vsub.f32 1.0, %v2133
    %v2135 = vmul.f32 %v2132, %v2134
    %v2136 = vadd.f32 %v2132, %v2135
    %vm2137 = vweird.f32 %v2131
    %vm2138 = vweird.f32 %v2132
    %vm2139 = vmor %vm2137, %vm2138
    %v2140 = vsel %vm2139, %v2132, %v2136
    %v2141 = vand.u32 2147483647, %v2131
    %vm2142 = vcmp.eq.f32.partialorder %v2141, 8.507059e+37
    %v2143 = vand.u32 %v2131, 2147483648
    %v2144 = vor.u32 1.1754944e-38, %v2143
    %v2145 = vsel %vm2142, %v2144, %v2140
    %v2146 = vmul.f32 1.0, %v2145
    %v2147 = vxor.u32 %v2125, 2147483648
    %v2148 = vmul.f32 %v2147, 1.442695
    %v2149 = vpow.pop %v2148
    %v2150 = vadd.f32 %v2149, 1.0
    %v2151 = vrcp.pop %v2150
    %v2152 = vmul.f32 %v2150, %v2151
    %v2153 = vsub.f32 1.0, %v2152
    %v2154 = vmul.f32 %v2151, %v2153
    %v2155 = vadd.f32 %v2151, %v2154
    %vm2156 = vweird.f32 %v2150
    %vm2157 = vweird.f32 %v2151
    %vm2158 = vmor %vm2156, %vm2157
    %v2159 = vsel %vm2158, %v2151, %v2155
    %v2160 = vand.u32 2147483647, %v2150
    %vm2161 = vcmp.eq.f32.partialorder %v2160, 8.507059e+37
    %v2162 = vand.u32 %v2150, 2147483648
    %v2163 = vor.u32 1.1754944e-38, %v2162
    %v2164 = vsel %vm2161, %v2163, %v2159
    %v2165 = vmul.f32 1.0, %v2164
    %v2166 = vtanh.pop %v2126
    %v2167 = vxor.u32 %v2127, 2147483648
    %v2168 = vmul.f32 %v2167, 1.442695
    %v2169 = vpow.pop %v2168
    %v2170 = vadd.f32 %v2169, 1.0
    %v2171 = vrcp.pop %v2170
    %v2172 = vmul.f32 %v2170, %v2171
    %v2173 = vsub.f32 1.0, %v2172
    %v2174 = vmul.f32 %v2171, %v2173
    %v2175 = vadd.f32 %v2171, %v2174
    %vm2176 = vweird.f32 %v2170
    %vm2177 = vweird.f32 %v2171
    %vm2178 = vmor %vm2176, %vm2177
    %v2179 = vsel %vm2178, %v2171, %v2175
    %v2180 = vand.u32 2147483647, %v2170
    %vm2181 = vcmp.eq.f32.partialorder %v2180, 8.507059e+37
    %v2182 = vand.u32 %v2170, 2147483648
    %v2183 = vor.u32 1.1754944e-38, %v2182
    %v2184 = vsel %vm2181, %v2183, %v2179
    %v2185 = vmul.f32 1.0, %v2184
    %v2186 = vmul.f32 %v2165, %v1709
    %v2187 = vmul.f32 %v2146, %v2166
    %v2188 = vadd.f32 %v2186, %v2187
    %v2189 = vtanh.pop %v2188
    %v2190 = vmul.f32 %v2185, %v2189
    %v2195 = vrot.slane %v1918, 4
    %v2196 = vrot.slane %v1958, 4
    %v2197 = vsel %vm294, %v1898, %v2195
    %v2198 = vsel %vm294, %v1938, %v2196
    %v2199 = vrot.slane %v2197, 6
    %v2200 = vrot.slane %v2198, 6
    %v2201 = vrot.slane %v2197, 7
    %v2202 = vrot.slane %v2198, 7
    %v2207 = vadd.f32 %v1040, %v2199
    %v2208 = vadd.f32 %v1041, %v2200
    %v2209 = vadd.f32 %v1043, %v2201
    %v2210 = vadd.f32 %v1045, %v2202
    %v2211 = vxor.u32 %v2207, 2147483648
    %v2212 = vxor.u32 %v2209, 2147483648
    %v2213 = vmul.f32 %v2211, 1.442695
    %v2214 = vpow.pop %v2213
    %v2215 = vmul.f32 %v2212, 1.442695
    %v2216 = vpow.pop %v2215
    %v2217 = vadd.f32 %v2214, 1.0
    %v2218 = vadd.f32 %v2216, 1.0
    %v2219 = vrcp.pop %v2217
    %v2220 = vmul.f32 %v2217, %v2219
    %v2221 = vsub.f32 1.0, %v2220
    %v2222 = vmul.f32 %v2219, %v2221
    %v2223 = vadd.f32 %v2219, %v2222
    %vm2224 = vweird.f32 %v2217
    %vm2225 = vweird.f32 %v2219
    %vm2226 = vmor %vm2224, %vm2225
    %v2227 = vsel %vm2226, %v2219, %v2223
    %v2228 = vand.u32 2147483647, %v2217
    %vm2229 = vcmp.eq.f32.partialorder %v2228, 8.507059e+37
    %v2230 = vand.u32 %v2217, 2147483648
    %v2231 = vor.u32 1.1754944e-38, %v2230
    %v2232 = vsel %vm2229, %v2231, %v2227
    %v2233 = vmul.f32 1.0, %v2232
    %v2234 = vrcp.pop %v2218
    %v2235 = vmul.f32 %v2218, %v2234
    %v2236 = vsub.f32 1.0, %v2235
    %v2237 = vmul.f32 %v2234, %v2236
    %v2238 = vadd.f32 %v2234, %v2237
    %vm2239 = vweird.f32 %v2218
    %vm2240 = vweird.f32 %v2234
    %vm2241 = vmor %vm2239, %vm2240
    %v2242 = vsel %vm2241, %v2234, %v2238
    %v2243 = vand.u32 2147483647, %v2218
    %vm2244 = vcmp.eq.f32.partialorder %v2243, 8.507059e+37
    %v2245 = vand.u32 %v2218, 2147483648
    %v2246 = vor.u32 1.1754944e-38, %v2245
    %v2247 = vsel %vm2244, %v2246, %v2242
    %v2248 = vmul.f32 1.0, %v2247
    %v2251 = vrot.slane %v2207, 4
    %v2252 = vrot.slane %v2209, 4
    %v2255 = vxor.u32 %v2251, 2147483648
    %v2256 = vxor.u32 %v2252, 2147483648
    %v2257 = vmul.f32 %v2255, 1.442695
    %v2258 = vpow.pop %v2257
    %v2259 = vmul.f32 %v2256, 1.442695
    %v2260 = vpow.pop %v2259
    %v2261 = vadd.f32 %v2258, 1.0
    %v2262 = vadd.f32 %v2260, 1.0
    %v2263 = vrcp.pop %v2261
    %v2264 = vmul.f32 %v2261, %v2263
    %v2265 = vsub.f32 1.0, %v2264
    %v2266 = vmul.f32 %v2263, %v2265
    %v2267 = vadd.f32 %v2263, %v2266
    %vm2268 = vweird.f32 %v2261
    %vm2269 = vweird.f32 %v2263
    %vm2270 = vmor %vm2268, %vm2269
    %v2271 = vsel %vm2270, %v2263, %v2267
    %v2272 = vand.u32 2147483647, %v2261
    %vm2273 = vcmp.eq.f32.partialorder %v2272, 8.507059e+37
    %v2274 = vand.u32 %v2261, 2147483648
    %v2275 = vor.u32 1.1754944e-38, %v2274
    %v2276 = vsel %vm2273, %v2275, %v2271
    %v2277 = vmul.f32 1.0, %v2276
    %v2278 = vrcp.pop %v2262
    %v2279 = vmul.f32 %v2262, %v2278
    %v2280 = vsub.f32 1.0, %v2279
    %v2281 = vmul.f32 %v2278, %v2280
    %v2282 = vadd.f32 %v2278, %v2281
    %vm2283 = vweird.f32 %v2262
    %vm2284 = vweird.f32 %v2278
    %vm2285 = vmor %vm2283, %vm2284
    %v2286 = vsel %vm2285, %v2278, %v2282
    %v2287 = vand.u32 2147483647, %v2262
    %vm2288 = vcmp.eq.f32.partialorder %v2287, 8.507059e+37
    %v2289 = vand.u32 %v2262, 2147483648
    %v2290 = vor.u32 1.1754944e-38, %v2289
    %v2291 = vsel %vm2288, %v2290, %v2286
    %v2292 = vmul.f32 1.0, %v2291
    %v2293 = vtanh.pop %v2208
    %v2294 = vtanh.pop %v2210
    %v2297 = vrot.slane %v2208, 4
    %v2298 = vrot.slane %v2210, 4
    %v2301 = vxor.u32 %v2297, 2147483648
    %v2302 = vxor.u32 %v2298, 2147483648
    %v2303 = vmul.f32 %v2301, 1.442695
    %v2304 = vpow.pop %v2303
    %v2305 = vmul.f32 %v2302, 1.442695
    %v2306 = vpow.pop %v2305
    %v2307 = vadd.f32 %v2304, 1.0
    %v2308 = vadd.f32 %v2306, 1.0
    %v2309 = vrcp.pop %v2307
    %v2310 = vmul.f32 %v2307, %v2309
    %v2311 = vsub.f32 1.0, %v2310
    %v2312 = vmul.f32 %v2309, %v2311
    %v2313 = vadd.f32 %v2309, %v2312
    %vm2314 = vweird.f32 %v2307
    %vm2315 = vweird.f32 %v2309
    %vm2316 = vmor %vm2314, %vm2315
    %v2317 = vsel %vm2316, %v2309, %v2313
    %v2318 = vand.u32 2147483647, %v2307
    %vm2319 = vcmp.eq.f32.partialorder %v2318, 8.507059e+37
    %v2320 = vand.u32 %v2307, 2147483648
    %v2321 = vor.u32 1.1754944e-38, %v2320
    %v2322 = vsel %vm2319, %v2321, %v2317
    %v2323 = vmul.f32 1.0, %v2322
    %v2324 = vrcp.pop %v2308
    %v2325 = vmul.f32 %v2308, %v2324
    %v2326 = vsub.f32 1.0, %v2325
    %v2327 = vmul.f32 %v2324, %v2326
    %v2328 = vadd.f32 %v2324, %v2327
    %vm2329 = vweird.f32 %v2308
    %vm2330 = vweird.f32 %v2324
    %vm2331 = vmor %vm2329, %vm2330
    %v2332 = vsel %vm2331, %v2324, %v2328
    %v2333 = vand.u32 2147483647, %v2308
    %vm2334 = vcmp.eq.f32.partialorder %v2333, 8.507059e+37
    %v2335 = vand.u32 %v2308, 2147483648
    %v2336 = vor.u32 1.1754944e-38, %v2335
    %v2337 = vsel %vm2334, %v2336, %v2332
    %v2338 = vmul.f32 1.0, %v2337
    %v2341 = vrot.slane %v1868, 7
    %v2342 = vrot.slane %v1869, 7
    %v2345 = vmul.f32 %v2277, %v2341
    %v2346 = vmul.f32 %v2292, %v2342
    %v2347 = vmul.f32 %v2233, %v2293
    %v2348 = vmul.f32 %v2248, %v2294
    %v2349 = vadd.f32 %v2345, %v2347
    %v2350 = vadd.f32 %v2346, %v2348
    %v2351 = vtanh.pop %v2349
    %v2352 = vtanh.pop %v2350
    %v2353 = vmul.f32 %v2323, %v2351
    %v2354 = vmul.f32 %v2338, %v2352
    %v2357 = vperm.slane %v2353, 2
    %v2358 = vperm.slane %v2354, 2
    %v2359 = vsel %vm1389, %v2358, %v2357
    %2361 = vmatpush.msra.mxu0 %v1170
    %2362 = vmatpush.msra.mxu0 %v1162
    %2363 = vmatpush.msra.mxu0 %v1154
    %2364 = vmatpush.msra.mxu0 %v1146
    %2365 = vmatpush.msra.mxu0 %v1138
    %2366 = vmatpush.msra.mxu0 %v1130
    %2367 = vmatpush.msra.mxu0 %v1122
    %2368 = vmatpush.msra.mxu0 %v1114
    %2369 = vmatpush.msra.mxu0 %v1106
    %2370 = vmatpush.msra.mxu0 %v1098
    %2371 = vmatpush.msra.mxu0 %v1090
    %2372 = vmatpush.msra.mxu0 %v1082
    %2373 = vmatpush.msra.mxu0 %v1074
    %2374 = vmatpush.msra.mxu0 %v1066
    %2375 = vmatpush.msra.mxu0 %v1058
    %2376 = vmatpush.msra.mxu0 %v1050
    %2377 = vmatmul.f32.gmra.mxu0 %v2359
    %v2378 = vpop.f32.mrf.mxu0
    %v2379 = vadd.f32 0.0, %v2378
    %2380 = vdwg.mxu0
    %2381 = vmatpush.msra.mxu0 %v1171
    %2382 = vmatpush.msra.mxu0 %v1163
    %2383 = vmatpush.msra.mxu0 %v1155
    %2384 = vmatpush.msra.mxu0 %v1147
    %2385 = vmatpush.msra.mxu0 %v1139
    %2386 = vmatpush.msra.mxu0 %v1131
    %2387 = vmatpush.msra.mxu0 %v1123
    %2388 = vmatpush.msra.mxu0 %v1115
    %2389 = vmatpush.msra.mxu0 %v1107
    %2390 = vmatpush.msra.mxu0 %v1099
    %2391 = vmatpush.msra.mxu0 %v1091
    %2392 = vmatpush.msra.mxu0 %v1083
    %2393 = vmatpush.msra.mxu0 %v1075
    %2394 = vmatpush.msra.mxu0 %v1067
    %2395 = vmatpush.msra.mxu0 %v1059
    %2396 = vmatpush.msra.mxu0 %v1051
    %2397 = vmatmul.f32.gmra.mxu0 %v2359
    %v2398 = vpop.f32.mrf.mxu0
    %v2399 = vadd.f32 0.0, %v2398
    %2400 = vdwg.mxu0
    %2401 = vmatpush.msra.mxu0 %v1172
    %2402 = vmatpush.msra.mxu0 %v1164
    %2403 = vmatpush.msra.mxu0 %v1156
    %2404 = vmatpush.msra.mxu0 %v1148
    %2405 = vmatpush.msra.mxu0 %v1140
    %2406 = vmatpush.msra.mxu0 %v1132
    %2407 = vmatpush.msra.mxu0 %v1124
    %2408 = vmatpush.msra.mxu0 %v1116
    %2409 = vmatpush.msra.mxu0 %v1108
    %2410 = vmatpush.msra.mxu0 %v1100
    %2411 = vmatpush.msra.mxu0 %v1092
    %2412 = vmatpush.msra.mxu0 %v1084
    %2413 = vmatpush.msra.mxu0 %v1076
    %2414 = vmatpush.msra.mxu0 %v1068
    %2415 = vmatpush.msra.mxu0 %v1060
    %2416 = vmatpush.msra.mxu0 %v1052
    %2417 = vmatmul.f32.gmra.mxu0 %v2359
    %v2418 = vpop.f32.mrf.mxu0
    %v2419 = vadd.f32 0.0, %v2418
    %2420 = vdwg.mxu0
    %2421 = vmatpush.msra.mxu0 %v1173
    %2422 = vmatpush.msra.mxu0 %v1165
    %2423 = vmatpush.msra.mxu0 %v1157
    %2424 = vmatpush.msra.mxu0 %v1149
    %2425 = vmatpush.msra.mxu0 %v1141
    %2426 = vmatpush.msra.mxu0 %v1133
    %2427 = vmatpush.msra.mxu0 %v1125
    %2428 = vmatpush.msra.mxu0 %v1117
    %2429 = vmatpush.msra.mxu0 %v1109
    %2430 = vmatpush.msra.mxu0 %v1101
    %2431 = vmatpush.msra.mxu0 %v1093
    %2432 = vmatpush.msra.mxu0 %v1085
    %2433 = vmatpush.msra.mxu0 %v1077
    %2434 = vmatpush.msra.mxu0 %v1069
    %2435 = vmatpush.msra.mxu0 %v1061
    %2436 = vmatpush.msra.mxu0 %v1053
    %2437 = vmatmul.f32.gmra.mxu0 %v2359
    %v2438 = vpop.f32.mrf.mxu0
    %v2439 = vadd.f32 0.0, %v2438
    %2440 = vdwg.mxu0
    %2441 = vmatpush.msra.mxu0 %v1174
    %2442 = vmatpush.msra.mxu0 %v1166
    %2443 = vmatpush.msra.mxu0 %v1158
    %2444 = vmatpush.msra.mxu0 %v1150
    %2445 = vmatpush.msra.mxu0 %v1142
    %2446 = vmatpush.msra.mxu0 %v1134
    %2447 = vmatpush.msra.mxu0 %v1126
    %2448 = vmatpush.msra.mxu0 %v1118
    %2449 = vmatpush.msra.mxu0 %v1110
    %2450 = vmatpush.msra.mxu0 %v1102
    %2451 = vmatpush.msra.mxu0 %v1094
    %2452 = vmatpush.msra.mxu0 %v1086
    %2453 = vmatpush.msra.mxu0 %v1078
    %2454 = vmatpush.msra.mxu0 %v1070
    %2455 = vmatpush.msra.mxu0 %v1062
    %2456 = vmatpush.msra.mxu0 %v1054
    %2457 = vmatmul.f32.gmra.mxu0 %v2359
    %v2458 = vpop.f32.mrf.mxu0
    %v2459 = vadd.f32 0.0, %v2458
    %2460 = vdwg.mxu0
    %2461 = vmatpush.msra.mxu0 %v1175
    %2462 = vmatpush.msra.mxu0 %v1167
    %2463 = vmatpush.msra.mxu0 %v1159
    %2464 = vmatpush.msra.mxu0 %v1151
    %2465 = vmatpush.msra.mxu0 %v1143
    %2466 = vmatpush.msra.mxu0 %v1135
    %2467 = vmatpush.msra.mxu0 %v1127
    %2468 = vmatpush.msra.mxu0 %v1119
    %2469 = vmatpush.msra.mxu0 %v1111
    %2470 = vmatpush.msra.mxu0 %v1103
    %2471 = vmatpush.msra.mxu0 %v1095
    %2472 = vmatpush.msra.mxu0 %v1087
    %2473 = vmatpush.msra.mxu0 %v1079
    %2474 = vmatpush.msra.mxu0 %v1071
    %2475 = vmatpush.msra.mxu0 %v1063
    %2476 = vmatpush.msra.mxu0 %v1055
    %2477 = vmatmul.f32.gmra.mxu0 %v2359
    %v2478 = vpop.f32.mrf.mxu0
    %v2479 = vadd.f32 0.0, %v2478
    %2480 = vdwg.mxu0
    %2481 = vmatpush.msra.mxu0 %v1176
    %2482 = vmatpush.msra.mxu0 %v1168
    %2483 = vmatpush.msra.mxu0 %v1160
    %2484 = vmatpush.msra.mxu0 %v1152
    %2485 = vmatpush.msra.mxu0 %v1144
    %2486 = vmatpush.msra.mxu0 %v1136
    %2487 = vmatpush.msra.mxu0 %v1128
    %2488 = vmatpush.msra.mxu0 %v1120
    %2489 = vmatpush.msra.mxu0 %v1112
    %2490 = vmatpush.msra.mxu0 %v1104
    %2491 = vmatpush.msra.mxu0 %v1096
    %2492 = vmatpush.msra.mxu0 %v1088
    %2493 = vmatpush.msra.mxu0 %v1080
    %2494 = vmatpush.msra.mxu0 %v1072
    %2495 = vmatpush.msra.mxu0 %v1064
    %2496 = vmatpush.msra.mxu0 %v1056
    %2497 = vmatmul.f32.gmra.mxu0 %v2359
    %v2498 = vpop.f32.mrf.mxu0
    %v2499 = vadd.f32 0.0, %v2498
    %2500 = vdwg.mxu0
    %2501 = vmatpush.msra.mxu0 %v1177
    %2502 = vmatpush.msra.mxu0 %v1169
    %2503 = vmatpush.msra.mxu0 %v1161
    %2504 = vmatpush.msra.mxu0 %v1153
    %2505 = vmatpush.msra.mxu0 %v1145
    %2506 = vmatpush.msra.mxu0 %v1137
    %2507 = vmatpush.msra.mxu0 %v1129
    %2508 = vmatpush.msra.mxu0 %v1121
    %2509 = vmatpush.msra.mxu0 %v1113
    %2510 = vmatpush.msra.mxu0 %v1105
    %2511 = vmatpush.msra.mxu0 %v1097
    %2512 = vmatpush.msra.mxu0 %v1089
    %2513 = vmatpush.msra.mxu0 %v1081
    %2514 = vmatpush.msra.mxu0 %v1073
    %2515 = vmatpush.msra.mxu0 %v1065
    %2516 = vmatpush.msra.mxu0 %v1057
    %2517 = vmatmul.f32.gmra.mxu0 %v2359
    %v2518 = vpop.f32.mrf.mxu0
    %v2519 = vadd.f32 0.0, %v2518
    %2520 = vdwg.mxu0
    %2521 = vmatpush.msra.mxu0 %v1238
    %2522 = vmatpush.msra.mxu0 %v1234
    %2523 = vmatpush.msra.mxu0 %v1230
    %2524 = vmatpush.msra.mxu0 %v1226
    %2525 = vmatpush.msra.mxu0 %v1222
    %2526 = vmatpush.msra.mxu0 %v1218
    %2527 = vmatpush.msra.mxu0 %v1214
    %2528 = vmatpush.msra.mxu0 %v1210
    %2529 = vmatpush.msra.mxu0 %v1206
    %2530 = vmatpush.msra.mxu0 %v1202
    %2531 = vmatpush.msra.mxu0 %v1198
    %2532 = vmatpush.msra.mxu0 %v1194
    %2533 = vmatpush.msra.mxu0 %v1190
    %2534 = vmatpush.msra.mxu0 %v1186
    %2535 = vmatpush.msra.mxu0 %v1182
    %2536 = vmatpush.msra.mxu0 %v1178
    %2537 = vmatmul.f32.gmra.mxu0 %v2190
    %v2538 = vpop.f32.mrf.mxu0
    %v2539 = vadd.f32 0.0, %v2538
    %2540 = vdwg.mxu0
    %2541 = vmatpush.msra.mxu0 %v1239
    %2542 = vmatpush.msra.mxu0 %v1235
    %2543 = vmatpush.msra.mxu0 %v1231
    %2544 = vmatpush.msra.mxu0 %v1227
    %2545 = vmatpush.msra.mxu0 %v1223
    %2546 = vmatpush.msra.mxu0 %v1219
    %2547 = vmatpush.msra.mxu0 %v1215
    %2548 = vmatpush.msra.mxu0 %v1211
    %2549 = vmatpush.msra.mxu0 %v1207
    %2550 = vmatpush.msra.mxu0 %v1203
    %2551 = vmatpush.msra.mxu0 %v1199
    %2552 = vmatpush.msra.mxu0 %v1195
    %2553 = vmatpush.msra.mxu0 %v1191
    %2554 = vmatpush.msra.mxu0 %v1187
    %2555 = vmatpush.msra.mxu0 %v1183
    %2556 = vmatpush.msra.mxu0 %v1179
    %2557 = vmatmul.f32.gmra.mxu0 %v2190
    %v2558 = vpop.f32.mrf.mxu0
    %v2559 = vadd.f32 0.0, %v2558
    %2560 = vdwg.mxu0
    %2561 = vmatpush.msra.mxu0 %v1240
    %2562 = vmatpush.msra.mxu0 %v1236
    %2563 = vmatpush.msra.mxu0 %v1232
    %2564 = vmatpush.msra.mxu0 %v1228
    %2565 = vmatpush.msra.mxu0 %v1224
    %2566 = vmatpush.msra.mxu0 %v1220
    %2567 = vmatpush.msra.mxu0 %v1216
    %2568 = vmatpush.msra.mxu0 %v1212
    %2569 = vmatpush.msra.mxu0 %v1208
    %2570 = vmatpush.msra.mxu0 %v1204
    %2571 = vmatpush.msra.mxu0 %v1200
    %2572 = vmatpush.msra.mxu0 %v1196
    %2573 = vmatpush.msra.mxu0 %v1192
    %2574 = vmatpush.msra.mxu0 %v1188
    %2575 = vmatpush.msra.mxu0 %v1184
    %2576 = vmatpush.msra.mxu0 %v1180
    %2577 = vmatmul.f32.gmra.mxu0 %v2190
    %v2578 = vpop.f32.mrf.mxu0
    %v2579 = vadd.f32 0.0, %v2578
    %2580 = vdwg.mxu0
    %2581 = vmatpush.msra.mxu0 %v1241
    %2582 = vmatpush.msra.mxu0 %v1237
    %2583 = vmatpush.msra.mxu0 %v1233
    %2584 = vmatpush.msra.mxu0 %v1229
    %2585 = vmatpush.msra.mxu0 %v1225
    %2586 = vmatpush.msra.mxu0 %v1221
    %2587 = vmatpush.msra.mxu0 %v1217
    %2588 = vmatpush.msra.mxu0 %v1213
    %2589 = vmatpush.msra.mxu0 %v1209
    %2590 = vmatpush.msra.mxu0 %v1205
    %2591 = vmatpush.msra.mxu0 %v1201
    %2592 = vmatpush.msra.mxu0 %v1197
    %2593 = vmatpush.msra.mxu0 %v1193
    %2594 = vmatpush.msra.mxu0 %v1189
    %2595 = vmatpush.msra.mxu0 %v1185
    %2596 = vmatpush.msra.mxu0 %v1181
    %2597 = vmatmul.f32.gmra.mxu0 %v2190
    %v2598 = vpop.f32.mrf.mxu0
    %v2599 = vadd.f32 0.0, %v2598
    %2600 = vdwg.mxu0
    %v2601 = vadd.f32 %v2459, %v2539
    %v2602 = vadd.f32 %v2479, %v2559
    %v2603 = vadd.f32 %v2499, %v2579
    %v2604 = vadd.f32 %v2519, %v2599
    %v2605 = vadd.f32 %v2601, %v1637
    %v2606 = vadd.f32 %v2602, %v1638
    %v2607 = vadd.f32 %v2603, %v1639
    %v2608 = vadd.f32 %v2604, %v1640
    %v2609 = vxor.u32 %v2605, 2147483648
    %v2610 = vmul.f32 %v2609, 1.442695
    %v2611 = vpow.pop %v2610
    %v2612 = vadd.f32 %v2611, 1.0
    %v2613 = vrcp.pop %v2612
    %v2614 = vmul.f32 %v2612, %v2613
    %v2615 = vsub.f32 1.0, %v2614
    %v2616 = vmul.f32 %v2613, %v2615
    %v2617 = vadd.f32 %v2613, %v2616
    %vm2618 = vweird.f32 %v2612
    %vm2619 = vweird.f32 %v2613
    %vm2620 = vmor %vm2618, %vm2619
    %v2621 = vsel %vm2620, %v2613, %v2617
    %v2622 = vand.u32 2147483647, %v2612
    %vm2623 = vcmp.eq.f32.partialorder %v2622, 8.507059e+37
    %v2624 = vand.u32 %v2612, 2147483648
    %v2625 = vor.u32 1.1754944e-38, %v2624
    %v2626 = vsel %vm2623, %v2625, %v2621
    %v2627 = vmul.f32 1.0, %v2626
    %v2628 = vxor.u32 %v2606, 2147483648
    %v2629 = vmul.f32 %v2628, 1.442695
    %v2630 = vpow.pop %v2629
    %v2631 = vadd.f32 %v2630, 1.0
    %v2632 = vrcp.pop %v2631
    %v2633 = vmul.f32 %v2631, %v2632
    %v2634 = vsub.f32 1.0, %v2633
    %v2635 = vmul.f32 %v2632, %v2634
    %v2636 = vadd.f32 %v2632, %v2635
    %vm2637 = vweird.f32 %v2631
    %vm2638 = vweird.f32 %v2632
    %vm2639 = vmor %vm2637, %vm2638
    %v2640 = vsel %vm2639, %v2632, %v2636
    %v2641 = vand.u32 2147483647, %v2631
    %vm2642 = vcmp.eq.f32.partialorder %v2641, 8.507059e+37
    %v2643 = vand.u32 %v2631, 2147483648
    %v2644 = vor.u32 1.1754944e-38, %v2643
    %v2645 = vsel %vm2642, %v2644, %v2640
    %v2646 = vmul.f32 1.0, %v2645
    %v2647 = vtanh.pop %v2607
    %v2648 = vxor.u32 %v2608, 2147483648
    %v2649 = vmul.f32 %v2648, 1.442695
    %v2650 = vpow.pop %v2649
    %v2651 = vadd.f32 %v2650, 1.0
    %v2652 = vrcp.pop %v2651
    %v2653 = vmul.f32 %v2651, %v2652
    %v2654 = vsub.f32 1.0, %v2653
    %v2655 = vmul.f32 %v2652, %v2654
    %v2656 = vadd.f32 %v2652, %v2655
    %vm2657 = vweird.f32 %v2651
    %vm2658 = vweird.f32 %v2652
    %vm2659 = vmor %vm2657, %vm2658
    %v2660 = vsel %vm2659, %v2652, %v2656
    %v2661 = vand.u32 2147483647, %v2651
    %vm2662 = vcmp.eq.f32.partialorder %v2661, 8.507059e+37
    %v2663 = vand.u32 %v2651, 2147483648
    %v2664 = vor.u32 1.1754944e-38, %v2663
    %v2665 = vsel %vm2662, %v2664, %v2660
    %v2666 = vmul.f32 1.0, %v2665
    %v2667 = vmul.f32 %v2646, %v2188
    %v2668 = vmul.f32 %v2627, %v2647
    %v2669 = vadd.f32 %v2667, %v2668
    %v2670 = vtanh.pop %v2669
    %v2671 = vmul.f32 %v2666, %v2670
    %v2676 = vrot.slane %v2399, 4
    %v2677 = vrot.slane %v2439, 4
    %v2678 = vsel %vm294, %v2379, %v2676
    %v2679 = vsel %vm294, %v2419, %v2677
    %v2680 = vrot.slane %v2678, 5
    %v2681 = vrot.slane %v2679, 5
    %v2682 = vrot.slane %v2678, 6
    %v2683 = vrot.slane %v2679, 6
    %v2688 = vadd.f32 %v1040, %v2680
    %v2689 = vadd.f32 %v1041, %v2681
    %v2690 = vadd.f32 %v1043, %v2682
    %v2691 = vadd.f32 %v1045, %v2683
    %v2692 = vxor.u32 %v2688, 2147483648
    %v2693 = vxor.u32 %v2690, 2147483648
    %v2694 = vmul.f32 %v2692, 1.442695
    %v2695 = vpow.pop %v2694
    %v2696 = vmul.f32 %v2693, 1.442695
    %v2697 = vpow.pop %v2696
    %v2698 = vadd.f32 %v2695, 1.0
    %v2699 = vadd.f32 %v2697, 1.0
    %v2700 = vrcp.pop %v2698
    %v2701 = vmul.f32 %v2698, %v2700
    %v2702 = vsub.f32 1.0, %v2701
    %v2703 = vmul.f32 %v2700, %v2702
    %v2704 = vadd.f32 %v2700, %v2703
    %vm2705 = vweird.f32 %v2698
    %vm2706 = vweird.f32 %v2700
    %vm2707 = vmor %vm2705, %vm2706
    %v2708 = vsel %vm2707, %v2700, %v2704
    %v2709 = vand.u32 2147483647, %v2698
    %vm2710 = vcmp.eq.f32.partialorder %v2709, 8.507059e+37
    %v2711 = vand.u32 %v2698, 2147483648
    %v2712 = vor.u32 1.1754944e-38, %v2711
    %v2713 = vsel %vm2710, %v2712, %v2708
    %v2714 = vmul.f32 1.0, %v2713
    %v2715 = vrcp.pop %v2699
    %v2716 = vmul.f32 %v2699, %v2715
    %v2717 = vsub.f32 1.0, %v2716
    %v2718 = vmul.f32 %v2715, %v2717
    %v2719 = vadd.f32 %v2715, %v2718
    %vm2720 = vweird.f32 %v2699
    %vm2721 = vweird.f32 %v2715
    %vm2722 = vmor %vm2720, %vm2721
    %v2723 = vsel %vm2722, %v2715, %v2719
    %v2724 = vand.u32 2147483647, %v2699
    %vm2725 = vcmp.eq.f32.partialorder %v2724, 8.507059e+37
    %v2726 = vand.u32 %v2699, 2147483648
    %v2727 = vor.u32 1.1754944e-38, %v2726
    %v2728 = vsel %vm2725, %v2727, %v2723
    %v2729 = vmul.f32 1.0, %v2728
    %v2732 = vrot.slane %v2688, 4
    %v2733 = vrot.slane %v2690, 4
    %v2736 = vxor.u32 %v2732, 2147483648
    %v2737 = vxor.u32 %v2733, 2147483648
    %v2738 = vmul.f32 %v2736, 1.442695
    %v2739 = vpow.pop %v2738
    %v2740 = vmul.f32 %v2737, 1.442695
    %v2741 = vpow.pop %v2740
    %v2742 = vadd.f32 %v2739, 1.0
    %v2743 = vadd.f32 %v2741, 1.0
    %v2744 = vrcp.pop %v2742
    %v2745 = vmul.f32 %v2742, %v2744
    %v2746 = vsub.f32 1.0, %v2745
    %v2747 = vmul.f32 %v2744, %v2746
    %v2748 = vadd.f32 %v2744, %v2747
    %vm2749 = vweird.f32 %v2742
    %vm2750 = vweird.f32 %v2744
    %vm2751 = vmor %vm2749, %vm2750
    %v2752 = vsel %vm2751, %v2744, %v2748
    %v2753 = vand.u32 2147483647, %v2742
    %vm2754 = vcmp.eq.f32.partialorder %v2753, 8.507059e+37
    %v2755 = vand.u32 %v2742, 2147483648
    %v2756 = vor.u32 1.1754944e-38, %v2755
    %v2757 = vsel %vm2754, %v2756, %v2752
    %v2758 = vmul.f32 1.0, %v2757
    %v2759 = vrcp.pop %v2743
    %v2760 = vmul.f32 %v2743, %v2759
    %v2761 = vsub.f32 1.0, %v2760
    %v2762 = vmul.f32 %v2759, %v2761
    %v2763 = vadd.f32 %v2759, %v2762
    %vm2764 = vweird.f32 %v2743
    %vm2765 = vweird.f32 %v2759
    %vm2766 = vmor %vm2764, %vm2765
    %v2767 = vsel %vm2766, %v2759, %v2763
    %v2768 = vand.u32 2147483647, %v2743
    %vm2769 = vcmp.eq.f32.partialorder %v2768, 8.507059e+37
    %v2770 = vand.u32 %v2743, 2147483648
    %v2771 = vor.u32 1.1754944e-38, %v2770
    %v2772 = vsel %vm2769, %v2771, %v2767
    %v2773 = vmul.f32 1.0, %v2772
    %v2774 = vtanh.pop %v2689
    %v2775 = vtanh.pop %v2691
    %v2778 = vrot.slane %v2689, 4
    %v2779 = vrot.slane %v2691, 4
    %v2782 = vxor.u32 %v2778, 2147483648
    %v2783 = vxor.u32 %v2779, 2147483648
    %v2784 = vmul.f32 %v2782, 1.442695
    %v2785 = vpow.pop %v2784
    %v2786 = vmul.f32 %v2783, 1.442695
    %v2787 = vpow.pop %v2786
    %v2788 = vadd.f32 %v2785, 1.0
    %v2789 = vadd.f32 %v2787, 1.0
    %v2790 = vrcp.pop %v2788
    %v2791 = vmul.f32 %v2788, %v2790
    %v2792 = vsub.f32 1.0, %v2791
    %v2793 = vmul.f32 %v2790, %v2792
    %v2794 = vadd.f32 %v2790, %v2793
    %vm2795 = vweird.f32 %v2788
    %vm2796 = vweird.f32 %v2790
    %vm2797 = vmor %vm2795, %vm2796
    %v2798 = vsel %vm2797, %v2790, %v2794
    %v2799 = vand.u32 2147483647, %v2788
    %vm2800 = vcmp.eq.f32.partialorder %v2799, 8.507059e+37
    %v2801 = vand.u32 %v2788, 2147483648
    %v2802 = vor.u32 1.1754944e-38, %v2801
    %v2803 = vsel %vm2800, %v2802, %v2798
    %v2804 = vmul.f32 1.0, %v2803
    %v2805 = vrcp.pop %v2789
    %v2806 = vmul.f32 %v2789, %v2805
    %v2807 = vsub.f32 1.0, %v2806
    %v2808 = vmul.f32 %v2805, %v2807
    %v2809 = vadd.f32 %v2805, %v2808
    %vm2810 = vweird.f32 %v2789
    %vm2811 = vweird.f32 %v2805
    %vm2812 = vmor %vm2810, %vm2811
    %v2813 = vsel %vm2812, %v2805, %v2809
    %v2814 = vand.u32 2147483647, %v2789
    %vm2815 = vcmp.eq.f32.partialorder %v2814, 8.507059e+37
    %v2816 = vand.u32 %v2789, 2147483648
    %v2817 = vor.u32 1.1754944e-38, %v2816
    %v2818 = vsel %vm2815, %v2817, %v2813
    %v2819 = vmul.f32 1.0, %v2818
    %v2822 = vrot.slane %v2349, 7
    %v2823 = vrot.slane %v2350, 7
    %v2826 = vmul.f32 %v2758, %v2822
    %v2827 = vmul.f32 %v2773, %v2823
    %v2828 = vmul.f32 %v2714, %v2774
    %v2829 = vmul.f32 %v2729, %v2775
    %v2830 = vadd.f32 %v2826, %v2828
    %v2831 = vadd.f32 %v2827, %v2829
    %v2832 = vtanh.pop %v2830
    %v2833 = vtanh.pop %v2831
    %v2834 = vmul.f32 %v2804, %v2832
    %v2835 = vmul.f32 %v2819, %v2833
    %v2838 = vperm.slane %v2834, 3
    %v2839 = vperm.slane %v2835, 3
    %v2840 = vsel %vm1389, %v2839, %v2838
    %2842 = vmatpush.msra.mxu0 %v1174
    %2843 = vmatpush.msra.mxu0 %v1166
    %2844 = vmatpush.msra.mxu0 %v1158
    %2845 = vmatpush.msra.mxu0 %v1150
    %2846 = vmatpush.msra.mxu0 %v1142
    %2847 = vmatpush.msra.mxu0 %v1134
    %2848 = vmatpush.msra.mxu0 %v1126
    %2849 = vmatpush.msra.mxu0 %v1118
    %2850 = vmatpush.msra.mxu0 %v1110
    %2851 = vmatpush.msra.mxu0 %v1102
    %2852 = vmatpush.msra.mxu0 %v1094
    %2853 = vmatpush.msra.mxu0 %v1086
    %2854 = vmatpush.msra.mxu0 %v1078
    %2855 = vmatpush.msra.mxu0 %v1070
    %2856 = vmatpush.msra.mxu0 %v1062
    %2857 = vmatpush.msra.mxu0 %v1054
    %2858 = vmatmul.f32.gmra.mxu0 %v2840
    %v2859 = vpop.f32.mrf.mxu0
    %v2860 = vadd.f32 0.0, %v2859
    %2861 = vdwg.mxu0
    %2862 = vmatpush.msra.mxu0 %v1175
    %2863 = vmatpush.msra.mxu0 %v1167
    %2864 = vmatpush.msra.mxu0 %v1159
    %2865 = vmatpush.msra.mxu0 %v1151
    %2866 = vmatpush.msra.mxu0 %v1143
    %2867 = vmatpush.msra.mxu0 %v1135
    %2868 = vmatpush.msra.mxu0 %v1127
    %2869 = vmatpush.msra.mxu0 %v1119
    %2870 = vmatpush.msra.mxu0 %v1111
    %2871 = vmatpush.msra.mxu0 %v1103
    %2872 = vmatpush.msra.mxu0 %v1095
    %2873 = vmatpush.msra.mxu0 %v1087
    %2874 = vmatpush.msra.mxu0 %v1079
    %2875 = vmatpush.msra.mxu0 %v1071
    %2876 = vmatpush.msra.mxu0 %v1063
    %2877 = vmatpush.msra.mxu0 %v1055
    %2878 = vmatmul.f32.gmra.mxu0 %v2840
    %v2879 = vpop.f32.mrf.mxu0
    %v2880 = vadd.f32 0.0, %v2879
    %2881 = vdwg.mxu0
    %2882 = vmatpush.msra.mxu0 %v1176
    %2883 = vmatpush.msra.mxu0 %v1168
    %2884 = vmatpush.msra.mxu0 %v1160
    %2885 = vmatpush.msra.mxu0 %v1152
    %2886 = vmatpush.msra.mxu0 %v1144
    %2887 = vmatpush.msra.mxu0 %v1136
    %2888 = vmatpush.msra.mxu0 %v1128
    %2889 = vmatpush.msra.mxu0 %v1120
    %2890 = vmatpush.msra.mxu0 %v1112
    %2891 = vmatpush.msra.mxu0 %v1104
    %2892 = vmatpush.msra.mxu0 %v1096
    %2893 = vmatpush.msra.mxu0 %v1088
    %2894 = vmatpush.msra.mxu0 %v1080
    %2895 = vmatpush.msra.mxu0 %v1072
    %2896 = vmatpush.msra.mxu0 %v1064
    %2897 = vmatpush.msra.mxu0 %v1056
    %2898 = vmatmul.f32.gmra.mxu0 %v2840
    %v2899 = vpop.f32.mrf.mxu0
    %v2900 = vadd.f32 0.0, %v2899
    %2901 = vdwg.mxu0
    %2902 = vmatpush.msra.mxu0 %v1177
    %2903 = vmatpush.msra.mxu0 %v1169
    %2904 = vmatpush.msra.mxu0 %v1161
    %2905 = vmatpush.msra.mxu0 %v1153
    %2906 = vmatpush.msra.mxu0 %v1145
    %2907 = vmatpush.msra.mxu0 %v1137
    %2908 = vmatpush.msra.mxu0 %v1129
    %2909 = vmatpush.msra.mxu0 %v1121
    %2910 = vmatpush.msra.mxu0 %v1113
    %2911 = vmatpush.msra.mxu0 %v1105
    %2912 = vmatpush.msra.mxu0 %v1097
    %2913 = vmatpush.msra.mxu0 %v1089
    %2914 = vmatpush.msra.mxu0 %v1081
    %2915 = vmatpush.msra.mxu0 %v1073
    %2916 = vmatpush.msra.mxu0 %v1065
    %2917 = vmatpush.msra.mxu0 %v1057
    %2918 = vmatmul.f32.gmra.mxu0 %v2840
    %v2919 = vpop.f32.mrf.mxu0
    %v2920 = vadd.f32 0.0, %v2919
    %2921 = vdwg.mxu0
    %2922 = vmatpush.msra.mxu0 %v1238
    %2923 = vmatpush.msra.mxu0 %v1234
    %2924 = vmatpush.msra.mxu0 %v1230
    %2925 = vmatpush.msra.mxu0 %v1226
    %2926 = vmatpush.msra.mxu0 %v1222
    %2927 = vmatpush.msra.mxu0 %v1218
    %2928 = vmatpush.msra.mxu0 %v1214
    %2929 = vmatpush.msra.mxu0 %v1210
    %2930 = vmatpush.msra.mxu0 %v1206
    %2931 = vmatpush.msra.mxu0 %v1202
    %2932 = vmatpush.msra.mxu0 %v1198
    %2933 = vmatpush.msra.mxu0 %v1194
    %2934 = vmatpush.msra.mxu0 %v1190
    %2935 = vmatpush.msra.mxu0 %v1186
    %2936 = vmatpush.msra.mxu0 %v1182
    %2937 = vmatpush.msra.mxu0 %v1178
    %2938 = vmatmul.f32.gmra.mxu0 %v2671
    %v2939 = vpop.f32.mrf.mxu0
    %v2940 = vadd.f32 0.0, %v2939
    %2941 = vdwg.mxu0
    %2942 = vmatpush.msra.mxu0 %v1239
    %2943 = vmatpush.msra.mxu0 %v1235
    %2944 = vmatpush.msra.mxu0 %v1231
    %2945 = vmatpush.msra.mxu0 %v1227
    %2946 = vmatpush.msra.mxu0 %v1223
    %2947 = vmatpush.msra.mxu0 %v1219
    %2948 = vmatpush.msra.mxu0 %v1215
    %2949 = vmatpush.msra.mxu0 %v1211
    %2950 = vmatpush.msra.mxu0 %v1207
    %2951 = vmatpush.msra.mxu0 %v1203
    %2952 = vmatpush.msra.mxu0 %v1199
    %2953 = vmatpush.msra.mxu0 %v1195
    %2954 = vmatpush.msra.mxu0 %v1191
    %2955 = vmatpush.msra.mxu0 %v1187
    %2956 = vmatpush.msra.mxu0 %v1183
    %2957 = vmatpush.msra.mxu0 %v1179
    %2958 = vmatmul.f32.gmra.mxu0 %v2671
    %v2959 = vpop.f32.mrf.mxu0
    %v2960 = vadd.f32 0.0, %v2959
    %2961 = vdwg.mxu0
    %2962 = vmatpush.msra.mxu0 %v1240
    %2963 = vmatpush.msra.mxu0 %v1236
    %2964 = vmatpush.msra.mxu0 %v1232
    %2965 = vmatpush.msra.mxu0 %v1228
    %2966 = vmatpush.msra.mxu0 %v1224
    %2967 = vmatpush.msra.mxu0 %v1220
    %2968 = vmatpush.msra.mxu0 %v1216
    %2969 = vmatpush.msra.mxu0 %v1212
    %2970 = vmatpush.msra.mxu0 %v1208
    %2971 = vmatpush.msra.mxu0 %v1204
    %2972 = vmatpush.msra.mxu0 %v1200
    %2973 = vmatpush.msra.mxu0 %v1196
    %2974 = vmatpush.msra.mxu0 %v1192
    %2975 = vmatpush.msra.mxu0 %v1188
    %2976 = vmatpush.msra.mxu0 %v1184
    %2977 = vmatpush.msra.mxu0 %v1180
    %2978 = vmatmul.f32.gmra.mxu0 %v2671
    %v2979 = vpop.f32.mrf.mxu0
    %v2980 = vadd.f32 0.0, %v2979
    %2981 = vdwg.mxu0
    %2982 = vmatpush.msra.mxu0 %v1241
    %2983 = vmatpush.msra.mxu0 %v1237
    %2984 = vmatpush.msra.mxu0 %v1233
    %2985 = vmatpush.msra.mxu0 %v1229
    %2986 = vmatpush.msra.mxu0 %v1225
    %2987 = vmatpush.msra.mxu0 %v1221
    %2988 = vmatpush.msra.mxu0 %v1217
    %2989 = vmatpush.msra.mxu0 %v1213
    %2990 = vmatpush.msra.mxu0 %v1209
    %2991 = vmatpush.msra.mxu0 %v1205
    %2992 = vmatpush.msra.mxu0 %v1201
    %2993 = vmatpush.msra.mxu0 %v1197
    %2994 = vmatpush.msra.mxu0 %v1193
    %2995 = vmatpush.msra.mxu0 %v1189
    %2996 = vmatpush.msra.mxu0 %v1185
    %2997 = vmatpush.msra.mxu0 %v1181
    %2998 = vmatmul.f32.gmra.mxu0 %v2671
    %v2999 = vpop.f32.mrf.mxu0
    %v3000 = vadd.f32 0.0, %v2999
    %3001 = vdwg.mxu0
    %v3002 = vadd.f32 %v2860, %v2940
    %v3003 = vadd.f32 %v2880, %v2960
    %v3004 = vadd.f32 %v2900, %v2980
    %v3005 = vadd.f32 %v2920, %v3000
    %v3006 = vadd.f32 %v3002, %v1637
    %v3007 = vadd.f32 %v3003, %v1638
    %v3008 = vadd.f32 %v3004, %v1639
    %v3009 = vadd.f32 %v3005, %v1640
    %v3010 = vxor.u32 %v3006, 2147483648
    %v3011 = vmul.f32 %v3010, 1.442695
    %v3012 = vpow.pop %v3011
    %v3013 = vadd.f32 %v3012, 1.0
    %v3014 = vrcp.pop %v3013
    %v3015 = vmul.f32 %v3013, %v3014
    %v3016 = vsub.f32 1.0, %v3015
    %v3017 = vmul.f32 %v3014, %v3016
    %v3018 = vadd.f32 %v3014, %v3017
    %vm3019 = vweird.f32 %v3013
    %vm3020 = vweird.f32 %v3014
    %vm3021 = vmor %vm3019, %vm3020
    %v3022 = vsel %vm3021, %v3014, %v3018
    %v3023 = vand.u32 2147483647, %v3013
    %vm3024 = vcmp.eq.f32.partialorder %v3023, 8.507059e+37
    %v3025 = vand.u32 %v3013, 2147483648
    %v3026 = vor.u32 1.1754944e-38, %v3025
    %v3027 = vsel %vm3024, %v3026, %v3022
    %v3028 = vmul.f32 1.0, %v3027
    %v3029 = vxor.u32 %v3007, 2147483648
    %v3030 = vmul.f32 %v3029, 1.442695
    %v3031 = vpow.pop %v3030
    %v3032 = vadd.f32 %v3031, 1.0
    %v3033 = vrcp.pop %v3032
    %v3034 = vmul.f32 %v3032, %v3033
    %v3035 = vsub.f32 1.0, %v3034
    %v3036 = vmul.f32 %v3033, %v3035
    %v3037 = vadd.f32 %v3033, %v3036
    %vm3038 = vweird.f32 %v3032
    %vm3039 = vweird.f32 %v3033
    %vm3040 = vmor %vm3038, %vm3039
    %v3041 = vsel %vm3040, %v3033, %v3037
    %v3042 = vand.u32 2147483647, %v3032
    %vm3043 = vcmp.eq.f32.partialorder %v3042, 8.507059e+37
    %v3044 = vand.u32 %v3032, 2147483648
    %v3045 = vor.u32 1.1754944e-38, %v3044
    %v3046 = vsel %vm3043, %v3045, %v3041
    %v3047 = vmul.f32 1.0, %v3046
    %v3048 = vtanh.pop %v3008
    %v3049 = vxor.u32 %v3009, 2147483648
    %v3050 = vmul.f32 %v3049, 1.442695
    %v3051 = vpow.pop %v3050
    %v3052 = vadd.f32 %v3051, 1.0
    %v3053 = vrcp.pop %v3052
    %v3054 = vmul.f32 %v3052, %v3053
    %v3055 = vsub.f32 1.0, %v3054
    %v3056 = vmul.f32 %v3053, %v3055
    %v3057 = vadd.f32 %v3053, %v3056
    %vm3058 = vweird.f32 %v3052
    %vm3059 = vweird.f32 %v3053
    %vm3060 = vmor %vm3058, %vm3059
    %v3061 = vsel %vm3060, %v3053, %v3057
    %v3062 = vand.u32 2147483647, %v3052
    %vm3063 = vcmp.eq.f32.partialorder %v3062, 8.507059e+37
    %v3064 = vand.u32 %v3052, 2147483648
    %v3065 = vor.u32 1.1754944e-38, %v3064
    %v3066 = vsel %vm3063, %v3065, %v3061
    %v3067 = vmul.f32 1.0, %v3066
    %v3068 = vmul.f32 %v3047, %v2669
    %v3069 = vmul.f32 %v3028, %v3048
    %v3070 = vadd.f32 %v3068, %v3069
    %v3071 = vtanh.pop %v3070
    %v3072 = vmul.f32 %v3067, %v3071
    %v3073 = vld [vmem:[%s12] sm:$0xff]
    %v3074 = vld [vmem:[%s12 + $0x8] sm:$0xff]
    %v3075 = vld [vmem:[%s12 + $0x10] sm:$0xff]
    %v3076 = vld [vmem:[%s12 + $0x18] sm:$0xff]
    %v3077 = vld [vmem:[%s12 + $0x20] sm:$0xff]
    %v3078 = vld [vmem:[%s12 + $0x28] sm:$0xff]
    %v3079 = vld [vmem:[%s12 + $0x30] sm:$0xff]
    %v3080 = vld [vmem:[%s12 + $0x38] sm:$0xff]
    %v3081 = vld [vmem:[%s12 + $0x40] sm:$0xff]
    %v3082 = vld [vmem:[%s12 + $0x48] sm:$0xff]
    %v3083 = vld [vmem:[%s12 + $0x50] sm:$0xff]
    %v3084 = vld [vmem:[%s12 + $0x58] sm:$0xff]
    %v3085 = vld [vmem:[%s12 + $0x60] sm:$0xff]
    %v3086 = vld [vmem:[%s12 + $0x68] sm:$0xff]
    %v3087 = vld [vmem:[%s12 + $0x70] sm:$0xff]
    %v3088 = vld [vmem:[%s12 + $0x78] sm:$0xff]
    %v3089 = vld [vmem:[%s13] sm:$0x1]
    %v3091 = vperm.slane %v3089, 0
    %3093 = vmatpush.msra.mxu0 %v3088
    %3094 = vmatpush.msra.mxu0 %v3087
    %3095 = vmatpush.msra.mxu0 %v3086
    %3096 = vmatpush.msra.mxu0 %v3085
    %3097 = vmatpush.msra.mxu0 %v3084
    %3098 = vmatpush.msra.mxu0 %v3083
    %3099 = vmatpush.msra.mxu0 %v3082
    %3100 = vmatpush.msra.mxu0 %v3081
    %3101 = vmatpush.msra.mxu0 %v3080
    %3102 = vmatpush.msra.mxu0 %v3079
    %3103 = vmatpush.msra.mxu0 %v3078
    %3104 = vmatpush.msra.mxu0 %v3077
    %3105 = vmatpush.msra.mxu0 %v3076
    %3106 = vmatpush.msra.mxu0 %v3075
    %3107 = vmatpush.msra.mxu0 %v3074
    %3108 = vmatpush.msra.mxu0 %v3073
    %3109 = vmatmul.f32.gmra.mxu0 %v3072
    %v3110 = vpop.f32.mrf.mxu0
    %v3111 = vadd.f32 %v3091, %v3110
    %3112 = vdwg.mxu0
    %v3113 = vmax.f32 %v3111, 0.0
    %v3114 = vld [vmem:[%s14] sm:$0xff]
    %v3115 = vld [vmem:[%s14 + $0x8] sm:$0xff]
    %v3116 = vld [vmem:[%s14 + $0x10] sm:$0xff]
    %v3117 = vld [vmem:[%s14 + $0x18] sm:$0xff]
    %v3118 = vld [vmem:[%s14 + $0x20] sm:$0xff]
    %v3119 = vld [vmem:[%s14 + $0x28] sm:$0xff]
    %v3120 = vld [vmem:[%s14 + $0x30] sm:$0xff]
    %v3121 = vld [vmem:[%s14 + $0x38] sm:$0xff]
    %v3122 = vld [vmem:[%s15] sm:$0x1]
    %v3124 = vperm.slane %v3122, 0
    %v3127 = vsel %vm350, %v3113, 0
    %3129 = vmatpush.msra.mxu0 0.0
    %3130 = vmatpush.msra.mxu0 0.0
    %3131 = vmatpush.msra.mxu0 0.0
    %3132 = vmatpush.msra.mxu0 0.0
    %3133 = vmatpush.msra.mxu0 0.0
    %3134 = vmatpush.msra.mxu0 0.0
    %3135 = vmatpush.msra.mxu0 0.0
    %3136 = vmatpush.msra.mxu0 0.0
    %3137 = vmatpush.msra.mxu0 %v3121
    %3138 = vmatpush.msra.mxu0 %v3120
    %3139 = vmatpush.msra.mxu0 %v3119
    %3140 = vmatpush.msra.mxu0 %v3118
    %3141 = vmatpush.msra.mxu0 %v3117
    %3142 = vmatpush.msra.mxu0 %v3116
    %3143 = vmatpush.msra.mxu0 %v3115
    %3144 = vmatpush.msra.mxu0 %v3114
    %3145 = vmatmul.f32.gmra.mxu0 %v3127
    %v3146 = vpop.f32.mrf.mxu0
    %v3147 = vadd.f32 %v3124, %v3146
    %3148 = vdwg.mxu0
    %vm3149 = vcmask 17408
    %3150 = vst.msk [vmem:[#allocation10] sm:$0x3] %vm3149, %v3147
    // Predicated region
    $region82: #{cnn_lstm_forward.1} parent=1 // pred_check
      _
    $region83: #{cnn_lstm_forward.1} parent=1 // pred_check_branch
      %3152 = sbr.rel (0) target = $region85
    $region84: #{cnn_lstm_forward.1} parent=1 // pred_region
      %3154 = vsyncadd [#allocation4], 0
      %s3156 = sshll.u32 [#allocation10], 4
      %s3157 = int_to_ptr.vmem [resolvable:$true] %s3156
      %s3158 = sshll.u32 %s16, 4
      %s3159 = int_to_ptr.hbm [resolvable:$true] %s3158
      %3161 = dma.vmem_to_hbm [thread:$0]  %s3157, 32, %s3159, [#allocation4]
    $region85: #{cnn_lstm_forward.1} parent=1 // pred_fallthru
      _
    // Predicated region
    $region86: #{cnn_lstm_forward.1} parent=1 // pred_check
      _
    $region87: #{cnn_lstm_forward.1} parent=1 // pred_check_branch
      %3163 = sbr.rel (0) target = $region89
    $region88: #{cnn_lstm_forward.1} parent=1 // pred_region
      %3165 = dma.done [#allocation4], 32
    $region89: #{cnn_lstm_forward.1} parent=1 // pred_fallthru
      _
    %3166 = vsyncpa [#allocation3], 1
    %3167 = vsyncpa [#allocation6], 1
    %3168 = vsyncpa [#allocation9], 1
    %3169 = vsyncpa [#allocation4], 1

</llo_original>
